<compile_context>
chip_gen: v6e
topology: v6e:2x2x1
jax: 0.10.0
libtpu: 0.0.40
codegen_flags: <defaults>
</compile_context>

<pallas_src>
import jax
import jax.numpy as jnp
from jax.experimental import pallas as pl
from jax.experimental.pallas import tpu as pltpu

# ----------------------------- configuration --------------------------------
B, C, IMG, PS = 2, 3, 16, 4          # batch, channels, image size, patch size
GRIDN = IMG // PS                    # patches per side
NP = GRIDN * GRIDN                   # 16 patches
N = NP + 1                           # +1 cls token -> 17 tokens
CLS = 7                              # per-batch row of the cls token
N_PAD = CLS + N                      # 24 rows per batch (multiple of 8)
BN = B * N_PAD                       # 48 folded, sublane-aligned token rows
D = 32                               # embed dim
HEADS = 4
HD = D // HEADS
MLP_H = 64                           # SwiGLU hidden dim (fc1 emits 2*MLP_H)
DEPTH = 2
LS_INIT = 1e-5                       # LayerScale init (UNI2-h: init_values=1e-5)
EPS = 1e-6
NEG_INF = -1e30
PATCH_K = C * PS * PS                # 48

FP = jnp.float32
BF = jnp.bfloat16


# ------------------------------- kernel --------------------------------------
def _layernorm(x, g, b):
    mu = jnp.mean(x, axis=-1, keepdims=True)
    xc = x - mu
    var = jnp.mean(xc * xc, axis=-1, keepdims=True)
    return xc * jax.lax.rsqrt(var + EPS) * g + b


def vit_kernel(p_ref, pw_ref, posb_ref,
               ln1g_ref, ln1b_ref, wqkv_ref, bqkv_ref, wo_ref, bo_ref, ls1_ref,
               ln2g_ref, ln2b_ref, w1_ref, b1_ref, w2_ref, b2_ref, ls2_ref,
               ng_ref, nb_ref,
               xf_ref, attn_buf):
    # ---- patch embed + token assembly: one matmul + one add -----------------
    # p is zero-padded so rows land 8-sublane aligned; pos_base carries
    # cls+pos[0] on the cls row and pos[1:]+conv-bias on the patch rows.
    x = jnp.dot(p_ref[...].astype(BF), pw_ref[...],
                preferred_element_type=jnp.float32) + posb_ref[...]       # (BN, D)

    # ---- block-diagonal attention mask, generated in-kernel -----------------
    # allowed[i, j] = (i, j in same batch block) and (j is a real token).
    # Pad query rows still see their batch's real keys, so no row is fully
    # masked (no NaN); pad rows never feed real queries and are never output.
    r = jax.lax.broadcasted_iota(jnp.int32, (BN, BN), 0)
    c = jax.lax.broadcasted_iota(jnp.int32, (BN, BN), 1)
    real_key = jnp.zeros((BN, BN), dtype=jnp.bool_)
    for b in range(B):
        real_key = real_key | ((c >= b * N_PAD + CLS) & (c < (b + 1) * N_PAD))
    allowed = real_key
    for b in range(1, B):                       # same-batch via boundary tests
        edge = b * N_PAD
        rb, cb = r < edge, c < edge
        allowed = allowed & ((rb & cb) | (~rb & ~cb))
    mask = jnp.where(allowed, 0.0, NEG_INF)     # f32; keep scores f32 too

    for d in range(DEPTH):            # unrolled; all layer weights resident in VMEM
        # ---------------- attention branch (pre-LN) ----------------
        h = _layernorm(x, ln1g_ref[d], ln1b_ref[d])
        qkv = jnp.dot(h.astype(BF), wqkv_ref[d],
                      preferred_element_type=jnp.float32) + bqkv_ref[d]   # (BN, 3D)
        qkv_bf = qkv.astype(BF)       # cast once per layer (1/sqrt(HD) folded
                                      # into the Q weights/bias at init)
        for hh in range(HEADS):
            qh = qkv_bf[:, 0 * D + hh * HD: 0 * D + (hh + 1) * HD]        # (BN, HD)
            kh = qkv_bf[:, 1 * D + hh * HD: 1 * D + (hh + 1) * HD]
            vh = qkv_bf[:, 2 * D + hh * HD: 2 * D + (hh + 1) * HD]
            # scores: contract HD of both operands (no kh.T materialization)
            s = jax.lax.dot_general(qh, kh, (((1,), (1,)), ((), ())),
                                    preferred_element_type=jnp.float32)   # (BN, BN)
            s = s + mask
            s = s - jnp.max(s, axis=-1, keepdims=True)
            p = jnp.exp(s)
            p = p * pl.reciprocal(jnp.sum(p, axis=-1, keepdims=True), approx=True)
            ho = jnp.dot(p.astype(BF), vh,
                         preferred_element_type=jnp.float32)              # (BN, HD)
            # place head output at its static lane offset (cheap lane store)
            attn_buf[:, hh * HD:(hh + 1) * HD] = ho
        # single K=D out-projection against the un-split (D, D) Wo
        proj = jnp.dot(attn_buf[...].astype(BF), wo_ref[d],
                       preferred_element_type=jnp.float32) + bo_ref[d]    # (BN, D)
        x = x + ls1_ref[d] * proj                                         # LayerScale

        # ---------------- MLP branch (SwiGLU packed, SiLU) ----------------
        h2 = _layernorm(x, ln2g_ref[d], ln2b_ref[d])
        m = jnp.dot(h2.astype(BF), w1_ref[d],
                    preferred_element_type=jnp.float32) + b1_ref[d]       # (BN, 2*MLP_H)
        m = jax.nn.silu(m[:, :MLP_H]) * m[:, MLP_H:]
        mlp = jnp.dot(m.astype(BF), w2_ref[d],
                      preferred_element_type=jnp.float32) + b2_ref[d]
        x = x + ls2_ref[d] * mlp

    # ---------------- final LayerNorm + output ----------------
    xf_ref[...] = _layernorm(x, ng_ref[...], nb_ref[...])                 # (BN, D)


# ---------------------------- wrapper -----------------------------------------
def forward(x, params):
    """x: NCHW float32 (B, C, IMG, IMG). Returns (x_f, x_p)."""
    # Patch extraction (Conv2d kernel=PS, stride=PS as a matmul) + zero row
    # padding so each batch's token block is [7 pad | cls | 16 patches] and
    # starts on an 8-sublane boundary.  Pure layout glue.
    p = x.reshape(B, C, GRIDN, PS, GRIDN, PS)
    p = p.transpose(0, 2, 4, 1, 3, 5).reshape(B, NP, PATCH_K)
    p = jnp.concatenate([jnp.zeros((B, CLS + 1, PATCH_K), FP), p], axis=1)
    p = p.reshape(BN, PATCH_K)

    xf_pad = pl.pallas_call(
        vit_kernel,
        out_shape=jax.ShapeDtypeStruct((BN, D), FP),       # forward_features (flat, padded)
        scratch_shapes=[pltpu.VMEM((BN, D), FP)],          # per-head attn-output buffer
    )(p, params["patch_w"], params["pos_base"],
      params["ln1_g"], params["ln1_b"], params["wqkv"], params["bqkv"],
      params["wo"], params["bo"], params["ls1"],
      params["ln2_g"], params["ln2_b"], params["w1"], params["b1"],
      params["w2"], params["b2"], params["ls2"],
      params["norm_g"], params["norm_b"])

    x_f = xf_pad.reshape(B, N_PAD, D)[:, CLS:, :]          # (B, N, D) real tokens
    x_p = x_f[:, 0]                                        # forward_head: cls token
    return x_f, x_p


# ------------------------------ init ------------------------------------------
def init_params(key):
    ks = jax.random.split(key, 3 + DEPTH)
    s = 0.02
    patch_w = s * jax.random.normal(ks[0], (PATCH_K, D), FP)
    patch_b = jnp.zeros((1, D), FP)
    cls = s * jax.random.normal(ks[1], (1, D), FP)
    pos = s * jax.random.normal(ks[2], (N, D), FP)

    # Token-assembly base (per batch: [7 zero rows | cls+pos0 | pos[1:]+conv bias]),
    # so the kernel forms tokens with a single add after the patch matmul.
    per_batch = jnp.concatenate(
        [jnp.zeros((CLS, D), FP), cls + pos[0:1], pos[1:] + patch_b], axis=0)  # (N_PAD, D)
    pos_base = jnp.tile(per_batch, (B, 1))                                     # (BN, D)

    scale = 1.0 / (HD ** 0.5)
    wqkv, bqkv, wo, w1, w2 = [], [], [], [], []
    for d in range(DEPTH):
        kb = jax.random.split(ks[3 + d], 4)
        w = s * jax.random.normal(kb[0], (D, 3 * D), FP)
        w = w.at[:, :D].multiply(scale)          # fold 1/sqrt(HD) into Q weights
        wqkv.append(w)
        b = jnp.zeros((1, 3 * D), FP)
        b = b.at[:, :D].multiply(scale)          # (and Q bias, zero here)
        bqkv.append(b)
        wo.append(s * jax.random.normal(kb[1], (D, D), FP))     # un-split (D, D)
        w1.append(s * jax.random.normal(kb[2], (D, 2 * MLP_H), FP))
        w2.append(s * jax.random.normal(kb[3], (MLP_H, D), FP))

    ones_d = jnp.ones((DEPTH, 1, D), FP)
    zeros_d = jnp.zeros((DEPTH, 1, D), FP)
    return {
        "patch_w": patch_w.astype(BF),
        "pos_base": pos_base,
        "ln1_g": ones_d, "ln1_b": zeros_d,
        "wqkv": jnp.stack(wqkv).astype(BF),
        "bqkv": jnp.stack(bqkv),
        "wo": jnp.stack(wo).astype(BF),
        "bo": zeros_d,
        "ls1": jnp.full((DEPTH, 1, D), LS_INIT, FP),
        "ln2_g": ones_d, "ln2_b": zeros_d,
        "w1": jnp.stack(w1).astype(BF),
        "b1": jnp.zeros((DEPTH, 1, 2 * MLP_H), FP),
        "w2": jnp.stack(w2).astype(BF),
        "b2": zeros_d,
        "ls2": jnp.full((DEPTH, 1, D), LS_INIT, FP),
        "norm_g": jnp.ones((1, D), FP),
        "norm_b": jnp.zeros((1, D), FP),
    }


# ------------------------------ main -------------------------------------------
if __name__ == "__main__":
    key = jax.random.PRNGKey(0)
    kx, kp = jax.random.split(key)
    x = jax.random.normal(kx, (B, C, IMG, IMG), FP)      # NCHW, like PyTorch
    params = init_params(kp)

    x_f, x_p = jax.jit(forward)(x, params)
    jax.block_until_ready((x_f, x_p))

    assert x_f.shape == (B, N, D), x_f.shape
    assert x_p.shape == (B, D), x_p.shape
    assert bool(jnp.all(jnp.isfinite(x_f))) and bool(jnp.all(jnp.isfinite(x_p)))
    print("KERNEL_OK")
</pallas_src>

<mosaic_0001>
module attributes {stable_mosaic.version = 11 : i64} {
  func.func @vit_kernel(%arg0: memref<48x48xf32, #tpu.memory_space<vmem>>, %arg1: memref<48x32xbf16, #tpu.memory_space<vmem>>, %arg2: memref<48x32xf32, #tpu.memory_space<vmem>>, %arg3: memref<2x1x32xf32, #tpu.memory_space<vmem>>, %arg4: memref<2x1x32xf32, #tpu.memory_space<vmem>>, %arg5: memref<2x32x96xbf16, #tpu.memory_space<vmem>>, %arg6: memref<2x1x96xf32, #tpu.memory_space<vmem>>, %arg7: memref<2x32x32xbf16, #tpu.memory_space<vmem>>, %arg8: memref<2x1x32xf32, #tpu.memory_space<vmem>>, %arg9: memref<2x1x32xf32, #tpu.memory_space<vmem>>, %arg10: memref<2x1x32xf32, #tpu.memory_space<vmem>>, %arg11: memref<2x1x32xf32, #tpu.memory_space<vmem>>, %arg12: memref<2x32x128xbf16, #tpu.memory_space<vmem>>, %arg13: memref<2x1x128xf32, #tpu.memory_space<vmem>>, %arg14: memref<2x64x32xbf16, #tpu.memory_space<vmem>>, %arg15: memref<2x1x32xf32, #tpu.memory_space<vmem>>, %arg16: memref<2x1x32xf32, #tpu.memory_space<vmem>>, %arg17: memref<1x32xf32, #tpu.memory_space<vmem>>, %arg18: memref<1x32xf32, #tpu.memory_space<vmem>>, %arg19: memref<48x32xf32, #tpu.memory_space<vmem>>, %arg20: memref<48x32xf32, #tpu.memory_space<vmem>>) attributes {dimension_semantics = [], scalar_prefetch = 0 : i64, scratch_operands = 1 : i64, tpu.core_type = #tpu.core_type<tc>} {
    %c0 = arith.constant 0 : index
    %c0_0 = arith.constant 0 : index
    %0 = vector.load %arg0[%c0, %c0_0] : memref<48x48xf32, #tpu.memory_space<vmem>>, vector<48x48xf32>
    %1 = arith.truncf %0 : vector<48x48xf32> to vector<48x48xbf16>
    %c0_1 = arith.constant 0 : index
    %c0_2 = arith.constant 0 : index
    %2 = vector.load %arg1[%c0_1, %c0_2] : memref<48x32xbf16, #tpu.memory_space<vmem>>, vector<48x32xbf16>
    %cst = arith.constant dense<0.000000e+00> : vector<48x32xf32>
    %3 = tpu.matmul %1, %2, %cst {dimension_numbers = #tpu.dot_dimension_numbers<[1], [0], [0], [1], [0, 0, 1, 1], [], []>} : vector<48x48xbf16>, vector<48x32xbf16>, vector<48x32xf32> -> vector<48x32xf32>
    %c0_3 = arith.constant 0 : index
    %c0_4 = arith.constant 0 : index
    %4 = vector.load %arg2[%c0_3, %c0_4] : memref<48x32xf32, #tpu.memory_space<vmem>>, vector<48x32xf32>
    %5 = arith.addf %3, %4 : vector<48x32xf32>
    %6 = tpu.iota {dimensions = array<i32: 0>} : vector<48x48xi32>
    %7 = tpu.iota {dimensions = array<i32: 1>} : vector<48x48xi32>
    %false = arith.constant false
    %8 = vector.broadcast %false : i1 to vector<48x48xi1>
    %c7_i32 = arith.constant 7 : i32
    %9 = vector.broadcast %c7_i32 : i32 to vector<48x48xi32>
    %10 = arith.cmpi sge, %7, %9 : vector<48x48xi32>
    %c24_i32 = arith.constant 24 : i32
    %11 = vector.broadcast %c24_i32 : i32 to vector<48x48xi32>
    %12 = arith.cmpi slt, %7, %11 : vector<48x48xi32>
    %13 = arith.andi %10, %12 : vector<48x48xi1>
    %14 = arith.ori %8, %13 : vector<48x48xi1>
    %c31_i32 = arith.constant 31 : i32
    %15 = vector.broadcast %c31_i32 : i32 to vector<48x48xi32>
    %16 = arith.cmpi sge, %7, %15 : vector<48x48xi32>
    %c48_i32 = arith.constant 48 : i32
    %17 = vector.broadcast %c48_i32 : i32 to vector<48x48xi32>
    %18 = arith.cmpi slt, %7, %17 : vector<48x48xi32>
    %19 = arith.andi %16, %18 : vector<48x48xi1>
    %20 = arith.ori %14, %19 : vector<48x48xi1>
    %c24_i32_5 = arith.constant 24 : i32
    %21 = vector.broadcast %c24_i32_5 : i32 to vector<48x48xi32>
    %22 = arith.cmpi slt, %6, %21 : vector<48x48xi32>
    %c24_i32_6 = arith.constant 24 : i32
    %23 = vector.broadcast %c24_i32_6 : i32 to vector<48x48xi32>
    %24 = arith.cmpi slt, %7, %23 : vector<48x48xi32>
    %25 = arith.andi %22, %24 : vector<48x48xi1>
    %cst_7 = arith.constant dense<true> : vector<48x48xi1>
    %26 = arith.xori %22, %cst_7 : vector<48x48xi1>
    %cst_8 = arith.constant dense<true> : vector<48x48xi1>
    %27 = arith.xori %24, %cst_8 : vector<48x48xi1>
    %28 = arith.andi %26, %27 : vector<48x48xi1>
    %29 = arith.ori %25, %28 : vector<48x48xi1>
    %30 = arith.andi %20, %29 : vector<48x48xi1>
    %cst_9 = arith.constant 0.000000e+00 : f32
    %cst_10 = arith.constant -1.000000e+30 : f32
    %31 = vector.broadcast %cst_9 : f32 to vector<48x48xf32>
    %32 = vector.broadcast %cst_10 : f32 to vector<48x48xf32>
    %33 = arith.select %30, %31, %32 : vector<48x48xi1>, vector<48x48xf32>
    %c0_11 = arith.constant 0 : index
    %c0_12 = arith.constant 0 : index
    %c0_13 = arith.constant 0 : index
    %34 = vector.load %arg3[%c0_11, %c0_12, %c0_13] : memref<2x1x32xf32, #tpu.memory_space<vmem>>, vector<1x1x32xf32>
    %35 = vector.shape_cast %34 : vector<1x1x32xf32> to vector<1x32xf32>
    %c0_14 = arith.constant 0 : index
    %c0_15 = arith.constant 0 : index
    %c0_16 = arith.constant 0 : index
    %36 = vector.load %arg4[%c0_14, %c0_15, %c0_16] : memref<2x1x32xf32, #tpu.memory_space<vmem>>, vector<1x1x32xf32>
    %37 = vector.shape_cast %36 : vector<1x1x32xf32> to vector<1x32xf32>
    %cst_17 = arith.constant dense<0.000000e+00> : vector<48xf32>
    %38 = vector.multi_reduction <add>, %5, %cst_17 [1] : vector<48x32xf32> to vector<48xf32>
    %39 = vector.shape_cast %38 : vector<48xf32> to vector<48x1xf32>
    %cst_18 = arith.constant 3.200000e+01 : f32
    %40 = vector.broadcast %cst_18 : f32 to vector<48x1xf32>
    %41 = arith.divf %39, %40 : vector<48x1xf32>
    %42 = vector.broadcast %41 : vector<48x1xf32> to vector<48x32xf32>
    %43 = arith.subf %5, %42 : vector<48x32xf32>
    %44 = arith.mulf %43, %43 : vector<48x32xf32>
    %cst_19 = arith.constant dense<0.000000e+00> : vector<48xf32>
    %45 = vector.multi_reduction <add>, %44, %cst_19 [1] : vector<48x32xf32> to vector<48xf32>
    %46 = vector.shape_cast %45 : vector<48xf32> to vector<48x1xf32>
    %cst_20 = arith.constant 3.200000e+01 : f32
    %47 = vector.broadcast %cst_20 : f32 to vector<48x1xf32>
    %48 = arith.divf %46, %47 : vector<48x1xf32>
    %cst_21 = arith.constant 9.99999997E-7 : f32
    %49 = vector.broadcast %cst_21 : f32 to vector<48x1xf32>
    %50 = arith.addf %48, %49 : vector<48x1xf32>
    %51 = math.rsqrt %50 : vector<48x1xf32>
    %52 = vector.broadcast %51 : vector<48x1xf32> to vector<48x32xf32>
    %53 = arith.mulf %43, %52 : vector<48x32xf32>
    %54 = vector.broadcast %35 : vector<1x32xf32> to vector<48x32xf32>
    %55 = arith.mulf %53, %54 : vector<48x32xf32>
    %56 = vector.broadcast %37 : vector<1x32xf32> to vector<48x32xf32>
    %57 = arith.addf %55, %56 : vector<48x32xf32>
    %58 = arith.truncf %57 : vector<48x32xf32> to vector<48x32xbf16>
    %c0_22 = arith.constant 0 : index
    %c0_23 = arith.constant 0 : index
    %c0_24 = arith.constant 0 : index
    %59 = vector.load %arg5[%c0_22, %c0_23, %c0_24] : memref<2x32x96xbf16, #tpu.memory_space<vmem>>, vector<1x32x96xbf16>
    %60 = vector.shape_cast %59 : vector<1x32x96xbf16> to vector<32x96xbf16>
    %cst_25 = arith.constant dense<0.000000e+00> : vector<48x96xf32>
    %61 = tpu.matmul %58, %60, %cst_25 {dimension_numbers = #tpu.dot_dimension_numbers<[1], [0], [0], [1], [0, 0, 1, 1], [], []>} : vector<48x32xbf16>, vector<32x96xbf16>, vector<48x96xf32> -> vector<48x96xf32>
    %c0_26 = arith.constant 0 : index
    %c0_27 = arith.constant 0 : index
    %c0_28 = arith.constant 0 : index
    %62 = vector.load %arg6[%c0_26, %c0_27, %c0_28] : memref<2x1x96xf32, #tpu.memory_space<vmem>>, vector<1x1x96xf32>
    %63 = vector.shape_cast %62 : vector<1x1x96xf32> to vector<1x96xf32>
    %64 = vector.broadcast %63 : vector<1x96xf32> to vector<48x96xf32>
    %65 = arith.addf %61, %64 : vector<48x96xf32>
    %66 = arith.truncf %65 : vector<48x96xf32> to vector<48x96xbf16>
    %67 = vector.extract_strided_slice %66 {offsets = [0, 0], sizes = [48, 8], strides = [1, 1]} : vector<48x96xbf16> to vector<48x8xbf16>
    %68 = vector.extract_strided_slice %66 {offsets = [0, 32], sizes = [48, 8], strides = [1, 1]} : vector<48x96xbf16> to vector<48x8xbf16>
    %69 = vector.extract_strided_slice %66 {offsets = [0, 64], sizes = [48, 8], strides = [1, 1]} : vector<48x96xbf16> to vector<48x8xbf16>
    %cst_29 = arith.constant dense<0.000000e+00> : vector<48x48xf32>
    %70 = tpu.matmul %67, %68, %cst_29 {dimension_numbers = #tpu.dot_dimension_numbers<[1], [1], [0], [0], [0, 0, 1, 0], [], []>} : vector<48x8xbf16>, vector<48x8xbf16>, vector<48x48xf32> -> vector<48x48xf32>
    %71 = arith.addf %70, %33 : vector<48x48xf32>
    %cst_30 = arith.constant dense<0xFF800000> : vector<48xf32>
    %72 = vector.multi_reduction <maximumf>, %71, %cst_30 [1] : vector<48x48xf32> to vector<48xf32>
    %73 = vector.shape_cast %72 : vector<48xf32> to vector<48x1xf32>
    %74 = vector.broadcast %73 : vector<48x1xf32> to vector<48x48xf32>
    %75 = arith.subf %71, %74 : vector<48x48xf32>
    %76 = math.exp %75 : vector<48x48xf32>
    %cst_31 = arith.constant dense<0.000000e+00> : vector<48xf32>
    %77 = vector.multi_reduction <add>, %76, %cst_31 [1] : vector<48x48xf32> to vector<48xf32>
    %78 = vector.shape_cast %77 : vector<48xf32> to vector<48x1xf32>
    %79 = tpu.reciprocal %78 {approx = true} : vector<48x1xf32> -> vector<48x1xf32>
    %80 = vector.broadcast %79 : vector<48x1xf32> to vector<48x48xf32>
    %81 = arith.mulf %76, %80 : vector<48x48xf32>
    %82 = arith.truncf %81 : vector<48x48xf32> to vector<48x48xbf16>
    %cst_32 = arith.constant dense<0.000000e+00> : vector<48x8xf32>
    %83 = tpu.matmul %82, %69, %cst_32 {dimension_numbers = #tpu.dot_dimension_numbers<[1], [0], [0], [1], [0, 0, 1, 1], [], []>} : vector<48x48xbf16>, vector<48x8xbf16>, vector<48x8xf32> -> vector<48x8xf32>
    %c0_33 = arith.constant 0 : index
    %c0_34 = arith.constant 0 : index
    %84 = vector.load %arg20[%c0_33, %c0_34] : memref<48x32xf32, #tpu.memory_space<vmem>>, vector<48x8xf32>
    tpu.vector_store %arg20[%c0_33, %c0_34], %83 {strides = array<i32>} : memref<48x32xf32, #tpu.memory_space<vmem>>, vector<48x8xf32>,
    %85 = vector.extract_strided_slice %66 {offsets = [0, 8], sizes = [48, 8], strides = [1, 1]} : vector<48x96xbf16> to vector<48x8xbf16>
    %86 = vector.extract_strided_slice %66 {offsets = [0, 40], sizes = [48, 8], strides = [1, 1]} : vector<48x96xbf16> to vector<48x8xbf16>
    %87 = vector.extract_strided_slice %66 {offsets = [0, 72], sizes = [48, 8], strides = [1, 1]} : vector<48x96xbf16> to vector<48x8xbf16>
    %cst_35 = arith.constant dense<0.000000e+00> : vector<48x48xf32>
    %88 = tpu.matmul %85, %86, %cst_35 {dimension_numbers = #tpu.dot_dimension_numbers<[1], [1], [0], [0], [0, 0, 1, 0], [], []>} : vector<48x8xbf16>, vector<48x8xbf16>, vector<48x48xf32> -> vector<48x48xf32>
    %89 = arith.addf %88, %33 : vector<48x48xf32>
    %cst_36 = arith.constant dense<0xFF800000> : vector<48xf32>
    %90 = vector.multi_reduction <maximumf>, %89, %cst_36 [1] : vector<48x48xf32> to vector<48xf32>
    %91 = vector.shape_cast %90 : vector<48xf32> to vector<48x1xf32>
    %92 = vector.broadcast %91 : vector<48x1xf32> to vector<48x48xf32>
    %93 = arith.subf %89, %92 : vector<48x48xf32>
    %94 = math.exp %93 : vector<48x48xf32>
    %cst_37 = arith.constant dense<0.000000e+00> : vector<48xf32>
    %95 = vector.multi_reduction <add>, %94, %cst_37 [1] : vector<48x48xf32> to vector<48xf32>
    %96 = vector.shape_cast %95 : vector<48xf32> to vector<48x1xf32>
    %97 = tpu.reciprocal %96 {approx = true} : vector<48x1xf32> -> vector<48x1xf32>
    %98 = vector.broadcast %97 : vector<48x1xf32> to vector<48x48xf32>
    %99 = arith.mulf %94, %98 : vector<48x48xf32>
    %100 = arith.truncf %99 : vector<48x48xf32> to vector<48x48xbf16>
    %cst_38 = arith.constant dense<0.000000e+00> : vector<48x8xf32>
    %101 = tpu.matmul %100, %87, %cst_38 {dimension_numbers = #tpu.dot_dimension_numbers<[1], [0], [0], [1], [0, 0, 1, 1], [], []>} : vector<48x48xbf16>, vector<48x8xbf16>, vector<48x8xf32> -> vector<48x8xf32>
    %c0_39 = arith.constant 0 : index
    %c8 = arith.constant 8 : index
    %102 = vector.load %arg20[%c0_39, %c8] : memref<48x32xf32, #tpu.memory_space<vmem>>, vector<48x8xf32>
    tpu.vector_store %arg20[%c0_39, %c8], %101 {strides = array<i32>} : memref<48x32xf32, #tpu.memory_space<vmem>>, vector<48x8xf32>,
    %103 = vector.extract_strided_slice %66 {offsets = [0, 16], sizes = [48, 8], strides = [1, 1]} : vector<48x96xbf16> to vector<48x8xbf16>
    %104 = vector.extract_strided_slice %66 {offsets = [0, 48], sizes = [48, 8], strides = [1, 1]} : vector<48x96xbf16> to vector<48x8xbf16>
    %105 = vector.extract_strided_slice %66 {offsets = [0, 80], sizes = [48, 8], strides = [1, 1]} : vector<48x96xbf16> to vector<48x8xbf16>
    %cst_40 = arith.constant dense<0.000000e+00> : vector<48x48xf32>
    %106 = tpu.matmul %103, %104, %cst_40 {dimension_numbers = #tpu.dot_dimension_numbers<[1], [1], [0], [0], [0, 0, 1, 0], [], []>} : vector<48x8xbf16>, vector<48x8xbf16>, vector<48x48xf32> -> vector<48x48xf32>
    %107 = arith.addf %106, %33 : vector<48x48xf32>
    %cst_41 = arith.constant dense<0xFF800000> : vector<48xf32>
    %108 = vector.multi_reduction <maximumf>, %107, %cst_41 [1] : vector<48x48xf32> to vector<48xf32>
    %109 = vector.shape_cast %108 : vector<48xf32> to vector<48x1xf32>
    %110 = vector.broadcast %109 : vector<48x1xf32> to vector<48x48xf32>
    %111 = arith.subf %107, %110 : vector<48x48xf32>
    %112 = math.exp %111 : vector<48x48xf32>
    %cst_42 = arith.constant dense<0.000000e+00> : vector<48xf32>
    %113 = vector.multi_reduction <add>, %112, %cst_42 [1] : vector<48x48xf32> to vector<48xf32>
    %114 = vector.shape_cast %113 : vector<48xf32> to vector<48x1xf32>
    %115 = tpu.reciprocal %114 {approx = true} : vector<48x1xf32> -> vector<48x1xf32>
    %116 = vector.broadcast %115 : vector<48x1xf32> to vector<48x48xf32>
    %117 = arith.mulf %112, %116 : vector<48x48xf32>
    %118 = arith.truncf %117 : vector<48x48xf32> to vector<48x48xbf16>
    %cst_43 = arith.constant dense<0.000000e+00> : vector<48x8xf32>
    %119 = tpu.matmul %118, %105, %cst_43 {dimension_numbers = #tpu.dot_dimension_numbers<[1], [0], [0], [1], [0, 0, 1, 1], [], []>} : vector<48x48xbf16>, vector<48x8xbf16>, vector<48x8xf32> -> vector<48x8xf32>
    %c0_44 = arith.constant 0 : index
    %c16 = arith.constant 16 : index
    %120 = vector.load %arg20[%c0_44, %c16] : memref<48x32xf32, #tpu.memory_space<vmem>>, vector<48x8xf32>
    tpu.vector_store %arg20[%c0_44, %c16], %119 {strides = array<i32>} : memref<48x32xf32, #tpu.memory_space<vmem>>, vector<48x8xf32>,
    %121 = vector.extract_strided_slice %66 {offsets = [0, 24], sizes = [48, 8], strides = [1, 1]} : vector<48x96xbf16> to vector<48x8xbf16>
    %122 = vector.extract_strided_slice %66 {offsets = [0, 56], sizes = [48, 8], strides = [1, 1]} : vector<48x96xbf16> to vector<48x8xbf16>
    %123 = vector.extract_strided_slice %66 {offsets = [0, 88], sizes = [48, 8], strides = [1, 1]} : vector<48x96xbf16> to vector<48x8xbf16>
    %cst_45 = arith.constant dense<0.000000e+00> : vector<48x48xf32>
    %124 = tpu.matmul %121, %122, %cst_45 {dimension_numbers = #tpu.dot_dimension_numbers<[1], [1], [0], [0], [0, 0, 1, 0], [], []>} : vector<48x8xbf16>, vector<48x8xbf16>, vector<48x48xf32> -> vector<48x48xf32>
    %125 = arith.addf %124, %33 : vector<48x48xf32>
    %cst_46 = arith.constant dense<0xFF800000> : vector<48xf32>
    %126 = vector.multi_reduction <maximumf>, %125, %cst_46 [1] : vector<48x48xf32> to vector<48xf32>
    %127 = vector.shape_cast %126 : vector<48xf32> to vector<48x1xf32>
    %128 = vector.broadcast %127 : vector<48x1xf32> to vector<48x48xf32>
    %129 = arith.subf %125, %128 : vector<48x48xf32>
    %130 = math.exp %129 : vector<48x48xf32>
    %cst_47 = arith.constant dense<0.000000e+00> : vector<48xf32>
    %131 = vector.multi_reduction <add>, %130, %cst_47 [1] : vector<48x48xf32> to vector<48xf32>
    %132 = vector.shape_cast %131 : vector<48xf32> to vector<48x1xf32>
    %133 = tpu.reciprocal %132 {approx = true} : vector<48x1xf32> -> vector<48x1xf32>
    %134 = vector.broadcast %133 : vector<48x1xf32> to vector<48x48xf32>
    %135 = arith.mulf %130, %134 : vector<48x48xf32>
    %136 = arith.truncf %135 : vector<48x48xf32> to vector<48x48xbf16>
    %cst_48 = arith.constant dense<0.000000e+00> : vector<48x8xf32>
    %137 = tpu.matmul %136, %123, %cst_48 {dimension_numbers = #tpu.dot_dimension_numbers<[1], [0], [0], [1], [0, 0, 1, 1], [], []>} : vector<48x48xbf16>, vector<48x8xbf16>, vector<48x8xf32> -> vector<48x8xf32>
    %c0_49 = arith.constant 0 : index
    %c24 = arith.constant 24 : index
    %138 = vector.load %arg20[%c0_49, %c24] : memref<48x32xf32, #tpu.memory_space<vmem>>, vector<48x8xf32>
    tpu.vector_store %arg20[%c0_49, %c24], %137 {strides = array<i32>} : memref<48x32xf32, #tpu.memory_space<vmem>>, vector<48x8xf32>,
    %c0_50 = arith.constant 0 : index
    %c0_51 = arith.constant 0 : index
    %139 = vector.load %arg20[%c0_50, %c0_51] : memref<48x32xf32, #tpu.memory_space<vmem>>, vector<48x32xf32>
    %140 = arith.truncf %139 : vector<48x32xf32> to vector<48x32xbf16>
    %c0_52 = arith.constant 0 : index
    %c0_53 = arith.constant 0 : index
    %c0_54 = arith.constant 0 : index
    %141 = vector.load %arg7[%c0_52, %c0_53, %c0_54] : memref<2x32x32xbf16, #tpu.memory_space<vmem>>, vector<1x32x32xbf16>
    %142 = vector.shape_cast %141 : vector<1x32x32xbf16> to vector<32x32xbf16>
    %cst_55 = arith.constant dense<0.000000e+00> : vector<48x32xf32>
    %143 = tpu.matmul %140, %142, %cst_55 {dimension_numbers = #tpu.dot_dimension_numbers<[1], [0], [0], [1], [0, 0, 1, 1], [], []>} : vector<48x32xbf16>, vector<32x32xbf16>, vector<48x32xf32> -> vector<48x32xf32>
    %c0_56 = arith.constant 0 : index
    %c0_57 = arith.constant 0 : index
    %c0_58 = arith.constant 0 : index
    %144 = vector.load %arg8[%c0_56, %c0_57, %c0_58] : memref<2x1x32xf32, #tpu.memory_space<vmem>>, vector<1x1x32xf32>
    %145 = vector.shape_cast %144 : vector<1x1x32xf32> to vector<1x32xf32>
    %146 = vector.broadcast %145 : vector<1x32xf32> to vector<48x32xf32>
    %147 = arith.addf %143, %146 : vector<48x32xf32>
    %c0_59 = arith.constant 0 : index
    %c0_60 = arith.constant 0 : index
    %c0_61 = arith.constant 0 : index
    %148 = vector.load %arg9[%c0_59, %c0_60, %c0_61] : memref<2x1x32xf32, #tpu.memory_space<vmem>>, vector<1x1x32xf32>
    %149 = vector.shape_cast %148 : vector<1x1x32xf32> to vector<1x32xf32>
    %150 = vector.broadcast %149 : vector<1x32xf32> to vector<48x32xf32>
    %151 = arith.mulf %150, %147 : vector<48x32xf32>
    %152 = arith.addf %5, %151 : vector<48x32xf32>
    %c0_62 = arith.constant 0 : index
    %c0_63 = arith.constant 0 : index
    %c0_64 = arith.constant 0 : index
    %153 = vector.load %arg10[%c0_62, %c0_63, %c0_64] : memref<2x1x32xf32, #tpu.memory_space<vmem>>, vector<1x1x32xf32>
    %154 = vector.shape_cast %153 : vector<1x1x32xf32> to vector<1x32xf32>
    %c0_65 = arith.constant 0 : index
    %c0_66 = arith.constant 0 : index
    %c0_67 = arith.constant 0 : index
    %155 = vector.load %arg11[%c0_65, %c0_66, %c0_67] : memref<2x1x32xf32, #tpu.memory_space<vmem>>, vector<1x1x32xf32>
    %156 = vector.shape_cast %155 : vector<1x1x32xf32> to vector<1x32xf32>
    %cst_68 = arith.constant dense<0.000000e+00> : vector<48xf32>
    %157 = vector.multi_reduction <add>, %152, %cst_68 [1] : vector<48x32xf32> to vector<48xf32>
    %158 = vector.shape_cast %157 : vector<48xf32> to vector<48x1xf32>
    %cst_69 = arith.constant 3.200000e+01 : f32
    %159 = vector.broadcast %cst_69 : f32 to vector<48x1xf32>
    %160 = arith.divf %158, %159 : vector<48x1xf32>
    %161 = vector.broadcast %160 : vector<48x1xf32> to vector<48x32xf32>
    %162 = arith.subf %152, %161 : vector<48x32xf32>
    %163 = arith.mulf %162, %162 : vector<48x32xf32>
    %cst_70 = arith.constant dense<0.000000e+00> : vector<48xf32>
    %164 = vector.multi_reduction <add>, %163, %cst_70 [1] : vector<48x32xf32> to vector<48xf32>
    %165 = vector.shape_cast %164 : vector<48xf32> to vector<48x1xf32>
    %cst_71 = arith.constant 3.200000e+01 : f32
    %166 = vector.broadcast %cst_71 : f32 to vector<48x1xf32>
    %167 = arith.divf %165, %166 : vector<48x1xf32>
    %cst_72 = arith.constant 9.99999997E-7 : f32
    %168 = vector.broadcast %cst_72 : f32 to vector<48x1xf32>
    %169 = arith.addf %167, %168 : vector<48x1xf32>
    %170 = math.rsqrt %169 : vector<48x1xf32>
    %171 = vector.broadcast %170 : vector<48x1xf32> to vector<48x32xf32>
    %172 = arith.mulf %162, %171 : vector<48x32xf32>
    %173 = vector.broadcast %154 : vector<1x32xf32> to vector<48x32xf32>
    %174 = arith.mulf %172, %173 : vector<48x32xf32>
    %175 = vector.broadcast %156 : vector<1x32xf32> to vector<48x32xf32>
    %176 = arith.addf %174, %175 : vector<48x32xf32>
    %177 = arith.truncf %176 : vector<48x32xf32> to vector<48x32xbf16>
    %c0_73 = arith.constant 0 : index
    %c0_74 = arith.constant 0 : index
    %c0_75 = arith.constant 0 : index
    %178 = vector.load %arg12[%c0_73, %c0_74, %c0_75] : memref<2x32x128xbf16, #tpu.memory_space<vmem>>, vector<1x32x128xbf16>
    %179 = vector.shape_cast %178 : vector<1x32x128xbf16> to vector<32x128xbf16>
    %cst_76 = arith.constant dense<0.000000e+00> : vector<48x128xf32>
    %180 = tpu.matmul %177, %179, %cst_76 {dimension_numbers = #tpu.dot_dimension_numbers<[1], [0], [0], [1], [0, 0, 1, 1], [], []>} : vector<48x32xbf16>, vector<32x128xbf16>, vector<48x128xf32> -> vector<48x128xf32>
    %c0_77 = arith.constant 0 : index
    %c0_78 = arith.constant 0 : index
    %c0_79 = arith.constant 0 : index
    %181 = vector.load %arg13[%c0_77, %c0_78, %c0_79] : memref<2x1x128xf32, #tpu.memory_space<vmem>>, vector<1x1x128xf32>
    %182 = vector.shape_cast %181 : vector<1x1x128xf32> to vector<1x128xf32>
    %183 = vector.broadcast %182 : vector<1x128xf32> to vector<48x128xf32>
    %184 = arith.addf %180, %183 : vector<48x128xf32>
    %185 = vector.extract_strided_slice %184 {offsets = [0, 0], sizes = [48, 64], strides = [1, 1]} : vector<48x128xf32> to vector<48x64xf32>
    %186 = arith.negf %185 : vector<48x64xf32>
    %187 = math.exp %186 : vector<48x64xf32>
    %cst_80 = arith.constant 1.000000e+00 : f32
    %188 = vector.broadcast %cst_80 : f32 to vector<48x64xf32>
    %189 = arith.addf %188, %187 : vector<48x64xf32>
    %190 = arith.divf %188, %189 : vector<48x64xf32>
    %191 = arith.mulf %185, %190 : vector<48x64xf32>
    %192 = vector.extract_strided_slice %184 {offsets = [0, 64], sizes = [48, 64], strides = [1, 1]} : vector<48x128xf32> to vector<48x64xf32>
    %193 = arith.mulf %191, %192 : vector<48x64xf32>
    %194 = arith.truncf %193 : vector<48x64xf32> to vector<48x64xbf16>
    %c0_81 = arith.constant 0 : index
    %c0_82 = arith.constant 0 : index
    %c0_83 = arith.constant 0 : index
    %195 = vector.load %arg14[%c0_81, %c0_82, %c0_83] : memref<2x64x32xbf16, #tpu.memory_space<vmem>>, vector<1x64x32xbf16>
    %196 = vector.shape_cast %195 : vector<1x64x32xbf16> to vector<64x32xbf16>
    %cst_84 = arith.constant dense<0.000000e+00> : vector<48x32xf32>
    %197 = tpu.matmul %194, %196, %cst_84 {dimension_numbers = #tpu.dot_dimension_numbers<[1], [0], [0], [1], [0, 0, 1, 1], [], []>} : vector<48x64xbf16>, vector<64x32xbf16>, vector<48x32xf32> -> vector<48x32xf32>
    %c0_85 = arith.constant 0 : index
    %c0_86 = arith.constant 0 : index
    %c0_87 = arith.constant 0 : index
    %198 = vector.load %arg15[%c0_85, %c0_86, %c0_87] : memref<2x1x32xf32, #tpu.memory_space<vmem>>, vector<1x1x32xf32>
    %199 = vector.shape_cast %198 : vector<1x1x32xf32> to vector<1x32xf32>
    %200 = vector.broadcast %199 : vector<1x32xf32> to vector<48x32xf32>
    %201 = arith.addf %197, %200 : vector<48x32xf32>
    %c0_88 = arith.constant 0 : index
    %c0_89 = arith.constant 0 : index
    %c0_90 = arith.constant 0 : index
    %202 = vector.load %arg16[%c0_88, %c0_89, %c0_90] : memref<2x1x32xf32, #tpu.memory_space<vmem>>, vector<1x1x32xf32>
    %203 = vector.shape_cast %202 : vector<1x1x32xf32> to vector<1x32xf32>
    %204 = vector.broadcast %203 : vector<1x32xf32> to vector<48x32xf32>
    %205 = arith.mulf %204, %201 : vector<48x32xf32>
    %206 = arith.addf %152, %205 : vector<48x32xf32>
    %c1 = arith.constant 1 : index
    %c0_91 = arith.constant 0 : index
    %c0_92 = arith.constant 0 : index
    %207 = vector.load %arg3[%c1, %c0_91, %c0_92] : memref<2x1x32xf32, #tpu.memory_space<vmem>>, vector<1x1x32xf32>
    %208 = vector.shape_cast %207 : vector<1x1x32xf32> to vector<1x32xf32>
    %c1_93 = arith.constant 1 : index
    %c0_94 = arith.constant 0 : index
    %c0_95 = arith.constant 0 : index
    %209 = vector.load %arg4[%c1_93, %c0_94, %c0_95] : memref<2x1x32xf32, #tpu.memory_space<vmem>>, vector<1x1x32xf32>
    %210 = vector.shape_cast %209 : vector<1x1x32xf32> to vector<1x32xf32>
    %cst_96 = arith.constant dense<0.000000e+00> : vector<48xf32>
    %211 = vector.multi_reduction <add>, %206, %cst_96 [1] : vector<48x32xf32> to vector<48xf32>
    %212 = vector.shape_cast %211 : vector<48xf32> to vector<48x1xf32>
    %cst_97 = arith.constant 3.200000e+01 : f32
    %213 = vector.broadcast %cst_97 : f32 to vector<48x1xf32>
    %214 = arith.divf %212, %213 : vector<48x1xf32>
    %215 = vector.broadcast %214 : vector<48x1xf32> to vector<48x32xf32>
    %216 = arith.subf %206, %215 : vector<48x32xf32>
    %217 = arith.mulf %216, %216 : vector<48x32xf32>
    %cst_98 = arith.constant dense<0.000000e+00> : vector<48xf32>
    %218 = vector.multi_reduction <add>, %217, %cst_98 [1] : vector<48x32xf32> to vector<48xf32>
    %219 = vector.shape_cast %218 : vector<48xf32> to vector<48x1xf32>
    %cst_99 = arith.constant 3.200000e+01 : f32
    %220 = vector.broadcast %cst_99 : f32 to vector<48x1xf32>
    %221 = arith.divf %219, %220 : vector<48x1xf32>
    %cst_100 = arith.constant 9.99999997E-7 : f32
    %222 = vector.broadcast %cst_100 : f32 to vector<48x1xf32>
    %223 = arith.addf %221, %222 : vector<48x1xf32>
    %224 = math.rsqrt %223 : vector<48x1xf32>
    %225 = vector.broadcast %224 : vector<48x1xf32> to vector<48x32xf32>
    %226 = arith.mulf %216, %225 : vector<48x32xf32>
    %227 = vector.broadcast %208 : vector<1x32xf32> to vector<48x32xf32>
    %228 = arith.mulf %226, %227 : vector<48x32xf32>
    %229 = vector.broadcast %210 : vector<1x32xf32> to vector<48x32xf32>
    %230 = arith.addf %228, %229 : vector<48x32xf32>
    %231 = arith.truncf %230 : vector<48x32xf32> to vector<48x32xbf16>
    %c1_101 = arith.constant 1 : index
    %c0_102 = arith.constant 0 : index
    %c0_103 = arith.constant 0 : index
    %232 = vector.load %arg5[%c1_101, %c0_102, %c0_103] : memref<2x32x96xbf16, #tpu.memory_space<vmem>>, vector<1x32x96xbf16>
    %233 = vector.shape_cast %232 : vector<1x32x96xbf16> to vector<32x96xbf16>
    %cst_104 = arith.constant dense<0.000000e+00> : vector<48x96xf32>
    %234 = tpu.matmul %231, %233, %cst_104 {dimension_numbers = #tpu.dot_dimension_numbers<[1], [0], [0], [1], [0, 0, 1, 1], [], []>} : vector<48x32xbf16>, vector<32x96xbf16>, vector<48x96xf32> -> vector<48x96xf32>
    %c1_105 = arith.constant 1 : index
    %c0_106 = arith.constant 0 : index
    %c0_107 = arith.constant 0 : index
    %235 = vector.load %arg6[%c1_105, %c0_106, %c0_107] : memref<2x1x96xf32, #tpu.memory_space<vmem>>, vector<1x1x96xf32>
    %236 = vector.shape_cast %235 : vector<1x1x96xf32> to vector<1x96xf32>
    %237 = vector.broadcast %236 : vector<1x96xf32> to vector<48x96xf32>
    %238 = arith.addf %234, %237 : vector<48x96xf32>
    %239 = arith.truncf %238 : vector<48x96xf32> to vector<48x96xbf16>
    %240 = vector.extract_strided_slice %239 {offsets = [0, 0], sizes = [48, 8], strides = [1, 1]} : vector<48x96xbf16> to vector<48x8xbf16>
    %241 = vector.extract_strided_slice %239 {offsets = [0, 32], sizes = [48, 8], strides = [1, 1]} : vector<48x96xbf16> to vector<48x8xbf16>
    %242 = vector.extract_strided_slice %239 {offsets = [0, 64], sizes = [48, 8], strides = [1, 1]} : vector<48x96xbf16> to vector<48x8xbf16>
    %cst_108 = arith.constant dense<0.000000e+00> : vector<48x48xf32>
    %243 = tpu.matmul %240, %241, %cst_108 {dimension_numbers = #tpu.dot_dimension_numbers<[1], [1], [0], [0], [0, 0, 1, 0], [], []>} : vector<48x8xbf16>, vector<48x8xbf16>, vector<48x48xf32> -> vector<48x48xf32>
    %244 = arith.addf %243, %33 : vector<48x48xf32>
    %cst_109 = arith.constant dense<0xFF800000> : vector<48xf32>
    %245 = vector.multi_reduction <maximumf>, %244, %cst_109 [1] : vector<48x48xf32> to vector<48xf32>
    %246 = vector.shape_cast %245 : vector<48xf32> to vector<48x1xf32>
    %247 = vector.broadcast %246 : vector<48x1xf32> to vector<48x48xf32>
    %248 = arith.subf %244, %247 : vector<48x48xf32>
    %249 = math.exp %248 : vector<48x48xf32>
    %cst_110 = arith.constant dense<0.000000e+00> : vector<48xf32>
    %250 = vector.multi_reduction <add>, %249, %cst_110 [1] : vector<48x48xf32> to vector<48xf32>
    %251 = vector.shape_cast %250 : vector<48xf32> to vector<48x1xf32>
    %252 = tpu.reciprocal %251 {approx = true} : vector<48x1xf32> -> vector<48x1xf32>
    %253 = vector.broadcast %252 : vector<48x1xf32> to vector<48x48xf32>
    %254 = arith.mulf %249, %253 : vector<48x48xf32>
    %255 = arith.truncf %254 : vector<48x48xf32> to vector<48x48xbf16>
    %cst_111 = arith.constant dense<0.000000e+00> : vector<48x8xf32>
    %256 = tpu.matmul %255, %242, %cst_111 {dimension_numbers = #tpu.dot_dimension_numbers<[1], [0], [0], [1], [0, 0, 1, 1], [], []>} : vector<48x48xbf16>, vector<48x8xbf16>, vector<48x8xf32> -> vector<48x8xf32>
    %c0_112 = arith.constant 0 : index
    %c0_113 = arith.constant 0 : index
    %257 = vector.load %arg20[%c0_112, %c0_113] : memref<48x32xf32, #tpu.memory_space<vmem>>, vector<48x8xf32>
    tpu.vector_store %arg20[%c0_112, %c0_113], %256 {strides = array<i32>} : memref<48x32xf32, #tpu.memory_space<vmem>>, vector<48x8xf32>,
    %258 = vector.extract_strided_slice %239 {offsets = [0, 8], sizes = [48, 8], strides = [1, 1]} : vector<48x96xbf16> to vector<48x8xbf16>
    %259 = vector.extract_strided_slice %239 {offsets = [0, 40], sizes = [48, 8], strides = [1, 1]} : vector<48x96xbf16> to vector<48x8xbf16>
    %260 = vector.extract_strided_slice %239 {offsets = [0, 72], sizes = [48, 8], strides = [1, 1]} : vector<48x96xbf16> to vector<48x8xbf16>
    %cst_114 = arith.constant dense<0.000000e+00> : vector<48x48xf32>
    %261 = tpu.matmul %258, %259, %cst_114 {dimension_numbers = #tpu.dot_dimension_numbers<[1], [1], [0], [0], [0, 0, 1, 0], [], []>} : vector<48x8xbf16>, vector<48x8xbf16>, vector<48x48xf32> -> vector<48x48xf32>
    %262 = arith.addf %261, %33 : vector<48x48xf32>
    %cst_115 = arith.constant dense<0xFF800000> : vector<48xf32>
    %263 = vector.multi_reduction <maximumf>, %262, %cst_115 [1] : vector<48x48xf32> to vector<48xf32>
    %264 = vector.shape_cast %263 : vector<48xf32> to vector<48x1xf32>
    %265 = vector.broadcast %264 : vector<48x1xf32> to vector<48x48xf32>
    %266 = arith.subf %262, %265 : vector<48x48xf32>
    %267 = math.exp %266 : vector<48x48xf32>
    %cst_116 = arith.constant dense<0.000000e+00> : vector<48xf32>
    %268 = vector.multi_reduction <add>, %267, %cst_116 [1] : vector<48x48xf32> to vector<48xf32>
    %269 = vector.shape_cast %268 : vector<48xf32> to vector<48x1xf32>
    %270 = tpu.reciprocal %269 {approx = true} : vector<48x1xf32> -> vector<48x1xf32>
    %271 = vector.broadcast %270 : vector<48x1xf32> to vector<48x48xf32>
    %272 = arith.mulf %267, %271 : vector<48x48xf32>
    %273 = arith.truncf %272 : vector<48x48xf32> to vector<48x48xbf16>
    %cst_117 = arith.constant dense<0.000000e+00> : vector<48x8xf32>
    %274 = tpu.matmul %273, %260, %cst_117 {dimension_numbers = #tpu.dot_dimension_numbers<[1], [0], [0], [1], [0, 0, 1, 1], [], []>} : vector<48x48xbf16>, vector<48x8xbf16>, vector<48x8xf32> -> vector<48x8xf32>
    %c0_118 = arith.constant 0 : index
    %c8_119 = arith.constant 8 : index
    %275 = vector.load %arg20[%c0_118, %c8_119] : memref<48x32xf32, #tpu.memory_space<vmem>>, vector<48x8xf32>
    tpu.vector_store %arg20[%c0_118, %c8_119], %274 {strides = array<i32>} : memref<48x32xf32, #tpu.memory_space<vmem>>, vector<48x8xf32>,
    %276 = vector.extract_strided_slice %239 {offsets = [0, 16], sizes = [48, 8], strides = [1, 1]} : vector<48x96xbf16> to vector<48x8xbf16>
    %277 = vector.extract_strided_slice %239 {offsets = [0, 48], sizes = [48, 8], strides = [1, 1]} : vector<48x96xbf16> to vector<48x8xbf16>
    %278 = vector.extract_strided_slice %239 {offsets = [0, 80], sizes = [48, 8], strides = [1, 1]} : vector<48x96xbf16> to vector<48x8xbf16>
    %cst_120 = arith.constant dense<0.000000e+00> : vector<48x48xf32>
    %279 = tpu.matmul %276, %277, %cst_120 {dimension_numbers = #tpu.dot_dimension_numbers<[1], [1], [0], [0], [0, 0, 1, 0], [], []>} : vector<48x8xbf16>, vector<48x8xbf16>, vector<48x48xf32> -> vector<48x48xf32>
    %280 = arith.addf %279, %33 : vector<48x48xf32>
    %cst_121 = arith.constant dense<0xFF800000> : vector<48xf32>
    %281 = vector.multi_reduction <maximumf>, %280, %cst_121 [1] : vector<48x48xf32> to vector<48xf32>
    %282 = vector.shape_cast %281 : vector<48xf32> to vector<48x1xf32>
    %283 = vector.broadcast %282 : vector<48x1xf32> to vector<48x48xf32>
    %284 = arith.subf %280, %283 : vector<48x48xf32>
    %285 = math.exp %284 : vector<48x48xf32>
    %cst_122 = arith.constant dense<0.000000e+00> : vector<48xf32>
    %286 = vector.multi_reduction <add>, %285, %cst_122 [1] : vector<48x48xf32> to vector<48xf32>
    %287 = vector.shape_cast %286 : vector<48xf32> to vector<48x1xf32>
    %288 = tpu.reciprocal %287 {approx = true} : vector<48x1xf32> -> vector<48x1xf32>
    %289 = vector.broadcast %288 : vector<48x1xf32> to vector<48x48xf32>
    %290 = arith.mulf %285, %289 : vector<48x48xf32>
    %291 = arith.truncf %290 : vector<48x48xf32> to vector<48x48xbf16>
    %cst_123 = arith.constant dense<0.000000e+00> : vector<48x8xf32>
    %292 = tpu.matmul %291, %278, %cst_123 {dimension_numbers = #tpu.dot_dimension_numbers<[1], [0], [0], [1], [0, 0, 1, 1], [], []>} : vector<48x48xbf16>, vector<48x8xbf16>, vector<48x8xf32> -> vector<48x8xf32>
    %c0_124 = arith.constant 0 : index
    %c16_125 = arith.constant 16 : index
    %293 = vector.load %arg20[%c0_124, %c16_125] : memref<48x32xf32, #tpu.memory_space<vmem>>, vector<48x8xf32>
    tpu.vector_store %arg20[%c0_124, %c16_125], %292 {strides = array<i32>} : memref<48x32xf32, #tpu.memory_space<vmem>>, vector<48x8xf32>,
    %294 = vector.extract_strided_slice %239 {offsets = [0, 24], sizes = [48, 8], strides = [1, 1]} : vector<48x96xbf16> to vector<48x8xbf16>
    %295 = vector.extract_strided_slice %239 {offsets = [0, 56], sizes = [48, 8], strides = [1, 1]} : vector<48x96xbf16> to vector<48x8xbf16>
    %296 = vector.extract_strided_slice %239 {offsets = [0, 88], sizes = [48, 8], strides = [1, 1]} : vector<48x96xbf16> to vector<48x8xbf16>
    %cst_126 = arith.constant dense<0.000000e+00> : vector<48x48xf32>
    %297 = tpu.matmul %294, %295, %cst_126 {dimension_numbers = #tpu.dot_dimension_numbers<[1], [1], [0], [0], [0, 0, 1, 0], [], []>} : vector<48x8xbf16>, vector<48x8xbf16>, vector<48x48xf32> -> vector<48x48xf32>
    %298 = arith.addf %297, %33 : vector<48x48xf32>
    %cst_127 = arith.constant dense<0xFF800000> : vector<48xf32>
    %299 = vector.multi_reduction <maximumf>, %298, %cst_127 [1] : vector<48x48xf32> to vector<48xf32>
    %300 = vector.shape_cast %299 : vector<48xf32> to vector<48x1xf32>
    %301 = vector.broadcast %300 : vector<48x1xf32> to vector<48x48xf32>
    %302 = arith.subf %298, %301 : vector<48x48xf32>
    %303 = math.exp %302 : vector<48x48xf32>
    %cst_128 = arith.constant dense<0.000000e+00> : vector<48xf32>
    %304 = vector.multi_reduction <add>, %303, %cst_128 [1] : vector<48x48xf32> to vector<48xf32>
    %305 = vector.shape_cast %304 : vector<48xf32> to vector<48x1xf32>
    %306 = tpu.reciprocal %305 {approx = true} : vector<48x1xf32> -> vector<48x1xf32>
    %307 = vector.broadcast %306 : vector<48x1xf32> to vector<48x48xf32>
    %308 = arith.mulf %303, %307 : vector<48x48xf32>
    %309 = arith.truncf %308 : vector<48x48xf32> to vector<48x48xbf16>
    %cst_129 = arith.constant dense<0.000000e+00> : vector<48x8xf32>
    %310 = tpu.matmul %309, %296, %cst_129 {dimension_numbers = #tpu.dot_dimension_numbers<[1], [0], [0], [1], [0, 0, 1, 1], [], []>} : vector<48x48xbf16>, vector<48x8xbf16>, vector<48x8xf32> -> vector<48x8xf32>
    %c0_130 = arith.constant 0 : index
    %c24_131 = arith.constant 24 : index
    %311 = vector.load %arg20[%c0_130, %c24_131] : memref<48x32xf32, #tpu.memory_space<vmem>>, vector<48x8xf32>
    tpu.vector_store %arg20[%c0_130, %c24_131], %310 {strides = array<i32>} : memref<48x32xf32, #tpu.memory_space<vmem>>, vector<48x8xf32>,
    %c0_132 = arith.constant 0 : index
    %c0_133 = arith.constant 0 : index
    %312 = vector.load %arg20[%c0_132, %c0_133] : memref<48x32xf32, #tpu.memory_space<vmem>>, vector<48x32xf32>
    %313 = arith.truncf %312 : vector<48x32xf32> to vector<48x32xbf16>
    %c1_134 = arith.constant 1 : index
    %c0_135 = arith.constant 0 : index
    %c0_136 = arith.constant 0 : index
    %314 = vector.load %arg7[%c1_134, %c0_135, %c0_136] : memref<2x32x32xbf16, #tpu.memory_space<vmem>>, vector<1x32x32xbf16>
    %315 = vector.shape_cast %314 : vector<1x32x32xbf16> to vector<32x32xbf16>
    %cst_137 = arith.constant dense<0.000000e+00> : vector<48x32xf32>
    %316 = tpu.matmul %313, %315, %cst_137 {dimension_numbers = #tpu.dot_dimension_numbers<[1], [0], [0], [1], [0, 0, 1, 1], [], []>} : vector<48x32xbf16>, vector<32x32xbf16>, vector<48x32xf32> -> vector<48x32xf32>
    %c1_138 = arith.constant 1 : index
    %c0_139 = arith.constant 0 : index
    %c0_140 = arith.constant 0 : index
    %317 = vector.load %arg8[%c1_138, %c0_139, %c0_140] : memref<2x1x32xf32, #tpu.memory_space<vmem>>, vector<1x1x32xf32>
    %318 = vector.shape_cast %317 : vector<1x1x32xf32> to vector<1x32xf32>
    %319 = vector.broadcast %318 : vector<1x32xf32> to vector<48x32xf32>
    %320 = arith.addf %316, %319 : vector<48x32xf32>
    %c1_141 = arith.constant 1 : index
    %c0_142 = arith.constant 0 : index
    %c0_143 = arith.constant 0 : index
    %321 = vector.load %arg9[%c1_141, %c0_142, %c0_143] : memref<2x1x32xf32, #tpu.memory_space<vmem>>, vector<1x1x32xf32>
    %322 = vector.shape_cast %321 : vector<1x1x32xf32> to vector<1x32xf32>
    %323 = vector.broadcast %322 : vector<1x32xf32> to vector<48x32xf32>
    %324 = arith.mulf %323, %320 : vector<48x32xf32>
    %325 = arith.addf %206, %324 : vector<48x32xf32>
    %c1_144 = arith.constant 1 : index
    %c0_145 = arith.constant 0 : index
    %c0_146 = arith.constant 0 : index
    %326 = vector.load %arg10[%c1_144, %c0_145, %c0_146] : memref<2x1x32xf32, #tpu.memory_space<vmem>>, vector<1x1x32xf32>
    %327 = vector.shape_cast %326 : vector<1x1x32xf32> to vector<1x32xf32>
    %c1_147 = arith.constant 1 : index
    %c0_148 = arith.constant 0 : index
    %c0_149 = arith.constant 0 : index
    %328 = vector.load %arg11[%c1_147, %c0_148, %c0_149] : memref<2x1x32xf32, #tpu.memory_space<vmem>>, vector<1x1x32xf32>
    %329 = vector.shape_cast %328 : vector<1x1x32xf32> to vector<1x32xf32>
    %cst_150 = arith.constant dense<0.000000e+00> : vector<48xf32>
    %330 = vector.multi_reduction <add>, %325, %cst_150 [1] : vector<48x32xf32> to vector<48xf32>
    %331 = vector.shape_cast %330 : vector<48xf32> to vector<48x1xf32>
    %cst_151 = arith.constant 3.200000e+01 : f32
    %332 = vector.broadcast %cst_151 : f32 to vector<48x1xf32>
    %333 = arith.divf %331, %332 : vector<48x1xf32>
    %334 = vector.broadcast %333 : vector<48x1xf32> to vector<48x32xf32>
    %335 = arith.subf %325, %334 : vector<48x32xf32>
    %336 = arith.mulf %335, %335 : vector<48x32xf32>
    %cst_152 = arith.constant dense<0.000000e+00> : vector<48xf32>
    %337 = vector.multi_reduction <add>, %336, %cst_152 [1] : vector<48x32xf32> to vector<48xf32>
    %338 = vector.shape_cast %337 : vector<48xf32> to vector<48x1xf32>
    %cst_153 = arith.constant 3.200000e+01 : f32
    %339 = vector.broadcast %cst_153 : f32 to vector<48x1xf32>
    %340 = arith.divf %338, %339 : vector<48x1xf32>
    %cst_154 = arith.constant 9.99999997E-7 : f32
    %341 = vector.broadcast %cst_154 : f32 to vector<48x1xf32>
    %342 = arith.addf %340, %341 : vector<48x1xf32>
    %343 = math.rsqrt %342 : vector<48x1xf32>
    %344 = vector.broadcast %343 : vector<48x1xf32> to vector<48x32xf32>
    %345 = arith.mulf %335, %344 : vector<48x32xf32>
    %346 = vector.broadcast %327 : vector<1x32xf32> to vector<48x32xf32>
    %347 = arith.mulf %345, %346 : vector<48x32xf32>
    %348 = vector.broadcast %329 : vector<1x32xf32> to vector<48x32xf32>
    %349 = arith.addf %347, %348 : vector<48x32xf32>
    %350 = arith.truncf %349 : vector<48x32xf32> to vector<48x32xbf16>
    %c1_155 = arith.constant 1 : index
    %c0_156 = arith.constant 0 : index
    %c0_157 = arith.constant 0 : index
    %351 = vector.load %arg12[%c1_155, %c0_156, %c0_157] : memref<2x32x128xbf16, #tpu.memory_space<vmem>>, vector<1x32x128xbf16>
    %352 = vector.shape_cast %351 : vector<1x32x128xbf16> to vector<32x128xbf16>
    %cst_158 = arith.constant dense<0.000000e+00> : vector<48x128xf32>
    %353 = tpu.matmul %350, %352, %cst_158 {dimension_numbers = #tpu.dot_dimension_numbers<[1], [0], [0], [1], [0, 0, 1, 1], [], []>} : vector<48x32xbf16>, vector<32x128xbf16>, vector<48x128xf32> -> vector<48x128xf32>
    %c1_159 = arith.constant 1 : index
    %c0_160 = arith.constant 0 : index
    %c0_161 = arith.constant 0 : index
    %354 = vector.load %arg13[%c1_159, %c0_160, %c0_161] : memref<2x1x128xf32, #tpu.memory_space<vmem>>, vector<1x1x128xf32>
    %355 = vector.shape_cast %354 : vector<1x1x128xf32> to vector<1x128xf32>
    %356 = vector.broadcast %355 : vector<1x128xf32> to vector<48x128xf32>
    %357 = arith.addf %353, %356 : vector<48x128xf32>
    %358 = vector.extract_strided_slice %357 {offsets = [0, 0], sizes = [48, 64], strides = [1, 1]} : vector<48x128xf32> to vector<48x64xf32>
    %359 = arith.negf %358 : vector<48x64xf32>
    %360 = math.exp %359 : vector<48x64xf32>
    %cst_162 = arith.constant 1.000000e+00 : f32
    %361 = vector.broadcast %cst_162 : f32 to vector<48x64xf32>
    %362 = arith.addf %361, %360 : vector<48x64xf32>
    %363 = arith.divf %361, %362 : vector<48x64xf32>
    %364 = arith.mulf %358, %363 : vector<48x64xf32>
    %365 = vector.extract_strided_slice %357 {offsets = [0, 64], sizes = [48, 64], strides = [1, 1]} : vector<48x128xf32> to vector<48x64xf32>
    %366 = arith.mulf %364, %365 : vector<48x64xf32>
    %367 = arith.truncf %366 : vector<48x64xf32> to vector<48x64xbf16>
    %c1_163 = arith.constant 1 : index
    %c0_164 = arith.constant 0 : index
    %c0_165 = arith.constant 0 : index
    %368 = vector.load %arg14[%c1_163, %c0_164, %c0_165] : memref<2x64x32xbf16, #tpu.memory_space<vmem>>, vector<1x64x32xbf16>
    %369 = vector.shape_cast %368 : vector<1x64x32xbf16> to vector<64x32xbf16>
    %cst_166 = arith.constant dense<0.000000e+00> : vector<48x32xf32>
    %370 = tpu.matmul %367, %369, %cst_166 {dimension_numbers = #tpu.dot_dimension_numbers<[1], [0], [0], [1], [0, 0, 1, 1], [], []>} : vector<48x64xbf16>, vector<64x32xbf16>, vector<48x32xf32> -> vector<48x32xf32>
    %c1_167 = arith.constant 1 : index
    %c0_168 = arith.constant 0 : index
    %c0_169 = arith.constant 0 : index
    %371 = vector.load %arg15[%c1_167, %c0_168, %c0_169] : memref<2x1x32xf32, #tpu.memory_space<vmem>>, vector<1x1x32xf32>
    %372 = vector.shape_cast %371 : vector<1x1x32xf32> to vector<1x32xf32>
    %373 = vector.broadcast %372 : vector<1x32xf32> to vector<48x32xf32>
    %374 = arith.addf %370, %373 : vector<48x32xf32>
    %c1_170 = arith.constant 1 : index
    %c0_171 = arith.constant 0 : index
    %c0_172 = arith.constant 0 : index
    %375 = vector.load %arg16[%c1_170, %c0_171, %c0_172] : memref<2x1x32xf32, #tpu.memory_space<vmem>>, vector<1x1x32xf32>
    %376 = vector.shape_cast %375 : vector<1x1x32xf32> to vector<1x32xf32>
    %377 = vector.broadcast %376 : vector<1x32xf32> to vector<48x32xf32>
    %378 = arith.mulf %377, %374 : vector<48x32xf32>
    %379 = arith.addf %325, %378 : vector<48x32xf32>
    %c0_173 = arith.constant 0 : index
    %c0_174 = arith.constant 0 : index
    %380 = vector.load %arg17[%c0_173, %c0_174] : memref<1x32xf32, #tpu.memory_space<vmem>>, vector<1x32xf32>
    %c0_175 = arith.constant 0 : index
    %c0_176 = arith.constant 0 : index
    %381 = vector.load %arg18[%c0_175, %c0_176] : memref<1x32xf32, #tpu.memory_space<vmem>>, vector<1x32xf32>
    %cst_177 = arith.constant dense<0.000000e+00> : vector<48xf32>
    %382 = vector.multi_reduction <add>, %379, %cst_177 [1] : vector<48x32xf32> to vector<48xf32>
    %383 = vector.shape_cast %382 : vector<48xf32> to vector<48x1xf32>
    %cst_178 = arith.constant 3.200000e+01 : f32
    %384 = vector.broadcast %cst_178 : f32 to vector<48x1xf32>
    %385 = arith.divf %383, %384 : vector<48x1xf32>
    %386 = vector.broadcast %385 : vector<48x1xf32> to vector<48x32xf32>
    %387 = arith.subf %379, %386 : vector<48x32xf32>
    %388 = arith.mulf %387, %387 : vector<48x32xf32>
    %cst_179 = arith.constant dense<0.000000e+00> : vector<48xf32>
    %389 = vector.multi_reduction <add>, %388, %cst_179 [1] : vector<48x32xf32> to vector<48xf32>
    %390 = vector.shape_cast %389 : vector<48xf32> to vector<48x1xf32>
    %cst_180 = arith.constant 3.200000e+01 : f32
    %391 = vector.broadcast %cst_180 : f32 to vector<48x1xf32>
    %392 = arith.divf %390, %391 : vector<48x1xf32>
    %cst_181 = arith.constant 9.99999997E-7 : f32
    %393 = vector.broadcast %cst_181 : f32 to vector<48x1xf32>
    %394 = arith.addf %392, %393 : vector<48x1xf32>
    %395 = math.rsqrt %394 : vector<48x1xf32>
    %396 = vector.broadcast %395 : vector<48x1xf32> to vector<48x32xf32>
    %397 = arith.mulf %387, %396 : vector<48x32xf32>
    %398 = vector.broadcast %380 : vector<1x32xf32> to vector<48x32xf32>
    %399 = arith.mulf %397, %398 : vector<48x32xf32>
    %400 = vector.broadcast %381 : vector<1x32xf32> to vector<48x32xf32>
    %401 = arith.addf %399, %400 : vector<48x32xf32>
    %c0_182 = arith.constant 0 : index
    %c0_183 = arith.constant 0 : index
    %402 = vector.load %arg19[%c0_182, %c0_183] : memref<48x32xf32, #tpu.memory_space<vmem>>, vector<48x32xf32>
    tpu.vector_store %arg19[%c0_182, %c0_183], %401 {strides = array<i32>} : memref<48x32xf32, #tpu.memory_space<vmem>>, vector<48x32xf32>,
    return
  }
}

</mosaic_0001>

<llo_original>
// kernel: forward.1
$region0: #{forward.1}
  #allocation0 [shape = 'u32[]', space=smem, size = 0x4, offset = 0x4, fixed_abs, tag = 'smem constant byte address 0x4 - core index']
  #allocation1 [shape = 'u32[144,128]{1,0:T(1,128)}', space=vmem, size = 0x12000, scoped, tag = 'internal scratch']
  #allocation2 [shape = 'f32[48,32]{1,0:T(8,128)}', space=vmem, size = 0x6000, scoped, tag = 'scratch operand']
  %s0 = inlined_call_operand.vmem [shape: f32[48,48], index: 0, kind: input, shape index: {}]
  %s1 = inlined_call_operand.vmem [shape: bf16[48,32], index: 1, kind: input, shape index: {}]
  %s2 = inlined_call_operand.vmem [shape: f32[48,32], index: 2, kind: input, shape index: {}]
  %s3 = inlined_call_operand.vmem [shape: f32[2,1,32], index: 3, kind: input, shape index: {}]
  %s4 = inlined_call_operand.vmem [shape: f32[2,1,32], index: 4, kind: input, shape index: {}]
  %s5 = inlined_call_operand.vmem [shape: bf16[2,32,96], index: 5, kind: input, shape index: {}]
  %s6 = inlined_call_operand.vmem [shape: f32[2,1,96], index: 6, kind: input, shape index: {}]
  %s7 = inlined_call_operand.vmem [shape: bf16[2,32,32], index: 7, kind: input, shape index: {}]
  %s8 = inlined_call_operand.vmem [shape: f32[2,1,32], index: 8, kind: input, shape index: {}]
  %s9 = inlined_call_operand.vmem [shape: f32[2,1,32], index: 9, kind: input, shape index: {}]
  %s10 = inlined_call_operand.vmem [shape: f32[2,1,32], index: 10, kind: input, shape index: {}]
  %s11 = inlined_call_operand.vmem [shape: f32[2,1,32], index: 11, kind: input, shape index: {}]
  %s12 = inlined_call_operand.vmem [shape: bf16[2,32,128], index: 12, kind: input, shape index: {}]
  %s13 = inlined_call_operand.vmem [shape: f32[2,1,128], index: 13, kind: input, shape index: {}]
  %s14 = inlined_call_operand.vmem [shape: bf16[2,64,32], index: 14, kind: input, shape index: {}]
  %s15 = inlined_call_operand.vmem [shape: f32[2,1,32], index: 15, kind: input, shape index: {}]
  %s16 = inlined_call_operand.vmem [shape: f32[2,1,32], index: 16, kind: input, shape index: {}]
  %s17 = inlined_call_operand.vmem [shape: f32[1,32], index: 17, kind: input, shape index: {}]
  %s18 = inlined_call_operand.vmem [shape: f32[1,32], index: 18, kind: input, shape index: {}]
  %s19 = inlined_call_operand.vmem [shape: f32[48,32], index: 19, kind: output, shape index: {}]
  %s20 = sld [smem:[#allocation0]]
  $region86: #{forward.1} parent=0
    _
  %s22 = ssub.s32 1, %s20
  %s23 = scalar_select 0, %s22, %s20
  // Predicated region
  $region2: #{forward.1} parent=0 // pred_check
    _
  $region3: #{forward.1} parent=0 // pred_check_branch
    %25 = sbr.rel (0) target = $region5
  $region4: #{forward.1} parent=0 // pred_region
    _
  $region5: #{forward.1} parent=0 // pred_fallthru
    _
  // Predicated region
  $region6: #{forward.1} parent=0 // pred_check
    _
  $region7: #{forward.1} parent=0 // pred_check_branch
    %27 = sbr.rel (0) target = $region9
  $region8: #{forward.1} parent=0 // pred_region
    _
  $region9: #{forward.1} parent=0 // pred_fallthru
    _
  // Predicated region
  $region10: #{forward.1} parent=0 // pred_check
    _
  $region11: #{forward.1} parent=0 // pred_check_branch
    %29 = sbr.rel (0) target = $region13
  $region12: #{forward.1} parent=0 // pred_region
    _
  $region13: #{forward.1} parent=0 // pred_fallthru
    _
  // Predicated region
  $region14: #{forward.1} parent=0 // pred_check
    _
  $region15: #{forward.1} parent=0 // pred_check_branch
    %31 = sbr.rel (0) target = $region17
  $region16: #{forward.1} parent=0 // pred_region
    _
  $region17: #{forward.1} parent=0 // pred_fallthru
    _
  // Predicated region
  $region18: #{forward.1} parent=0 // pred_check
    _
  $region19: #{forward.1} parent=0 // pred_check_branch
    %33 = sbr.rel (0) target = $region21
  $region20: #{forward.1} parent=0 // pred_region
    _
  $region21: #{forward.1} parent=0 // pred_fallthru
    _
  // Predicated region
  $region22: #{forward.1} parent=0 // pred_check
    _
  $region23: #{forward.1} parent=0 // pred_check_branch
    %35 = sbr.rel (0) target = $region25
  $region24: #{forward.1} parent=0 // pred_region
    _
  $region25: #{forward.1} parent=0 // pred_fallthru
    _
  // Predicated region
  $region26: #{forward.1} parent=0 // pred_check
    _
  $region27: #{forward.1} parent=0 // pred_check_branch
    %37 = sbr.rel (0) target = $region29
  $region28: #{forward.1} parent=0 // pred_region
    _
  $region29: #{forward.1} parent=0 // pred_fallthru
    _
  // Predicated region
  $region30: #{forward.1} parent=0 // pred_check
    _
  $region31: #{forward.1} parent=0 // pred_check_branch
    %39 = sbr.rel (0) target = $region33
  $region32: #{forward.1} parent=0 // pred_region
    _
  $region33: #{forward.1} parent=0 // pred_fallthru
    _
  // Predicated region
  $region34: #{forward.1} parent=0 // pred_check
    _
  $region35: #{forward.1} parent=0 // pred_check_branch
    %41 = sbr.rel (0) target = $region37
  $region36: #{forward.1} parent=0 // pred_region
    _
  $region37: #{forward.1} parent=0 // pred_fallthru
    _
  // Predicated region
  $region38: #{forward.1} parent=0 // pred_check
    _
  $region39: #{forward.1} parent=0 // pred_check_branch
    %43 = sbr.rel (0) target = $region41
  $region40: #{forward.1} parent=0 // pred_region
    _
  $region41: #{forward.1} parent=0 // pred_fallthru
    _
  // Predicated region
  $region42: #{forward.1} parent=0 // pred_check
    _
  $region43: #{forward.1} parent=0 // pred_check_branch
    %45 = sbr.rel (0) target = $region45
  $region44: #{forward.1} parent=0 // pred_region
    _
  $region45: #{forward.1} parent=0 // pred_fallthru
    _
  // Predicated region
  $region46: #{forward.1} parent=0 // pred_check
    _
  $region47: #{forward.1} parent=0 // pred_check_branch
    %47 = sbr.rel (0) target = $region49
  $region48: #{forward.1} parent=0 // pred_region
    _
  $region49: #{forward.1} parent=0 // pred_fallthru
    _
  // Predicated region
  $region50: #{forward.1} parent=0 // pred_check
    _
  $region51: #{forward.1} parent=0 // pred_check_branch
    %49 = sbr.rel (0) target = $region53
  $region52: #{forward.1} parent=0 // pred_region
    _
  $region53: #{forward.1} parent=0 // pred_fallthru
    _
  // Predicated region
  $region54: #{forward.1} parent=0 // pred_check
    _
  $region55: #{forward.1} parent=0 // pred_check_branch
    %51 = sbr.rel (0) target = $region57
  $region56: #{forward.1} parent=0 // pred_region
    _
  $region57: #{forward.1} parent=0 // pred_fallthru
    _
  // Predicated region
  $region58: #{forward.1} parent=0 // pred_check
    _
  $region59: #{forward.1} parent=0 // pred_check_branch
    %53 = sbr.rel (0) target = $region61
  $region60: #{forward.1} parent=0 // pred_region
    _
  $region61: #{forward.1} parent=0 // pred_fallthru
    _
  // Predicated region
  $region62: #{forward.1} parent=0 // pred_check
    _
  $region63: #{forward.1} parent=0 // pred_check_branch
    %55 = sbr.rel (0) target = $region65
  $region64: #{forward.1} parent=0 // pred_region
    _
  $region65: #{forward.1} parent=0 // pred_fallthru
    _
  // Predicated region
  $region66: #{forward.1} parent=0 // pred_check
    _
  $region67: #{forward.1} parent=0 // pred_check_branch
    %57 = sbr.rel (0) target = $region69
  $region68: #{forward.1} parent=0 // pred_region
    _
  $region69: #{forward.1} parent=0 // pred_fallthru
    _
  // Predicated region
  $region70: #{forward.1} parent=0 // pred_check
    _
  $region71: #{forward.1} parent=0 // pred_check_branch
    %59 = sbr.rel (0) target = $region73
  $region72: #{forward.1} parent=0 // pred_region
    _
  $region73: #{forward.1} parent=0 // pred_fallthru
    _
  // Predicated region
  $region74: #{forward.1} parent=0 // pred_check
    _
  $region75: #{forward.1} parent=0 // pred_check_branch
    %61 = sbr.rel (0) target = $region77
  $region76: #{forward.1} parent=0 // pred_region
    _
  $region77: #{forward.1} parent=0 // pred_fallthru
    _
  %v63 = vld [vmem:[%s0] sm:$0xff]
  %v64 = vld [vmem:[%s0 + $0x8] sm:$0xff]
  %v65 = vld [vmem:[%s0 + $0x10] sm:$0xff]
  %v66 = vld [vmem:[%s0 + $0x18] sm:$0xff]
  %v67 = vld [vmem:[%s0 + $0x20] sm:$0xff]
  %v68 = vld [vmem:[%s0 + $0x28] sm:$0xff]
  %v69 = vpack.c.bf16 %v64, %v63
  %v70 = vpack.c.bf16 %v66, %v65
  %v71 = vpack.c.bf16 %v68, %v67
  %v72 = vld [vmem:[%s1] sm:$0xf]
  %v73 = vld [vmem:[%s1 + $0x4] sm:$0xf]
  %v74 = vld [vmem:[%s1 + $0x8] sm:$0xf]
  %v75 = vld [vmem:[%s1 + $0xc] sm:$0xf]
  %v76 = vld [vmem:[%s1 + $0x10] sm:$0xf]
  %v77 = vld [vmem:[%s1 + $0x14] sm:$0xf]
  %v78 = vld [vmem:[%s2] sm:$0xff]
  %v79 = vld [vmem:[%s2 + $0x8] sm:$0xff]
  %v80 = vld [vmem:[%s2 + $0x10] sm:$0xff]
  %v81 = vld [vmem:[%s2 + $0x18] sm:$0xff]
  %v82 = vld [vmem:[%s2 + $0x20] sm:$0xff]
  %v83 = vld [vmem:[%s2 + $0x28] sm:$0xff]
  %v90 = vunpack.c.l.b16 %v72
  %v91 = vunpack.c.l.b16 %v73
  %v92 = vunpack.c.l.b16 %v74
  %v93 = vunpack.c.l.b16 %v75
  %v94 = vunpack.c.l.b16 %v76
  %v95 = vunpack.c.l.b16 %v77
  %v96 = vpack.c.b16 %v91, %v90
  %v97 = vpack.c.b16 %v93, %v92
  %v98 = vpack.c.b16 %v95, %v94
  %vm102 = vcmask 392192
  %v104 = vsel %vm102, %v69, 0
  %v107 = vsel %vm102, %v70, 0
  %v110 = vsel %vm102, %v71, 0
  %112 = vmatprep.subr.bf16.mxu0 0
  %113 = vmatpush1.bf16.msra.mxu0 0
  %114 = vmatprep.subr.bf16.mxu0 0
  %115 = vmatpush1.bf16.msra.mxu0 0
  %116 = vmatprep.subr.bf16.mxu0 0
  %117 = vmatpush1.bf16.msra.mxu0 0
  %118 = vmatprep.subr.bf16.mxu0 0
  %119 = vmatpush1.bf16.msra.mxu0 0
  %120 = vmatprep.subr.bf16.mxu0 0
  %121 = vmatpush1.bf16.msra.mxu0 0
  %122 = vmatprep.subr.bf16.mxu0 0
  %123 = vmatpush1.bf16.msra.mxu0 %v98
  %124 = vmatprep.subr.bf16.mxu0 0
  %125 = vmatpush1.bf16.msra.mxu0 %v97
  %126 = vmatprep.subr.bf16.mxu0 0
  %127 = vmatpush1.bf16.msra.mxu0 %v96
  %128 = vmatprep.subr.bf16.mxu0 0
  %129 = vmatpush2.bf16.msra.mxu0 0
  %130 = vmatprep.subr.bf16.mxu0 0
  %131 = vmatpush2.bf16.msra.mxu0 0
  %132 = vmatprep.subr.bf16.mxu0 0
  %133 = vmatpush2.bf16.msra.mxu0 0
  %134 = vmatprep.subr.bf16.mxu0 0
  %135 = vmatpush2.bf16.msra.mxu0 0
  %136 = vmatprep.subr.bf16.mxu0 0
  %137 = vmatpush2.bf16.msra.mxu0 0
  %138 = vmatprep.subr.bf16.mxu0 0
  %139 = vmatpush2.bf16.msra.mxu0 0
  %140 = vmatprep.subr.bf16.mxu0 0
  %141 = vmatpush2.bf16.msra.mxu0 0
  %142 = vmatprep.subr.bf16.mxu0 0
  %143 = vmatpush2.bf16.msra.mxu0 0
  %144 = vmatprep.mubr.bf16.mxu0 0
  %145 = vmatmul.mubr.bf16.gmra.mxu0 %v104
  %v146 = vpop.f32.mrf.mxu0
  %v147 = vadd.f32 %v78, %v146
  %v148 = vpop.f32.mrf.mxu0
  %v149 = vpop.f32.mrf.mxu0
  %v150 = vadd.f32 %v79, %v149
  %v151 = vpop.f32.mrf.mxu0
  %152 = vmatprep.mubr.bf16.mxu0 0
  %153 = vmatmul.mubr.bf16.gmra.mxu0 %v107
  %v154 = vpop.f32.mrf.mxu0
  %v155 = vadd.f32 %v80, %v154
  %v156 = vpop.f32.mrf.mxu0
  %v157 = vpop.f32.mrf.mxu0
  %v158 = vadd.f32 %v81, %v157
  %v159 = vpop.f32.mrf.mxu0
  %160 = vmatprep.mubr.bf16.mxu0 0
  %161 = vmatmul.mubr.bf16.gmra.mxu0 %v110
  %v162 = vpop.f32.mrf.mxu0
  %v163 = vadd.f32 %v82, %v162
  %v164 = vpop.f32.mrf.mxu0
  %v165 = vpop.f32.mrf.mxu0
  %v166 = vadd.f32 %v83, %v165
  %v167 = vpop.f32.mrf.mxu0
  %168 = vdwg.mxu0
  %v169 = vlaneseq
  %v170 = vshrl.u32 %v169, 7
  %v171 = vadd.s32 %v170, 8
  %v172 = vadd.s32 %v170, 16
  %v173 = vadd.s32 %v170, 24
  %v174 = vadd.s32 %v170, 32
  %v175 = vadd.s32 %v170, 40
  %v176 = vlaneseq
  %v177 = vand.u32 %v176, 127
  %vm178 = vcmp.ge.s32.totalorder %v177, 7
  %vm179 = vcmp.lt.s32.totalorder %v177, 24
  %vm180 = vmand %vm178, %vm179
  %vm181 = vcmp.ge.s32.totalorder %v177, 31
  %vm182 = vcmp.lt.s32.totalorder %v177, 48
  %vm183 = vmand %vm181, %vm182
  %vm184 = vmor %vm180, %vm183
  %vm185 = vcmp.lt.s32.totalorder %v170, 24
  %vm186 = vcmp.lt.s32.totalorder %v171, 24
  %vm187 = vcmp.lt.s32.totalorder %v172, 24
  %vm188 = vcmp.lt.s32.totalorder %v173, 24
  %vm189 = vcmp.lt.s32.totalorder %v174, 24
  %vm190 = vcmp.lt.s32.totalorder %v175, 24
  %vm191 = vmand %vm185, %vm179
  %vm192 = vmand %vm186, %vm179
  %vm193 = vmand %vm187, %vm179
  %vm194 = vmand %vm188, %vm179
  %vm195 = vmand %vm189, %vm179
  %vm196 = vmand %vm190, %vm179
  %vm197 = vmxor %vm185, 1
  %vm198 = vmxor %vm186, 1
  %vm199 = vmxor %vm187, 1
  %vm200 = vmxor %vm188, 1
  %vm201 = vmxor %vm189, 1
  %vm202 = vmxor %vm190, 1
  %vm203 = vmxor %vm179, 1
  %vm204 = vmand %vm197, %vm203
  %vm205 = vmand %vm198, %vm203
  %vm206 = vmand %vm199, %vm203
  %vm207 = vmand %vm200, %vm203
  %vm208 = vmand %vm201, %vm203
  %vm209 = vmand %vm202, %vm203
  %vm210 = vmor %vm191, %vm204
  %vm211 = vmor %vm192, %vm205
  %vm212 = vmor %vm193, %vm206
  %vm213 = vmor %vm194, %vm207
  %vm214 = vmor %vm195, %vm208
  %vm215 = vmor %vm196, %vm209
  %vm216 = vmand %vm184, %vm210
  %vm217 = vmand %vm184, %vm211
  %vm218 = vmand %vm184, %vm212
  %vm219 = vmand %vm184, %vm213
  %vm220 = vmand %vm184, %vm214
  %vm221 = vmand %vm184, %vm215
  %v222 = vsel %vm216, 0.0, -1e+30
  %v223 = vsel %vm217, 0.0, -1e+30
  %v224 = vsel %vm218, 0.0, -1e+30
  %v225 = vsel %vm219, 0.0, -1e+30
  %v226 = vsel %vm220, 0.0, -1e+30
  %v227 = vsel %vm221, 0.0, -1e+30
  %v228 = vld [vmem:[%s3] sm:$0x1]
  %v229 = vld [vmem:[%s4] sm:$0x1]
  %vm230 = vcmask 261120
  %v231 = vsel %vm230, %v147, 0.0
  %232 = vadd.xlane.f32.xlu0 %v231
  %v233 = vpop.xlane.xlu0 %232
  %v234 = vsel %vm230, %v150, 0.0
  %235 = vadd.xlane.f32.xlu0 %v234
  %v236 = vpop.xlane.xlu0 %235
  %v237 = vsel %vm230, %v155, 0.0
  %238 = vadd.xlane.f32.xlu0 %v237
  %v239 = vpop.xlane.xlu0 %238
  %v240 = vsel %vm230, %v158, 0.0
  %241 = vadd.xlane.f32.xlu0 %v240
  %v242 = vpop.xlane.xlu0 %241
  %v243 = vsel %vm230, %v163, 0.0
  %244 = vadd.xlane.f32.xlu0 %v243
  %v245 = vpop.xlane.xlu0 %244
  %v246 = vsel %vm230, %v166, 0.0
  %247 = vadd.xlane.f32.xlu0 %v246
  %v248 = vpop.xlane.xlu0 %247
  %v249 = vrcp.pop 32.0
  %v250 = vmul.f32 %v233, %v249
  %v251 = vmul.f32 %v236, %v249
  %v252 = vmul.f32 %v239, %v249
  %v253 = vmul.f32 %v242, %v249
  %v254 = vmul.f32 %v245, %v249
  %v255 = vmul.f32 %v248, %v249
  %v256 = vsub.f32 %v147, %v250
  %v257 = vsub.f32 %v150, %v251
  %v258 = vsub.f32 %v155, %v252
  %v259 = vsub.f32 %v158, %v253
  %v260 = vsub.f32 %v163, %v254
  %v261 = vsub.f32 %v166, %v255
  %v262 = vmul.f32 %v256, %v256
  %v263 = vmul.f32 %v257, %v257
  %v264 = vmul.f32 %v258, %v258
  %v265 = vmul.f32 %v259, %v259
  %v266 = vmul.f32 %v260, %v260
  %v267 = vmul.f32 %v261, %v261
  %v268 = vsel %vm230, %v262, 0.0
  %269 = vadd.xlane.f32.xlu0 %v268
  %v270 = vpop.xlane.xlu0 %269
  %v271 = vsel %vm230, %v263, 0.0
  %272 = vadd.xlane.f32.xlu0 %v271
  %v273 = vpop.xlane.xlu0 %272
  %v274 = vsel %vm230, %v264, 0.0
  %275 = vadd.xlane.f32.xlu0 %v274
  %v276 = vpop.xlane.xlu0 %275
  %v277 = vsel %vm230, %v265, 0.0
  %278 = vadd.xlane.f32.xlu0 %v277
  %v279 = vpop.xlane.xlu0 %278
  %v280 = vsel %vm230, %v266, 0.0
  %281 = vadd.xlane.f32.xlu0 %v280
  %v282 = vpop.xlane.xlu0 %281
  %v283 = vsel %vm230, %v267, 0.0
  %284 = vadd.xlane.f32.xlu0 %v283
  %v285 = vpop.xlane.xlu0 %284
  %v286 = vmul.f32 %v270, %v249
  %v287 = vmul.f32 %v273, %v249
  %v288 = vmul.f32 %v276, %v249
  %v289 = vmul.f32 %v279, %v249
  %v290 = vmul.f32 %v282, %v249
  %v291 = vmul.f32 %v285, %v249
  %v292 = vadd.f32 %v286, 1e-06
  %v293 = vadd.f32 %v287, 1e-06
  %v294 = vadd.f32 %v288, 1e-06
  %v295 = vadd.f32 %v289, 1e-06
  %v296 = vadd.f32 %v290, 1e-06
  %v297 = vadd.f32 %v291, 1e-06
  %v298 = vrsqrt.pop %v292
  %v299 = vrsqrt.pop %v293
  %v300 = vrsqrt.pop %v294
  %v301 = vrsqrt.pop %v295
  %v302 = vrsqrt.pop %v296
  %v303 = vrsqrt.pop %v297
  %v304 = vmul.f32 %v256, %v298
  %v305 = vmul.f32 %v257, %v299
  %v306 = vmul.f32 %v258, %v300
  %v307 = vmul.f32 %v259, %v301
  %v308 = vmul.f32 %v260, %v302
  %v309 = vmul.f32 %v261, %v303
  %v311 = vlaneseq
  %v312 = vshrl.u32 %v311, 7
  %v313 = vsub.s32 0, %v312
  %v314 = vrot.slane %v228, %v313
  %v316 = vmul.f32 %v304, %v314
  %v317 = vmul.f32 %v305, %v314
  %v318 = vmul.f32 %v306, %v314
  %v319 = vmul.f32 %v307, %v314
  %v320 = vmul.f32 %v308, %v314
  %v321 = vmul.f32 %v309, %v314
  %v323 = vlaneseq
  %v324 = vshrl.u32 %v323, 7
  %v325 = vsub.s32 0, %v324
  %v326 = vrot.slane %v229, %v325
  %v328 = vadd.f32 %v316, %v326
  %v329 = vadd.f32 %v317, %v326
  %v330 = vadd.f32 %v318, %v326
  %v331 = vadd.f32 %v319, %v326
  %v332 = vadd.f32 %v320, %v326
  %v333 = vadd.f32 %v321, %v326
  %v334 = vpack.c.bf16 %v329, %v328
  %v335 = vpack.c.bf16 %v331, %v330
  %v336 = vpack.c.bf16 %v333, %v332
  %v337 = vld [vmem:[%s5] sm:$0xf]
  %v338 = vld [vmem:[%s5 + $0x4] sm:$0xf]
  %v339 = vld [vmem:[%s5 + $0x8] sm:$0xf]
  %v340 = vld [vmem:[%s5 + $0xc] sm:$0xf]
  %v341 = vld [vmem:[%s6] sm:$0x1]
  %v343 = vlaneseq
  %v344 = vshrl.u32 %v343, 7
  %v345 = vsub.s32 0, %v344
  %v346 = vrot.slane %v341, %v345
  %v352 = vunpack.c.l.b16 %v337
  %v353 = vunpack.c.l.b16 %v338
  %v354 = vunpack.c.l.b16 %v339
  %v355 = vunpack.c.l.b16 %v340
  %v356 = vpack.c.b16 %v353, %v352
  %v357 = vpack.c.b16 %v355, %v354
  %v361 = vsel %vm230, %v334, 0
  %v364 = vsel %vm230, %v335, 0
  %v367 = vsel %vm230, %v336, 0
  %369 = vmatprep.subr.bf16.mxu0 0
  %370 = vmatpush1.bf16.msra.mxu0 0
  %371 = vmatprep.subr.bf16.mxu0 0
  %372 = vmatpush1.bf16.msra.mxu0 0
  %373 = vmatprep.subr.bf16.mxu0 0
  %374 = vmatpush1.bf16.msra.mxu0 0
  %375 = vmatprep.subr.bf16.mxu0 0
  %376 = vmatpush1.bf16.msra.mxu0 0
  %377 = vmatprep.subr.bf16.mxu0 0
  %378 = vmatpush1.bf16.msra.mxu0 0
  %379 = vmatprep.subr.bf16.mxu0 0
  %380 = vmatpush1.bf16.msra.mxu0 0
  %381 = vmatprep.subr.bf16.mxu0 0
  %382 = vmatpush1.bf16.msra.mxu0 %v357
  %383 = vmatprep.subr.bf16.mxu0 0
  %384 = vmatpush1.bf16.msra.mxu0 %v356
  %385 = vmatprep.subr.bf16.mxu0 0
  %386 = vmatpush2.bf16.msra.mxu0 0
  %387 = vmatprep.subr.bf16.mxu0 0
  %388 = vmatpush2.bf16.msra.mxu0 0
  %389 = vmatprep.subr.bf16.mxu0 0
  %390 = vmatpush2.bf16.msra.mxu0 0
  %391 = vmatprep.subr.bf16.mxu0 0
  %392 = vmatpush2.bf16.msra.mxu0 0
  %393 = vmatprep.subr.bf16.mxu0 0
  %394 = vmatpush2.bf16.msra.mxu0 0
  %395 = vmatprep.subr.bf16.mxu0 0
  %396 = vmatpush2.bf16.msra.mxu0 0
  %397 = vmatprep.subr.bf16.mxu0 0
  %398 = vmatpush2.bf16.msra.mxu0 0
  %399 = vmatprep.subr.bf16.mxu0 0
  %400 = vmatpush2.bf16.msra.mxu0 0
  %401 = vmatprep.mubr.bf16.mxu0 0
  %402 = vmatmul.mubr.bf16.gmra.mxu0 %v361
  %v403 = vpop.f32.mrf.mxu0
  %v404 = vadd.f32 %v346, %v403
  %v405 = vpop.f32.mrf.mxu0
  %v406 = vpop.f32.mrf.mxu0
  %v407 = vadd.f32 %v346, %v406
  %v408 = vpop.f32.mrf.mxu0
  %409 = vmatprep.mubr.bf16.mxu0 0
  %410 = vmatmul.mubr.bf16.gmra.mxu0 %v364
  %v411 = vpop.f32.mrf.mxu0
  %v412 = vadd.f32 %v346, %v411
  %v413 = vpop.f32.mrf.mxu0
  %v414 = vpop.f32.mrf.mxu0
  %v415 = vadd.f32 %v346, %v414
  %v416 = vpop.f32.mrf.mxu0
  %417 = vmatprep.mubr.bf16.mxu0 0
  %418 = vmatmul.mubr.bf16.gmra.mxu0 %v367
  %v419 = vpop.f32.mrf.mxu0
  %v420 = vadd.f32 %v346, %v419
  %v421 = vpop.f32.mrf.mxu0
  %v422 = vpop.f32.mrf.mxu0
  %v423 = vadd.f32 %v346, %v422
  %v424 = vpop.f32.mrf.mxu0
  %425 = vdwg.mxu0
  %v426 = vpack.c.bf16 %v407, %v404
  %v427 = vpack.c.bf16 %v415, %v412
  %v428 = vpack.c.bf16 %v423, %v420
  %432 = vrot.lane.b32.xlu0 %v426, 96
  %v433 = vpop.permute.xlu0 %432
  %434 = vrot.lane.b32.xlu0 %v427, 96
  %v435 = vpop.permute.xlu0 %434
  %436 = vrot.lane.b32.xlu0 %v428, 96
  %v437 = vpop.permute.xlu0 %436
  %vm438 = vcmask 64512
  %v440 = vsel %vm438, %v426, 0
  %v443 = vsel %vm438, %v427, 0
  %v446 = vsel %vm438, %v428, 0
  %v449 = vsel %vm438, %v433, 0
  %v452 = vsel %vm438, %v435, 0
  %v455 = vsel %vm438, %v437, 0
  %457 = vmatprep.subr.bf16.mxu0 0
  %458 = vmatpush1.bf16.xpose.msra.mxu0 0
  %459 = vmatprep.subr.bf16.mxu0 0
  %460 = vmatpush1.bf16.xpose.msra.mxu0 0
  %461 = vmatprep.subr.bf16.mxu0 0
  %462 = vmatpush1.bf16.xpose.msra.mxu0 0
  %463 = vmatprep.subr.bf16.mxu0 0
  %464 = vmatpush1.bf16.xpose.msra.mxu0 0
  %465 = vmatprep.subr.bf16.mxu0 0
  %466 = vmatpush1.bf16.xpose.msra.mxu0 0
  %467 = vmatprep.subr.bf16.mxu0 0
  %468 = vmatpush1.bf16.xpose.msra.mxu0 %v455
  %469 = vmatprep.subr.bf16.mxu0 0
  %470 = vmatpush1.bf16.xpose.msra.mxu0 %v452
  %471 = vmatprep.subr.bf16.mxu0 0
  %472 = vmatpush1.bf16.xpose.msra.mxu0 %v449
  %473 = vmatprep.subr.bf16.mxu0 0
  %474 = vmatpush2.bf16.xpose.msra.mxu0 0
  %475 = vmatprep.subr.bf16.mxu0 0
  %476 = vmatpush2.bf16.xpose.msra.mxu0 0
  %477 = vmatprep.subr.bf16.mxu0 0
  %478 = vmatpush2.bf16.xpose.msra.mxu0 0
  %479 = vmatprep.subr.bf16.mxu0 0
  %480 = vmatpush2.bf16.xpose.msra.mxu0 0
  %481 = vmatprep.subr.bf16.mxu0 0
  %482 = vmatpush2.bf16.xpose.msra.mxu0 0
  %483 = vmatprep.subr.bf16.mxu0 0
  %484 = vmatpush2.bf16.xpose.msra.mxu0 0
  %485 = vmatprep.subr.bf16.mxu0 0
  %486 = vmatpush2.bf16.xpose.msra.mxu0 0
  %487 = vmatprep.subr.bf16.mxu0 0
  %488 = vmatpush2.bf16.xpose.msra.mxu0 0
  %489 = vmatprep.mubr.bf16.mxu0 0
  %490 = vmatmul.mubr.bf16.gmra.mxu0 %v440
  %v491 = vpop.f32.mrf.mxu0
  %v492 = vadd.f32 %v222, %v491
  %v493 = vpop.f32.mrf.mxu0
  %v494 = vpop.f32.mrf.mxu0
  %v495 = vadd.f32 %v223, %v494
  %v496 = vpop.f32.mrf.mxu0
  %497 = vmatprep.mubr.bf16.mxu0 0
  %498 = vmatmul.mubr.bf16.gmra.mxu0 %v443
  %v499 = vpop.f32.mrf.mxu0
  %v500 = vadd.f32 %v224, %v499
  %v501 = vpop.f32.mrf.mxu0
  %v502 = vpop.f32.mrf.mxu0
  %v503 = vadd.f32 %v225, %v502
  %v504 = vpop.f32.mrf.mxu0
  %505 = vmatprep.mubr.bf16.mxu0 0
  %506 = vmatmul.mubr.bf16.gmra.mxu0 %v446
  %v507 = vpop.f32.mrf.mxu0
  %v508 = vadd.f32 %v226, %v507
  %v509 = vpop.f32.mrf.mxu0
  %v510 = vpop.f32.mrf.mxu0
  %v511 = vadd.f32 %v227, %v510
  %v512 = vpop.f32.mrf.mxu0
  %513 = vdwg.mxu0
  %v514 = vsel %vm102, %v492, -inf
  %515 = vmax.xlane.f32.xlu0 %v514
  %v516 = vpop.xlane.xlu0 %515
  %v517 = vsel %vm102, %v495, -inf
  %518 = vmax.xlane.f32.xlu0 %v517
  %v519 = vpop.xlane.xlu0 %518
  %v520 = vsel %vm102, %v500, -inf
  %521 = vmax.xlane.f32.xlu0 %v520
  %v522 = vpop.xlane.xlu0 %521
  %v523 = vsel %vm102, %v503, -inf
  %524 = vmax.xlane.f32.xlu0 %v523
  %v525 = vpop.xlane.xlu0 %524
  %v526 = vsel %vm102, %v508, -inf
  %527 = vmax.xlane.f32.xlu0 %v526
  %v528 = vpop.xlane.xlu0 %527
  %v529 = vsel %vm102, %v511, -inf
  %530 = vmax.xlane.f32.xlu0 %v529
  %v531 = vpop.xlane.xlu0 %530
  %v532 = vsub.f32 %v492, %v516
  %v533 = vsub.f32 %v495, %v519
  %v534 = vsub.f32 %v500, %v522
  %v535 = vsub.f32 %v503, %v525
  %v536 = vsub.f32 %v508, %v528
  %v537 = vsub.f32 %v511, %v531
  %v538 = vmul.f32 %v532, 1.442695
  %v539 = vpow.pop %v538
  %v540 = vmul.f32 %v533, 1.442695
  %v541 = vpow.pop %v540
  %v542 = vmul.f32 %v534, 1.442695
  %v543 = vpow.pop %v542
  %v544 = vmul.f32 %v535, 1.442695
  %v545 = vpow.pop %v544
  %v546 = vmul.f32 %v536, 1.442695
  %v547 = vpow.pop %v546
  %v548 = vmul.f32 %v537, 1.442695
  %v549 = vpow.pop %v548
  %v550 = vsel %vm102, %v539, 0.0
  %551 = vadd.xlane.f32.xlu0 %v550
  %v552 = vpop.xlane.xlu0 %551
  %v553 = vsel %vm102, %v541, 0.0
  %554 = vadd.xlane.f32.xlu0 %v553
  %v555 = vpop.xlane.xlu0 %554
  %v556 = vsel %vm102, %v543, 0.0
  %557 = vadd.xlane.f32.xlu0 %v556
  %v558 = vpop.xlane.xlu0 %557
  %v559 = vsel %vm102, %v545, 0.0
  %560 = vadd.xlane.f32.xlu0 %v559
  %v561 = vpop.xlane.xlu0 %560
  %v562 = vsel %vm102, %v547, 0.0
  %563 = vadd.xlane.f32.xlu0 %v562
  %v564 = vpop.xlane.xlu0 %563
  %v565 = vsel %vm102, %v549, 0.0
  %566 = vadd.xlane.f32.xlu0 %v565
  %v567 = vpop.xlane.xlu0 %566
  %v568 = vrcp.pop %v552
  %v569 = vrcp.pop %v555
  %v570 = vrcp.pop %v558
  %v571 = vrcp.pop %v561
  %v572 = vrcp.pop %v564
  %v573 = vrcp.pop %v567
  %v574 = vmul.f32 %v539, %v568
  %v575 = vmul.f32 %v541, %v569
  %v576 = vmul.f32 %v543, %v570
  %v577 = vmul.f32 %v545, %v571
  %v578 = vmul.f32 %v547, %v572
  %v579 = vmul.f32 %v549, %v573
  %v580 = vpack.c.bf16 %v575, %v574
  %v581 = vpack.c.bf16 %v577, %v576
  %v582 = vpack.c.bf16 %v579, %v578
  %583 = vrot.lane.b32.xlu0 %v426, 64
  %v584 = vpop.permute.xlu0 %583
  %585 = vrot.lane.b32.xlu0 %v427, 64
  %v586 = vpop.permute.xlu0 %585
  %587 = vrot.lane.b32.xlu0 %v428, 64
  %v588 = vpop.permute.xlu0 %587
  %v593 = vsel %vm102, %v580, 0
  %v596 = vsel %vm102, %v581, 0
  %v599 = vsel %vm102, %v582, 0
  %601 = vmatprep.subr.bf16.mxu0 0
  %602 = vmatpush1.bf16.msra.mxu0 0
  %603 = vmatprep.subr.bf16.mxu0 0
  %604 = vmatpush1.bf16.msra.mxu0 0
  %605 = vmatprep.subr.bf16.mxu0 0
  %606 = vmatpush1.bf16.msra.mxu0 0
  %607 = vmatprep.subr.bf16.mxu0 0
  %608 = vmatpush1.bf16.msra.mxu0 0
  %609 = vmatprep.subr.bf16.mxu0 0
  %610 = vmatpush1.bf16.msra.mxu0 0
  %611 = vmatprep.subr.bf16.mxu0 0
  %612 = vmatpush1.bf16.msra.mxu0 %v588
  %613 = vmatprep.subr.bf16.mxu0 0
  %614 = vmatpush1.bf16.msra.mxu0 %v586
  %615 = vmatprep.subr.bf16.mxu0 0
  %616 = vmatpush1.bf16.msra.mxu0 %v584
  %617 = vmatprep.subr.bf16.mxu0 0
  %618 = vmatpush2.bf16.msra.mxu0 0
  %619 = vmatprep.subr.bf16.mxu0 0
  %620 = vmatpush2.bf16.msra.mxu0 0
  %621 = vmatprep.subr.bf16.mxu0 0
  %622 = vmatpush2.bf16.msra.mxu0 0
  %623 = vmatprep.subr.bf16.mxu0 0
  %624 = vmatpush2.bf16.msra.mxu0 0
  %625 = vmatprep.subr.bf16.mxu0 0
  %626 = vmatpush2.bf16.msra.mxu0 0
  %627 = vmatprep.subr.bf16.mxu0 0
  %628 = vmatpush2.bf16.msra.mxu0 0
  %629 = vmatprep.subr.bf16.mxu0 0
  %630 = vmatpush2.bf16.msra.mxu0 0
  %631 = vmatprep.subr.bf16.mxu0 0
  %632 = vmatpush2.bf16.msra.mxu0 0
  %633 = vmatprep.mubr.bf16.mxu0 0
  %634 = vmatmul.mubr.bf16.gmra.mxu0 %v593
  %v635 = vpop.f32.mrf.mxu0
  %v636 = vadd.f32 0.0, %v635
  %v637 = vpop.f32.mrf.mxu0
  %v638 = vpop.f32.mrf.mxu0
  %v639 = vadd.f32 0.0, %v638
  %v640 = vpop.f32.mrf.mxu0
  %641 = vmatprep.mubr.bf16.mxu0 0
  %642 = vmatmul.mubr.bf16.gmra.mxu0 %v596
  %v643 = vpop.f32.mrf.mxu0
  %v644 = vadd.f32 0.0, %v643
  %v645 = vpop.f32.mrf.mxu0
  %v646 = vpop.f32.mrf.mxu0
  %v647 = vadd.f32 0.0, %v646
  %v648 = vpop.f32.mrf.mxu0
  %649 = vmatprep.mubr.bf16.mxu0 0
  %650 = vmatmul.mubr.bf16.gmra.mxu0 %v599
  %v651 = vpop.f32.mrf.mxu0
  %v652 = vadd.f32 0.0, %v651
  %v653 = vpop.f32.mrf.mxu0
  %v654 = vpop.f32.mrf.mxu0
  %v655 = vadd.f32 0.0, %v654
  %v656 = vpop.f32.mrf.mxu0
  %657 = vdwg.mxu0
  %658 = vst.msk [vmem:[#allocation2] sm:$0xff] %vm438, %v636
  %659 = vst.msk [vmem:[#allocation2 + $0x8] sm:$0xff] %vm438, %v639
  %660 = vst.msk [vmem:[#allocation2 + $0x10] sm:$0xff] %vm438, %v644
  %661 = vst.msk [vmem:[#allocation2 + $0x18] sm:$0xff] %vm438, %v647
  %662 = vst.msk [vmem:[#allocation2 + $0x20] sm:$0xff] %vm438, %v652
  %663 = vst.msk [vmem:[#allocation2 + $0x28] sm:$0xff] %vm438, %v655
  %664 = vrot.lane.b32.xlu0 %v426, 120
  %v665 = vpop.permute.xlu0 %664
  %666 = vrot.lane.b32.xlu0 %v427, 120
  %v667 = vpop.permute.xlu0 %666
  %668 = vrot.lane.b32.xlu0 %v428, 120
  %v669 = vpop.permute.xlu0 %668
  %670 = vrot.lane.b32.xlu0 %v426, 88
  %v671 = vpop.permute.xlu0 %670
  %672 = vrot.lane.b32.xlu0 %v427, 88
  %v673 = vpop.permute.xlu0 %672
  %674 = vrot.lane.b32.xlu0 %v428, 88
  %v675 = vpop.permute.xlu0 %674
  %v677 = vsel %vm438, %v665, 0
  %v680 = vsel %vm438, %v667, 0
  %v683 = vsel %vm438, %v669, 0
  %v686 = vsel %vm438, %v671, 0
  %v689 = vsel %vm438, %v673, 0
  %v692 = vsel %vm438, %v675, 0
  %694 = vmatprep.subr.bf16.mxu0 0
  %695 = vmatpush1.bf16.xpose.msra.mxu0 0
  %696 = vmatprep.subr.bf16.mxu0 0
  %697 = vmatpush1.bf16.xpose.msra.mxu0 0
  %698 = vmatprep.subr.bf16.mxu0 0
  %699 = vmatpush1.bf16.xpose.msra.mxu0 0
  %700 = vmatprep.subr.bf16.mxu0 0
  %701 = vmatpush1.bf16.xpose.msra.mxu0 0
  %702 = vmatprep.subr.bf16.mxu0 0
  %703 = vmatpush1.bf16.xpose.msra.mxu0 0
  %704 = vmatprep.subr.bf16.mxu0 0
  %705 = vmatpush1.bf16.xpose.msra.mxu0 %v692
  %706 = vmatprep.subr.bf16.mxu0 0
  %707 = vmatpush1.bf16.xpose.msra.mxu0 %v689
  %708 = vmatprep.subr.bf16.mxu0 0
  %709 = vmatpush1.bf16.xpose.msra.mxu0 %v686
  %710 = vmatprep.subr.bf16.mxu0 0
  %711 = vmatpush2.bf16.xpose.msra.mxu0 0
  %712 = vmatprep.subr.bf16.mxu0 0
  %713 = vmatpush2.bf16.xpose.msra.mxu0 0
  %714 = vmatprep.subr.bf16.mxu0 0
  %715 = vmatpush2.bf16.xpose.msra.mxu0 0
  %716 = vmatprep.subr.bf16.mxu0 0
  %717 = vmatpush2.bf16.xpose.msra.mxu0 0
  %718 = vmatprep.subr.bf16.mxu0 0
  %719 = vmatpush2.bf16.xpose.msra.mxu0 0
  %720 = vmatprep.subr.bf16.mxu0 0
  %721 = vmatpush2.bf16.xpose.msra.mxu0 0
  %722 = vmatprep.subr.bf16.mxu0 0
  %723 = vmatpush2.bf16.xpose.msra.mxu0 0
  %724 = vmatprep.subr.bf16.mxu0 0
  %725 = vmatpush2.bf16.xpose.msra.mxu0 0
  %726 = vmatprep.mubr.bf16.mxu0 0
  %727 = vmatmul.mubr.bf16.gmra.mxu0 %v677
  %v728 = vpop.f32.mrf.mxu0
  %v729 = vadd.f32 %v222, %v728
  %v730 = vpop.f32.mrf.mxu0
  %v731 = vpop.f32.mrf.mxu0
  %v732 = vadd.f32 %v223, %v731
  %v733 = vpop.f32.mrf.mxu0
  %734 = vmatprep.mubr.bf16.mxu0 0
  %735 = vmatmul.mubr.bf16.gmra.mxu0 %v680
  %v736 = vpop.f32.mrf.mxu0
  %v737 = vadd.f32 %v224, %v736
  %v738 = vpop.f32.mrf.mxu0
  %v739 = vpop.f32.mrf.mxu0
  %v740 = vadd.f32 %v225, %v739
  %v741 = vpop.f32.mrf.mxu0
  %742 = vmatprep.mubr.bf16.mxu0 0
  %743 = vmatmul.mubr.bf16.gmra.mxu0 %v683
  %v744 = vpop.f32.mrf.mxu0
  %v745 = vadd.f32 %v226, %v744
  %v746 = vpop.f32.mrf.mxu0
  %v747 = vpop.f32.mrf.mxu0
  %v748 = vadd.f32 %v227, %v747
  %v749 = vpop.f32.mrf.mxu0
  %750 = vdwg.mxu0
  %v751 = vsel %vm102, %v729, -inf
  %752 = vmax.xlane.f32.xlu0 %v751
  %v753 = vpop.xlane.xlu0 %752
  %v754 = vsel %vm102, %v732, -inf
  %755 = vmax.xlane.f32.xlu0 %v754
  %v756 = vpop.xlane.xlu0 %755
  %v757 = vsel %vm102, %v737, -inf
  %758 = vmax.xlane.f32.xlu0 %v757
  %v759 = vpop.xlane.xlu0 %758
  %v760 = vsel %vm102, %v740, -inf
  %761 = vmax.xlane.f32.xlu0 %v760
  %v762 = vpop.xlane.xlu0 %761
  %v763 = vsel %vm102, %v745, -inf
  %764 = vmax.xlane.f32.xlu0 %v763
  %v765 = vpop.xlane.xlu0 %764
  %v766 = vsel %vm102, %v748, -inf
  %767 = vmax.xlane.f32.xlu0 %v766
  %v768 = vpop.xlane.xlu0 %767
  %v769 = vsub.f32 %v729, %v753
  %v770 = vsub.f32 %v732, %v756
  %v771 = vsub.f32 %v737, %v759
  %v772 = vsub.f32 %v740, %v762
  %v773 = vsub.f32 %v745, %v765
  %v774 = vsub.f32 %v748, %v768
  %v775 = vmul.f32 %v769, 1.442695
  %v776 = vpow.pop %v775
  %v777 = vmul.f32 %v770, 1.442695
  %v778 = vpow.pop %v777
  %v779 = vmul.f32 %v771, 1.442695
  %v780 = vpow.pop %v779
  %v781 = vmul.f32 %v772, 1.442695
  %v782 = vpow.pop %v781
  %v783 = vmul.f32 %v773, 1.442695
  %v784 = vpow.pop %v783
  %v785 = vmul.f32 %v774, 1.442695
  %v786 = vpow.pop %v785
  %v787 = vsel %vm102, %v776, 0.0
  %788 = vadd.xlane.f32.xlu0 %v787
  %v789 = vpop.xlane.xlu0 %788
  %v790 = vsel %vm102, %v778, 0.0
  %791 = vadd.xlane.f32.xlu0 %v790
  %v792 = vpop.xlane.xlu0 %791
  %v793 = vsel %vm102, %v780, 0.0
  %794 = vadd.xlane.f32.xlu0 %v793
  %v795 = vpop.xlane.xlu0 %794
  %v796 = vsel %vm102, %v782, 0.0
  %797 = vadd.xlane.f32.xlu0 %v796
  %v798 = vpop.xlane.xlu0 %797
  %v799 = vsel %vm102, %v784, 0.0
  %800 = vadd.xlane.f32.xlu0 %v799
  %v801 = vpop.xlane.xlu0 %800
  %v802 = vsel %vm102, %v786, 0.0
  %803 = vadd.xlane.f32.xlu0 %v802
  %v804 = vpop.xlane.xlu0 %803
  %v805 = vrcp.pop %v789
  %v806 = vrcp.pop %v792
  %v807 = vrcp.pop %v795
  %v808 = vrcp.pop %v798
  %v809 = vrcp.pop %v801
  %v810 = vrcp.pop %v804
  %v811 = vmul.f32 %v776, %v805
  %v812 = vmul.f32 %v778, %v806
  %v813 = vmul.f32 %v780, %v807
  %v814 = vmul.f32 %v782, %v808
  %v815 = vmul.f32 %v784, %v809
  %v816 = vmul.f32 %v786, %v810
  %v817 = vpack.c.bf16 %v812, %v811
  %v818 = vpack.c.bf16 %v814, %v813
  %v819 = vpack.c.bf16 %v816, %v815
  %820 = vrot.lane.b32.xlu0 %v426, 56
  %v821 = vpop.permute.xlu0 %820
  %822 = vrot.lane.b32.xlu0 %v427, 56
  %v823 = vpop.permute.xlu0 %822
  %824 = vrot.lane.b32.xlu0 %v428, 56
  %v825 = vpop.permute.xlu0 %824
  %v830 = vsel %vm102, %v817, 0
  %v833 = vsel %vm102, %v818, 0
  %v836 = vsel %vm102, %v819, 0
  %838 = vmatprep.subr.bf16.mxu0 0
  %839 = vmatpush1.bf16.msra.mxu0 0
  %840 = vmatprep.subr.bf16.mxu0 0
  %841 = vmatpush1.bf16.msra.mxu0 0
  %842 = vmatprep.subr.bf16.mxu0 0
  %843 = vmatpush1.bf16.msra.mxu0 0
  %844 = vmatprep.subr.bf16.mxu0 0
  %845 = vmatpush1.bf16.msra.mxu0 0
  %846 = vmatprep.subr.bf16.mxu0 0
  %847 = vmatpush1.bf16.msra.mxu0 0
  %848 = vmatprep.subr.bf16.mxu0 0
  %849 = vmatpush1.bf16.msra.mxu0 %v825
  %850 = vmatprep.subr.bf16.mxu0 0
  %851 = vmatpush1.bf16.msra.mxu0 %v823
  %852 = vmatprep.subr.bf16.mxu0 0
  %853 = vmatpush1.bf16.msra.mxu0 %v821
  %854 = vmatprep.subr.bf16.mxu0 0
  %855 = vmatpush2.bf16.msra.mxu0 0
  %856 = vmatprep.subr.bf16.mxu0 0
  %857 = vmatpush2.bf16.msra.mxu0 0
  %858 = vmatprep.subr.bf16.mxu0 0
  %859 = vmatpush2.bf16.msra.mxu0 0
  %860 = vmatprep.subr.bf16.mxu0 0
  %861 = vmatpush2.bf16.msra.mxu0 0
  %862 = vmatprep.subr.bf16.mxu0 0
  %863 = vmatpush2.bf16.msra.mxu0 0
  %864 = vmatprep.subr.bf16.mxu0 0
  %865 = vmatpush2.bf16.msra.mxu0 0
  %866 = vmatprep.subr.bf16.mxu0 0
  %867 = vmatpush2.bf16.msra.mxu0 0
  %868 = vmatprep.subr.bf16.mxu0 0
  %869 = vmatpush2.bf16.msra.mxu0 0
  %870 = vmatprep.mubr.bf16.mxu0 0
  %871 = vmatmul.mubr.bf16.gmra.mxu0 %v830
  %v872 = vpop.f32.mrf.mxu0
  %v873 = vadd.f32 0.0, %v872
  %v874 = vpop.f32.mrf.mxu0
  %v875 = vpop.f32.mrf.mxu0
  %v876 = vadd.f32 0.0, %v875
  %v877 = vpop.f32.mrf.mxu0
  %878 = vmatprep.mubr.bf16.mxu0 0
  %879 = vmatmul.mubr.bf16.gmra.mxu0 %v833
  %v880 = vpop.f32.mrf.mxu0
  %v881 = vadd.f32 0.0, %v880
  %v882 = vpop.f32.mrf.mxu0
  %v883 = vpop.f32.mrf.mxu0
  %v884 = vadd.f32 0.0, %v883
  %v885 = vpop.f32.mrf.mxu0
  %886 = vmatprep.mubr.bf16.mxu0 0
  %887 = vmatmul.mubr.bf16.gmra.mxu0 %v836
  %v888 = vpop.f32.mrf.mxu0
  %v889 = vadd.f32 0.0, %v888
  %v890 = vpop.f32.mrf.mxu0
  %v891 = vpop.f32.mrf.mxu0
  %v892 = vadd.f32 0.0, %v891
  %v893 = vpop.f32.mrf.mxu0
  %894 = vdwg.mxu0
  %901 = vrot.lane.b32.xlu0 %v873, 8
  %v902 = vpop.permute.xlu0 %901
  %903 = vrot.lane.b32.xlu0 %v876, 8
  %v904 = vpop.permute.xlu0 %903
  %905 = vrot.lane.b32.xlu0 %v881, 8
  %v906 = vpop.permute.xlu0 %905
  %907 = vrot.lane.b32.xlu0 %v884, 8
  %v908 = vpop.permute.xlu0 %907
  %909 = vrot.lane.b32.xlu0 %v889, 8
  %v910 = vpop.permute.xlu0 %909
  %911 = vrot.lane.b32.xlu0 %v892, 8
  %v912 = vpop.permute.xlu0 %911
  %vm919 = vcmask 130112
  %920 = vst.msk [vmem:[#allocation2] sm:$0xff] %vm919, %v902
  %921 = vst.msk [vmem:[#allocation2 + $0x8] sm:$0xff] %vm919, %v904
  %922 = vst.msk [vmem:[#allocation2 + $0x10] sm:$0xff] %vm919, %v906
  %923 = vst.msk [vmem:[#allocation2 + $0x18] sm:$0xff] %vm919, %v908
  %924 = vst.msk [vmem:[#allocation2 + $0x20] sm:$0xff] %vm919, %v910
  %925 = vst.msk [vmem:[#allocation2 + $0x28] sm:$0xff] %vm919, %v912
  %926 = vrot.lane.b32.xlu0 %v426, 112
  %v927 = vpop.permute.xlu0 %926
  %928 = vrot.lane.b32.xlu0 %v427, 112
  %v929 = vpop.permute.xlu0 %928
  %930 = vrot.lane.b32.xlu0 %v428, 112
  %v931 = vpop.permute.xlu0 %930
  %932 = vrot.lane.b32.xlu0 %v426, 80
  %v933 = vpop.permute.xlu0 %932
  %934 = vrot.lane.b32.xlu0 %v427, 80
  %v935 = vpop.permute.xlu0 %934
  %936 = vrot.lane.b32.xlu0 %v428, 80
  %v937 = vpop.permute.xlu0 %936
  %v939 = vsel %vm438, %v927, 0
  %v942 = vsel %vm438, %v929, 0
  %v945 = vsel %vm438, %v931, 0
  %v948 = vsel %vm438, %v933, 0
  %v951 = vsel %vm438, %v935, 0
  %v954 = vsel %vm438, %v937, 0
  %956 = vmatprep.subr.bf16.mxu0 0
  %957 = vmatpush1.bf16.xpose.msra.mxu0 0
  %958 = vmatprep.subr.bf16.mxu0 0
  %959 = vmatpush1.bf16.xpose.msra.mxu0 0
  %960 = vmatprep.subr.bf16.mxu0 0
  %961 = vmatpush1.bf16.xpose.msra.mxu0 0
  %962 = vmatprep.subr.bf16.mxu0 0
  %963 = vmatpush1.bf16.xpose.msra.mxu0 0
  %964 = vmatprep.subr.bf16.mxu0 0
  %965 = vmatpush1.bf16.xpose.msra.mxu0 0
  %966 = vmatprep.subr.bf16.mxu0 0
  %967 = vmatpush1.bf16.xpose.msra.mxu0 %v954
  %968 = vmatprep.subr.bf16.mxu0 0
  %969 = vmatpush1.bf16.xpose.msra.mxu0 %v951
  %970 = vmatprep.subr.bf16.mxu0 0
  %971 = vmatpush1.bf16.xpose.msra.mxu0 %v948
  %972 = vmatprep.subr.bf16.mxu0 0
  %973 = vmatpush2.bf16.xpose.msra.mxu0 0
  %974 = vmatprep.subr.bf16.mxu0 0
  %975 = vmatpush2.bf16.xpose.msra.mxu0 0
  %976 = vmatprep.subr.bf16.mxu0 0
  %977 = vmatpush2.bf16.xpose.msra.mxu0 0
  %978 = vmatprep.subr.bf16.mxu0 0
  %979 = vmatpush2.bf16.xpose.msra.mxu0 0
  %980 = vmatprep.subr.bf16.mxu0 0
  %981 = vmatpush2.bf16.xpose.msra.mxu0 0
  %982 = vmatprep.subr.bf16.mxu0 0
  %983 = vmatpush2.bf16.xpose.msra.mxu0 0
  %984 = vmatprep.subr.bf16.mxu0 0
  %985 = vmatpush2.bf16.xpose.msra.mxu0 0
  %986 = vmatprep.subr.bf16.mxu0 0
  %987 = vmatpush2.bf16.xpose.msra.mxu0 0
  %988 = vmatprep.mubr.bf16.mxu0 0
  %989 = vmatmul.mubr.bf16.gmra.mxu0 %v939
  %v990 = vpop.f32.mrf.mxu0
  %v991 = vadd.f32 %v222, %v990
  %v992 = vpop.f32.mrf.mxu0
  %v993 = vpop.f32.mrf.mxu0
  %v994 = vadd.f32 %v223, %v993
  %v995 = vpop.f32.mrf.mxu0
  %996 = vmatprep.mubr.bf16.mxu0 0
  %997 = vmatmul.mubr.bf16.gmra.mxu0 %v942
  %v998 = vpop.f32.mrf.mxu0
  %v999 = vadd.f32 %v224, %v998
  %v1000 = vpop.f32.mrf.mxu0
  %v1001 = vpop.f32.mrf.mxu0
  %v1002 = vadd.f32 %v225, %v1001
  %v1003 = vpop.f32.mrf.mxu0
  %1004 = vmatprep.mubr.bf16.mxu0 0
  %1005 = vmatmul.mubr.bf16.gmra.mxu0 %v945
  %v1006 = vpop.f32.mrf.mxu0
  %v1007 = vadd.f32 %v226, %v1006
  %v1008 = vpop.f32.mrf.mxu0
  %v1009 = vpop.f32.mrf.mxu0
  %v1010 = vadd.f32 %v227, %v1009
  %v1011 = vpop.f32.mrf.mxu0
  %1012 = vdwg.mxu0
  %v1013 = vsel %vm102, %v991, -inf
  %1014 = vmax.xlane.f32.xlu0 %v1013
  %v1015 = vpop.xlane.xlu0 %1014
  %v1016 = vsel %vm102, %v994, -inf
  %1017 = vmax.xlane.f32.xlu0 %v1016
  %v1018 = vpop.xlane.xlu0 %1017
  %v1019 = vsel %vm102, %v999, -inf
  %1020 = vmax.xlane.f32.xlu0 %v1019
  %v1021 = vpop.xlane.xlu0 %1020
  %v1022 = vsel %vm102, %v1002, -inf
  %1023 = vmax.xlane.f32.xlu0 %v1022
  %v1024 = vpop.xlane.xlu0 %1023
  %v1025 = vsel %vm102, %v1007, -inf
  %1026 = vmax.xlane.f32.xlu0 %v1025
  %v1027 = vpop.xlane.xlu0 %1026
  %v1028 = vsel %vm102, %v1010, -inf
  %1029 = vmax.xlane.f32.xlu0 %v1028
  %v1030 = vpop.xlane.xlu0 %1029
  %v1031 = vsub.f32 %v991, %v1015
  %v1032 = vsub.f32 %v994, %v1018
  %v1033 = vsub.f32 %v999, %v1021
  %v1034 = vsub.f32 %v1002, %v1024
  %v1035 = vsub.f32 %v1007, %v1027
  %v1036 = vsub.f32 %v1010, %v1030
  %v1037 = vmul.f32 %v1031, 1.442695
  %v1038 = vpow.pop %v1037
  %v1039 = vmul.f32 %v1032, 1.442695
  %v1040 = vpow.pop %v1039
  %v1041 = vmul.f32 %v1033, 1.442695
  %v1042 = vpow.pop %v1041
  %v1043 = vmul.f32 %v1034, 1.442695
  %v1044 = vpow.pop %v1043
  %v1045 = vmul.f32 %v1035, 1.442695
  %v1046 = vpow.pop %v1045
  %v1047 = vmul.f32 %v1036, 1.442695
  %v1048 = vpow.pop %v1047
  %v1049 = vsel %vm102, %v1038, 0.0
  %1050 = vadd.xlane.f32.xlu0 %v1049
  %v1051 = vpop.xlane.xlu0 %1050
  %v1052 = vsel %vm102, %v1040, 0.0
  %1053 = vadd.xlane.f32.xlu0 %v1052
  %v1054 = vpop.xlane.xlu0 %1053
  %v1055 = vsel %vm102, %v1042, 0.0
  %1056 = vadd.xlane.f32.xlu0 %v1055
  %v1057 = vpop.xlane.xlu0 %1056
  %v1058 = vsel %vm102, %v1044, 0.0
  %1059 = vadd.xlane.f32.xlu0 %v1058
  %v1060 = vpop.xlane.xlu0 %1059
  %v1061 = vsel %vm102, %v1046, 0.0
  %1062 = vadd.xlane.f32.xlu0 %v1061
  %v1063 = vpop.xlane.xlu0 %1062
  %v1064 = vsel %vm102, %v1048, 0.0
  %1065 = vadd.xlane.f32.xlu0 %v1064
  %v1066 = vpop.xlane.xlu0 %1065
  %v1067 = vrcp.pop %v1051
  %v1068 = vrcp.pop %v1054
  %v1069 = vrcp.pop %v1057
  %v1070 = vrcp.pop %v1060
  %v1071 = vrcp.pop %v1063
  %v1072 = vrcp.pop %v1066
  %v1073 = vmul.f32 %v1038, %v1067
  %v1074 = vmul.f32 %v1040, %v1068
  %v1075 = vmul.f32 %v1042, %v1069
  %v1076 = vmul.f32 %v1044, %v1070
  %v1077 = vmul.f32 %v1046, %v1071
  %v1078 = vmul.f32 %v1048, %v1072
  %v1079 = vpack.c.bf16 %v1074, %v1073
  %v1080 = vpack.c.bf16 %v1076, %v1075
  %v1081 = vpack.c.bf16 %v1078, %v1077
  %1082 = vrot.lane.b32.xlu0 %v426, 48
  %v1083 = vpop.permute.xlu0 %1082
  %1084 = vrot.lane.b32.xlu0 %v427, 48
  %v1085 = vpop.permute.xlu0 %1084
  %1086 = vrot.lane.b32.xlu0 %v428, 48
  %v1087 = vpop.permute.xlu0 %1086
  %v1092 = vsel %vm102, %v1079, 0
  %v1095 = vsel %vm102, %v1080, 0
  %v1098 = vsel %vm102, %v1081, 0
  %1100 = vmatprep.subr.bf16.mxu0 0
  %1101 = vmatpush1.bf16.msra.mxu0 0
  %1102 = vmatprep.subr.bf16.mxu0 0
  %1103 = vmatpush1.bf16.msra.mxu0 0
  %1104 = vmatprep.subr.bf16.mxu0 0
  %1105 = vmatpush1.bf16.msra.mxu0 0
  %1106 = vmatprep.subr.bf16.mxu0 0
  %1107 = vmatpush1.bf16.msra.mxu0 0
  %1108 = vmatprep.subr.bf16.mxu0 0
  %1109 = vmatpush1.bf16.msra.mxu0 0
  %1110 = vmatprep.subr.bf16.mxu0 0
  %1111 = vmatpush1.bf16.msra.mxu0 %v1087
  %1112 = vmatprep.subr.bf16.mxu0 0
  %1113 = vmatpush1.bf16.msra.mxu0 %v1085
  %1114 = vmatprep.subr.bf16.mxu0 0
  %1115 = vmatpush1.bf16.msra.mxu0 %v1083
  %1116 = vmatprep.subr.bf16.mxu0 0
  %1117 = vmatpush2.bf16.msra.mxu0 0
  %1118 = vmatprep.subr.bf16.mxu0 0
  %1119 = vmatpush2.bf16.msra.mxu0 0
  %1120 = vmatprep.subr.bf16.mxu0 0
  %1121 = vmatpush2.bf16.msra.mxu0 0
  %1122 = vmatprep.subr.bf16.mxu0 0
  %1123 = vmatpush2.bf16.msra.mxu0 0
  %1124 = vmatprep.subr.bf16.mxu0 0
  %1125 = vmatpush2.bf16.msra.mxu0 0
  %1126 = vmatprep.subr.bf16.mxu0 0
  %1127 = vmatpush2.bf16.msra.mxu0 0
  %1128 = vmatprep.subr.bf16.mxu0 0
  %1129 = vmatpush2.bf16.msra.mxu0 0
  %1130 = vmatprep.subr.bf16.mxu0 0
  %1131 = vmatpush2.bf16.msra.mxu0 0
  %1132 = vmatprep.mubr.bf16.mxu0 0
  %1133 = vmatmul.mubr.bf16.gmra.mxu0 %v1092
  %v1134 = vpop.f32.mrf.mxu0
  %v1135 = vadd.f32 0.0, %v1134
  %v1136 = vpop.f32.mrf.mxu0
  %v1137 = vpop.f32.mrf.mxu0
  %v1138 = vadd.f32 0.0, %v1137
  %v1139 = vpop.f32.mrf.mxu0
  %1140 = vmatprep.mubr.bf16.mxu0 0
  %1141 = vmatmul.mubr.bf16.gmra.mxu0 %v1095
  %v1142 = vpop.f32.mrf.mxu0
  %v1143 = vadd.f32 0.0, %v1142
  %v1144 = vpop.f32.mrf.mxu0
  %v1145 = vpop.f32.mrf.mxu0
  %v1146 = vadd.f32 0.0, %v1145
  %v1147 = vpop.f32.mrf.mxu0
  %1148 = vmatprep.mubr.bf16.mxu0 0
  %1149 = vmatmul.mubr.bf16.gmra.mxu0 %v1098
  %v1150 = vpop.f32.mrf.mxu0
  %v1151 = vadd.f32 0.0, %v1150
  %v1152 = vpop.f32.mrf.mxu0
  %v1153 = vpop.f32.mrf.mxu0
  %v1154 = vadd.f32 0.0, %v1153
  %v1155 = vpop.f32.mrf.mxu0
  %1156 = vdwg.mxu0
  %1163 = vrot.lane.b32.xlu0 %v1135, 16
  %v1164 = vpop.permute.xlu0 %1163
  %1165 = vrot.lane.b32.xlu0 %v1138, 16
  %v1166 = vpop.permute.xlu0 %1165
  %1167 = vrot.lane.b32.xlu0 %v1143, 16
  %v1168 = vpop.permute.xlu0 %1167
  %1169 = vrot.lane.b32.xlu0 %v1146, 16
  %v1170 = vpop.permute.xlu0 %1169
  %1171 = vrot.lane.b32.xlu0 %v1151, 16
  %v1172 = vpop.permute.xlu0 %1171
  %1173 = vrot.lane.b32.xlu0 %v1154, 16
  %v1174 = vpop.permute.xlu0 %1173
  %vm1181 = vcmask 195712
  %1182 = vst.msk [vmem:[#allocation2] sm:$0xff] %vm1181, %v1164
  %1183 = vst.msk [vmem:[#allocation2 + $0x8] sm:$0xff] %vm1181, %v1166
  %1184 = vst.msk [vmem:[#allocation2 + $0x10] sm:$0xff] %vm1181, %v1168
  %1185 = vst.msk [vmem:[#allocation2 + $0x18] sm:$0xff] %vm1181, %v1170
  %1186 = vst.msk [vmem:[#allocation2 + $0x20] sm:$0xff] %vm1181, %v1172
  %1187 = vst.msk [vmem:[#allocation2 + $0x28] sm:$0xff] %vm1181, %v1174
  %1188 = vrot.lane.b32.xlu0 %v426, 104
  %v1189 = vpop.permute.xlu0 %1188
  %1190 = vrot.lane.b32.xlu0 %v427, 104
  %v1191 = vpop.permute.xlu0 %1190
  %1192 = vrot.lane.b32.xlu0 %v428, 104
  %v1193 = vpop.permute.xlu0 %1192
  %1194 = vrot.lane.b32.xlu0 %v426, 72
  %v1195 = vpop.permute.xlu0 %1194
  %1196 = vrot.lane.b32.xlu0 %v427, 72
  %v1197 = vpop.permute.xlu0 %1196
  %1198 = vrot.lane.b32.xlu0 %v428, 72
  %v1199 = vpop.permute.xlu0 %1198
  %v1201 = vsel %vm438, %v1189, 0
  %v1204 = vsel %vm438, %v1191, 0
  %v1207 = vsel %vm438, %v1193, 0
  %v1210 = vsel %vm438, %v1195, 0
  %v1213 = vsel %vm438, %v1197, 0
  %v1216 = vsel %vm438, %v1199, 0
  %1218 = vmatprep.subr.bf16.mxu0 0
  %1219 = vmatpush1.bf16.xpose.msra.mxu0 0
  %1220 = vmatprep.subr.bf16.mxu0 0
  %1221 = vmatpush1.bf16.xpose.msra.mxu0 0
  %1222 = vmatprep.subr.bf16.mxu0 0
  %1223 = vmatpush1.bf16.xpose.msra.mxu0 0
  %1224 = vmatprep.subr.bf16.mxu0 0
  %1225 = vmatpush1.bf16.xpose.msra.mxu0 0
  %1226 = vmatprep.subr.bf16.mxu0 0
  %1227 = vmatpush1.bf16.xpose.msra.mxu0 0
  %1228 = vmatprep.subr.bf16.mxu0 0
  %1229 = vmatpush1.bf16.xpose.msra.mxu0 %v1216
  %1230 = vmatprep.subr.bf16.mxu0 0
  %1231 = vmatpush1.bf16.xpose.msra.mxu0 %v1213
  %1232 = vmatprep.subr.bf16.mxu0 0
  %1233 = vmatpush1.bf16.xpose.msra.mxu0 %v1210
  %1234 = vmatprep.subr.bf16.mxu0 0
  %1235 = vmatpush2.bf16.xpose.msra.mxu0 0
  %1236 = vmatprep.subr.bf16.mxu0 0
  %1237 = vmatpush2.bf16.xpose.msra.mxu0 0
  %1238 = vmatprep.subr.bf16.mxu0 0
  %1239 = vmatpush2.bf16.xpose.msra.mxu0 0
  %1240 = vmatprep.subr.bf16.mxu0 0
  %1241 = vmatpush2.bf16.xpose.msra.mxu0 0
  %1242 = vmatprep.subr.bf16.mxu0 0
  %1243 = vmatpush2.bf16.xpose.msra.mxu0 0
  %1244 = vmatprep.subr.bf16.mxu0 0
  %1245 = vmatpush2.bf16.xpose.msra.mxu0 0
  %1246 = vmatprep.subr.bf16.mxu0 0
  %1247 = vmatpush2.bf16.xpose.msra.mxu0 0
  %1248 = vmatprep.subr.bf16.mxu0 0
  %1249 = vmatpush2.bf16.xpose.msra.mxu0 0
  %1250 = vmatprep.mubr.bf16.mxu0 0
  %1251 = vmatmul.mubr.bf16.gmra.mxu0 %v1201
  %v1252 = vpop.f32.mrf.mxu0
  %v1253 = vadd.f32 %v222, %v1252
  %v1254 = vpop.f32.mrf.mxu0
  %v1255 = vpop.f32.mrf.mxu0
  %v1256 = vadd.f32 %v223, %v1255
  %v1257 = vpop.f32.mrf.mxu0
  %1258 = vmatprep.mubr.bf16.mxu0 0
  %1259 = vmatmul.mubr.bf16.gmra.mxu0 %v1204
  %v1260 = vpop.f32.mrf.mxu0
  %v1261 = vadd.f32 %v224, %v1260
  %v1262 = vpop.f32.mrf.mxu0
  %v1263 = vpop.f32.mrf.mxu0
  %v1264 = vadd.f32 %v225, %v1263
  %v1265 = vpop.f32.mrf.mxu0
  %1266 = vmatprep.mubr.bf16.mxu0 0
  %1267 = vmatmul.mubr.bf16.gmra.mxu0 %v1207
  %v1268 = vpop.f32.mrf.mxu0
  %v1269 = vadd.f32 %v226, %v1268
  %v1270 = vpop.f32.mrf.mxu0
  %v1271 = vpop.f32.mrf.mxu0
  %v1272 = vadd.f32 %v227, %v1271
  %v1273 = vpop.f32.mrf.mxu0
  %1274 = vdwg.mxu0
  %v1275 = vsel %vm102, %v1253, -inf
  %1276 = vmax.xlane.f32.xlu0 %v1275
  %v1277 = vpop.xlane.xlu0 %1276
  %v1278 = vsel %vm102, %v1256, -inf
  %1279 = vmax.xlane.f32.xlu0 %v1278
  %v1280 = vpop.xlane.xlu0 %1279
  %v1281 = vsel %vm102, %v1261, -inf
  %1282 = vmax.xlane.f32.xlu0 %v1281
  %v1283 = vpop.xlane.xlu0 %1282
  %v1284 = vsel %vm102, %v1264, -inf
  %1285 = vmax.xlane.f32.xlu0 %v1284
  %v1286 = vpop.xlane.xlu0 %1285
  %v1287 = vsel %vm102, %v1269, -inf
  %1288 = vmax.xlane.f32.xlu0 %v1287
  %v1289 = vpop.xlane.xlu0 %1288
  %v1290 = vsel %vm102, %v1272, -inf
  %1291 = vmax.xlane.f32.xlu0 %v1290
  %v1292 = vpop.xlane.xlu0 %1291
  %v1293 = vsub.f32 %v1253, %v1277
  %v1294 = vsub.f32 %v1256, %v1280
  %v1295 = vsub.f32 %v1261, %v1283
  %v1296 = vsub.f32 %v1264, %v1286
  %v1297 = vsub.f32 %v1269, %v1289
  %v1298 = vsub.f32 %v1272, %v1292
  %v1299 = vmul.f32 %v1293, 1.442695
  %v1300 = vpow.pop %v1299
  %v1301 = vmul.f32 %v1294, 1.442695
  %v1302 = vpow.pop %v1301
  %v1303 = vmul.f32 %v1295, 1.442695
  %v1304 = vpow.pop %v1303
  %v1305 = vmul.f32 %v1296, 1.442695
  %v1306 = vpow.pop %v1305
  %v1307 = vmul.f32 %v1297, 1.442695
  %v1308 = vpow.pop %v1307
  %v1309 = vmul.f32 %v1298, 1.442695
  %v1310 = vpow.pop %v1309
  %v1311 = vsel %vm102, %v1300, 0.0
  %1312 = vadd.xlane.f32.xlu0 %v1311
  %v1313 = vpop.xlane.xlu0 %1312
  %v1314 = vsel %vm102, %v1302, 0.0
  %1315 = vadd.xlane.f32.xlu0 %v1314
  %v1316 = vpop.xlane.xlu0 %1315
  %v1317 = vsel %vm102, %v1304, 0.0
  %1318 = vadd.xlane.f32.xlu0 %v1317
  %v1319 = vpop.xlane.xlu0 %1318
  %v1320 = vsel %vm102, %v1306, 0.0
  %1321 = vadd.xlane.f32.xlu0 %v1320
  %v1322 = vpop.xlane.xlu0 %1321
  %v1323 = vsel %vm102, %v1308, 0.0
  %1324 = vadd.xlane.f32.xlu0 %v1323
  %v1325 = vpop.xlane.xlu0 %1324
  %v1326 = vsel %vm102, %v1310, 0.0
  %1327 = vadd.xlane.f32.xlu0 %v1326
  %v1328 = vpop.xlane.xlu0 %1327
  %v1329 = vrcp.pop %v1313
  %v1330 = vrcp.pop %v1316
  %v1331 = vrcp.pop %v1319
  %v1332 = vrcp.pop %v1322
  %v1333 = vrcp.pop %v1325
  %v1334 = vrcp.pop %v1328
  %v1335 = vmul.f32 %v1300, %v1329
  %v1336 = vmul.f32 %v1302, %v1330
  %v1337 = vmul.f32 %v1304, %v1331
  %v1338 = vmul.f32 %v1306, %v1332
  %v1339 = vmul.f32 %v1308, %v1333
  %v1340 = vmul.f32 %v1310, %v1334
  %v1341 = vpack.c.bf16 %v1336, %v1335
  %v1342 = vpack.c.bf16 %v1338, %v1337
  %v1343 = vpack.c.bf16 %v1340, %v1339
  %1344 = vrot.lane.b32.xlu0 %v426, 40
  %v1345 = vpop.permute.xlu0 %1344
  %1346 = vrot.lane.b32.xlu0 %v427, 40
  %v1347 = vpop.permute.xlu0 %1346
  %1348 = vrot.lane.b32.xlu0 %v428, 40
  %v1349 = vpop.permute.xlu0 %1348
  %v1354 = vsel %vm102, %v1341, 0
  %v1357 = vsel %vm102, %v1342, 0
  %v1360 = vsel %vm102, %v1343, 0
  %1362 = vmatprep.subr.bf16.mxu0 0
  %1363 = vmatpush1.bf16.msra.mxu0 0
  %1364 = vmatprep.subr.bf16.mxu0 0
  %1365 = vmatpush1.bf16.msra.mxu0 0
  %1366 = vmatprep.subr.bf16.mxu0 0
  %1367 = vmatpush1.bf16.msra.mxu0 0
  %1368 = vmatprep.subr.bf16.mxu0 0
  %1369 = vmatpush1.bf16.msra.mxu0 0
  %1370 = vmatprep.subr.bf16.mxu0 0
  %1371 = vmatpush1.bf16.msra.mxu0 0
  %1372 = vmatprep.subr.bf16.mxu0 0
  %1373 = vmatpush1.bf16.msra.mxu0 %v1349
  %1374 = vmatprep.subr.bf16.mxu0 0
  %1375 = vmatpush1.bf16.msra.mxu0 %v1347
  %1376 = vmatprep.subr.bf16.mxu0 0
  %1377 = vmatpush1.bf16.msra.mxu0 %v1345
  %1378 = vmatprep.subr.bf16.mxu0 0
  %1379 = vmatpush2.bf16.msra.mxu0 0
  %1380 = vmatprep.subr.bf16.mxu0 0
  %1381 = vmatpush2.bf16.msra.mxu0 0
  %1382 = vmatprep.subr.bf16.mxu0 0
  %1383 = vmatpush2.bf16.msra.mxu0 0
  %1384 = vmatprep.subr.bf16.mxu0 0
  %1385 = vmatpush2.bf16.msra.mxu0 0
  %1386 = vmatprep.subr.bf16.mxu0 0
  %1387 = vmatpush2.bf16.msra.mxu0 0
  %1388 = vmatprep.subr.bf16.mxu0 0
  %1389 = vmatpush2.bf16.msra.mxu0 0
  %1390 = vmatprep.subr.bf16.mxu0 0
  %1391 = vmatpush2.bf16.msra.mxu0 0
  %1392 = vmatprep.subr.bf16.mxu0 0
  %1393 = vmatpush2.bf16.msra.mxu0 0
  %1394 = vmatprep.mubr.bf16.mxu0 0
  %1395 = vmatmul.mubr.bf16.gmra.mxu0 %v1354
  %v1396 = vpop.f32.mrf.mxu0
  %v1397 = vadd.f32 0.0, %v1396
  %v1398 = vpop.f32.mrf.mxu0
  %v1399 = vpop.f32.mrf.mxu0
  %v1400 = vadd.f32 0.0, %v1399
  %v1401 = vpop.f32.mrf.mxu0
  %1402 = vmatprep.mubr.bf16.mxu0 0
  %1403 = vmatmul.mubr.bf16.gmra.mxu0 %v1357
  %v1404 = vpop.f32.mrf.mxu0
  %v1405 = vadd.f32 0.0, %v1404
  %v1406 = vpop.f32.mrf.mxu0
  %v1407 = vpop.f32.mrf.mxu0
  %v1408 = vadd.f32 0.0, %v1407
  %v1409 = vpop.f32.mrf.mxu0
  %1410 = vmatprep.mubr.bf16.mxu0 0
  %1411 = vmatmul.mubr.bf16.gmra.mxu0 %v1360
  %v1412 = vpop.f32.mrf.mxu0
  %v1413 = vadd.f32 0.0, %v1412
  %v1414 = vpop.f32.mrf.mxu0
  %v1415 = vpop.f32.mrf.mxu0
  %v1416 = vadd.f32 0.0, %v1415
  %v1417 = vpop.f32.mrf.mxu0
  %1418 = vdwg.mxu0
  %1425 = vrot.lane.b32.xlu0 %v1397, 24
  %v1426 = vpop.permute.xlu0 %1425
  %1427 = vrot.lane.b32.xlu0 %v1400, 24
  %v1428 = vpop.permute.xlu0 %1427
  %1429 = vrot.lane.b32.xlu0 %v1405, 24
  %v1430 = vpop.permute.xlu0 %1429
  %1431 = vrot.lane.b32.xlu0 %v1408, 24
  %v1432 = vpop.permute.xlu0 %1431
  %1433 = vrot.lane.b32.xlu0 %v1413, 24
  %v1434 = vpop.permute.xlu0 %1433
  %1435 = vrot.lane.b32.xlu0 %v1416, 24
  %v1436 = vpop.permute.xlu0 %1435
  %vm1443 = vcmask 261312
  %1444 = vst.msk [vmem:[#allocation2] sm:$0xff] %vm1443, %v1426
  %1445 = vst.msk [vmem:[#allocation2 + $0x8] sm:$0xff] %vm1443, %v1428
  %1446 = vst.msk [vmem:[#allocation2 + $0x10] sm:$0xff] %vm1443, %v1430
  %1447 = vst.msk [vmem:[#allocation2 + $0x18] sm:$0xff] %vm1443, %v1432
  %1448 = vst.msk [vmem:[#allocation2 + $0x20] sm:$0xff] %vm1443, %v1434
  %1449 = vst.msk [vmem:[#allocation2 + $0x28] sm:$0xff] %vm1443, %v1436
  %v1450 = vld [vmem:[#allocation2] sm:$0xff]
  %v1451 = vld [vmem:[#allocation2 + $0x8] sm:$0xff]
  %v1452 = vld [vmem:[#allocation2 + $0x10] sm:$0xff]
  %v1453 = vld [vmem:[#allocation2 + $0x18] sm:$0xff]
  %v1454 = vld [vmem:[#allocation2 + $0x20] sm:$0xff]
  %v1455 = vld [vmem:[#allocation2 + $0x28] sm:$0xff]
  %v1456 = vpack.c.bf16 %v1451, %v1450
  %v1457 = vpack.c.bf16 %v1453, %v1452
  %v1458 = vpack.c.bf16 %v1455, %v1454
  %v1459 = vld [vmem:[%s7] sm:$0xf]
  %v1460 = vld [vmem:[%s7 + $0x4] sm:$0xf]
  %v1461 = vld [vmem:[%s7 + $0x8] sm:$0xf]
  %v1462 = vld [vmem:[%s7 + $0xc] sm:$0xf]
  %v1463 = vld [vmem:[%s8] sm:$0x1]
  %v1465 = vlaneseq
  %v1466 = vshrl.u32 %v1465, 7
  %v1467 = vsub.s32 0, %v1466
  %v1468 = vrot.slane %v1463, %v1467
  %v1474 = vunpack.c.l.b16 %v1459
  %v1475 = vunpack.c.l.b16 %v1460
  %v1476 = vunpack.c.l.b16 %v1461
  %v1477 = vunpack.c.l.b16 %v1462
  %v1478 = vpack.c.b16 %v1475, %v1474
  %v1479 = vpack.c.b16 %v1477, %v1476
  %v1483 = vsel %vm230, %v1456, 0
  %v1486 = vsel %vm230, %v1457, 0
  %v1489 = vsel %vm230, %v1458, 0
  %1491 = vmatprep.subr.bf16.mxu0 0
  %1492 = vmatpush1.bf16.msra.mxu0 0
  %1493 = vmatprep.subr.bf16.mxu0 0
  %1494 = vmatpush1.bf16.msra.mxu0 0
  %1495 = vmatprep.subr.bf16.mxu0 0
  %1496 = vmatpush1.bf16.msra.mxu0 0
  %1497 = vmatprep.subr.bf16.mxu0 0
  %1498 = vmatpush1.bf16.msra.mxu0 0
  %1499 = vmatprep.subr.bf16.mxu0 0
  %1500 = vmatpush1.bf16.msra.mxu0 0
  %1501 = vmatprep.subr.bf16.mxu0 0
  %1502 = vmatpush1.bf16.msra.mxu0 0
  %1503 = vmatprep.subr.bf16.mxu0 0
  %1504 = vmatpush1.bf16.msra.mxu0 %v1479
  %1505 = vmatprep.subr.bf16.mxu0 0
  %1506 = vmatpush1.bf16.msra.mxu0 %v1478
  %1507 = vmatprep.subr.bf16.mxu0 0
  %1508 = vmatpush2.bf16.msra.mxu0 0
  %1509 = vmatprep.subr.bf16.mxu0 0
  %1510 = vmatpush2.bf16.msra.mxu0 0
  %1511 = vmatprep.subr.bf16.mxu0 0
  %1512 = vmatpush2.bf16.msra.mxu0 0
  %1513 = vmatprep.subr.bf16.mxu0 0
  %1514 = vmatpush2.bf16.msra.mxu0 0
  %1515 = vmatprep.subr.bf16.mxu0 0
  %1516 = vmatpush2.bf16.msra.mxu0 0
  %1517 = vmatprep.subr.bf16.mxu0 0
  %1518 = vmatpush2.bf16.msra.mxu0 0
  %1519 = vmatprep.subr.bf16.mxu0 0
  %1520 = vmatpush2.bf16.msra.mxu0 0
  %1521 = vmatprep.subr.bf16.mxu0 0
  %1522 = vmatpush2.bf16.msra.mxu0 0
  %1523 = vmatprep.mubr.bf16.mxu0 0
  %1524 = vmatmul.mubr.bf16.gmra.mxu0 %v1483
  %v1525 = vpop.f32.mrf.mxu0
  %v1526 = vadd.f32 %v1468, %v1525
  %v1527 = vpop.f32.mrf.mxu0
  %v1528 = vpop.f32.mrf.mxu0
  %v1529 = vadd.f32 %v1468, %v1528
  %v1530 = vpop.f32.mrf.mxu0
  %1531 = vmatprep.mubr.bf16.mxu0 0
  %1532 = vmatmul.mubr.bf16.gmra.mxu0 %v1486
  %v1533 = vpop.f32.mrf.mxu0
  %v1534 = vadd.f32 %v1468, %v1533
  %v1535 = vpop.f32.mrf.mxu0
  %v1536 = vpop.f32.mrf.mxu0
  %v1537 = vadd.f32 %v1468, %v1536
  %v1538 = vpop.f32.mrf.mxu0
  %1539 = vmatprep.mubr.bf16.mxu0 0
  %1540 = vmatmul.mubr.bf16.gmra.mxu0 %v1489
  %v1541 = vpop.f32.mrf.mxu0
  %v1542 = vadd.f32 %v1468, %v1541
  %v1543 = vpop.f32.mrf.mxu0
  %v1544 = vpop.f32.mrf.mxu0
  %v1545 = vadd.f32 %v1468, %v1544
  %v1546 = vpop.f32.mrf.mxu0
  %1547 = vdwg.mxu0
  %v1548 = vld [vmem:[%s9] sm:$0x1]
  %v1550 = vlaneseq
  %v1551 = vshrl.u32 %v1550, 7
  %v1552 = vsub.s32 0, %v1551
  %v1553 = vrot.slane %v1548, %v1552
  %v1555 = vmul.f32 %v1553, %v1526
  %v1556 = vmul.f32 %v1553, %v1529
  %v1557 = vmul.f32 %v1553, %v1534
  %v1558 = vmul.f32 %v1553, %v1537
  %v1559 = vmul.f32 %v1553, %v1542
  %v1560 = vmul.f32 %v1553, %v1545
  %v1561 = vadd.f32 %v147, %v1555
  %v1562 = vadd.f32 %v150, %v1556
  %v1563 = vadd.f32 %v155, %v1557
  %v1564 = vadd.f32 %v158, %v1558
  %v1565 = vadd.f32 %v163, %v1559
  %v1566 = vadd.f32 %v166, %v1560
  %v1567 = vld [vmem:[%s10] sm:$0x1]
  %v1568 = vld [vmem:[%s11] sm:$0x1]
  %v1569 = vsel %vm230, %v1561, 0.0
  %1570 = vadd.xlane.f32.xlu0 %v1569
  %v1571 = vpop.xlane.xlu0 %1570
  %v1572 = vsel %vm230, %v1562, 0.0
  %1573 = vadd.xlane.f32.xlu0 %v1572
  %v1574 = vpop.xlane.xlu0 %1573
  %v1575 = vsel %vm230, %v1563, 0.0
  %1576 = vadd.xlane.f32.xlu0 %v1575
  %v1577 = vpop.xlane.xlu0 %1576
  %v1578 = vsel %vm230, %v1564, 0.0
  %1579 = vadd.xlane.f32.xlu0 %v1578
  %v1580 = vpop.xlane.xlu0 %1579
  %v1581 = vsel %vm230, %v1565, 0.0
  %1582 = vadd.xlane.f32.xlu0 %v1581
  %v1583 = vpop.xlane.xlu0 %1582
  %v1584 = vsel %vm230, %v1566, 0.0
  %1585 = vadd.xlane.f32.xlu0 %v1584
  %v1586 = vpop.xlane.xlu0 %1585
  %v1587 = vmul.f32 %v1571, %v249
  %v1588 = vmul.f32 %v1574, %v249
  %v1589 = vmul.f32 %v1577, %v249
  %v1590 = vmul.f32 %v1580, %v249
  %v1591 = vmul.f32 %v1583, %v249
  %v1592 = vmul.f32 %v1586, %v249
  %v1593 = vsub.f32 %v1561, %v1587
  %v1594 = vsub.f32 %v1562, %v1588
  %v1595 = vsub.f32 %v1563, %v1589
  %v1596 = vsub.f32 %v1564, %v1590
  %v1597 = vsub.f32 %v1565, %v1591
  %v1598 = vsub.f32 %v1566, %v1592
  %v1599 = vmul.f32 %v1593, %v1593
  %v1600 = vmul.f32 %v1594, %v1594
  %v1601 = vmul.f32 %v1595, %v1595
  %v1602 = vmul.f32 %v1596, %v1596
  %v1603 = vmul.f32 %v1597, %v1597
  %v1604 = vmul.f32 %v1598, %v1598
  %v1605 = vsel %vm230, %v1599, 0.0
  %1606 = vadd.xlane.f32.xlu0 %v1605
  %v1607 = vpop.xlane.xlu0 %1606
  %v1608 = vsel %vm230, %v1600, 0.0
  %1609 = vadd.xlane.f32.xlu0 %v1608
  %v1610 = vpop.xlane.xlu0 %1609
  %v1611 = vsel %vm230, %v1601, 0.0
  %1612 = vadd.xlane.f32.xlu0 %v1611
  %v1613 = vpop.xlane.xlu0 %1612
  %v1614 = vsel %vm230, %v1602, 0.0
  %1615 = vadd.xlane.f32.xlu0 %v1614
  %v1616 = vpop.xlane.xlu0 %1615
  %v1617 = vsel %vm230, %v1603, 0.0
  %1618 = vadd.xlane.f32.xlu0 %v1617
  %v1619 = vpop.xlane.xlu0 %1618
  %v1620 = vsel %vm230, %v1604, 0.0
  %1621 = vadd.xlane.f32.xlu0 %v1620
  %v1622 = vpop.xlane.xlu0 %1621
  %v1623 = vmul.f32 %v1607, %v249
  %v1624 = vmul.f32 %v1610, %v249
  %v1625 = vmul.f32 %v1613, %v249
  %v1626 = vmul.f32 %v1616, %v249
  %v1627 = vmul.f32 %v1619, %v249
  %v1628 = vmul.f32 %v1622, %v249
  %v1629 = vadd.f32 %v1623, 1e-06
  %v1630 = vadd.f32 %v1624, 1e-06
  %v1631 = vadd.f32 %v1625, 1e-06
  %v1632 = vadd.f32 %v1626, 1e-06
  %v1633 = vadd.f32 %v1627, 1e-06
  %v1634 = vadd.f32 %v1628, 1e-06
  %v1635 = vrsqrt.pop %v1629
  %v1636 = vrsqrt.pop %v1630
  %v1637 = vrsqrt.pop %v1631
  %v1638 = vrsqrt.pop %v1632
  %v1639 = vrsqrt.pop %v1633
  %v1640 = vrsqrt.pop %v1634
  %v1641 = vmul.f32 %v1593, %v1635
  %v1642 = vmul.f32 %v1594, %v1636
  %v1643 = vmul.f32 %v1595, %v1637
  %v1644 = vmul.f32 %v1596, %v1638
  %v1645 = vmul.f32 %v1597, %v1639
  %v1646 = vmul.f32 %v1598, %v1640
  %v1648 = vlaneseq
  %v1649 = vshrl.u32 %v1648, 7
  %v1650 = vsub.s32 0, %v1649
  %v1651 = vrot.slane %v1567, %v1650
  %v1653 = vmul.f32 %v1641, %v1651
  %v1654 = vmul.f32 %v1642, %v1651
  %v1655 = vmul.f32 %v1643, %v1651
  %v1656 = vmul.f32 %v1644, %v1651
  %v1657 = vmul.f32 %v1645, %v1651
  %v1658 = vmul.f32 %v1646, %v1651
  %v1660 = vlaneseq
  %v1661 = vshrl.u32 %v1660, 7
  %v1662 = vsub.s32 0, %v1661
  %v1663 = vrot.slane %v1568, %v1662
  %v1665 = vadd.f32 %v1653, %v1663
  %v1666 = vadd.f32 %v1654, %v1663
  %v1667 = vadd.f32 %v1655, %v1663
  %v1668 = vadd.f32 %v1656, %v1663
  %v1669 = vadd.f32 %v1657, %v1663
  %v1670 = vadd.f32 %v1658, %v1663
  %v1671 = vpack.c.bf16 %v1666, %v1665
  %v1672 = vpack.c.bf16 %v1668, %v1667
  %v1673 = vpack.c.bf16 %v1670, %v1669
  %v1674 = vld [vmem:[%s12] sm:$0xf]
  %v1675 = vld [vmem:[%s12 + $0x4] sm:$0xf]
  %v1676 = vld [vmem:[%s12 + $0x8] sm:$0xf]
  %v1677 = vld [vmem:[%s12 + $0xc] sm:$0xf]
  %v1678 = vld [vmem:[%s13] sm:$0x1]
  %v1680 = vlaneseq
  %v1681 = vshrl.u32 %v1680, 7
  %v1682 = vsub.s32 0, %v1681
  %v1683 = vrot.slane %v1678, %v1682
  %v1689 = vunpack.c.l.b16 %v1674
  %v1690 = vunpack.c.l.b16 %v1675
  %v1691 = vunpack.c.l.b16 %v1676
  %v1692 = vunpack.c.l.b16 %v1677
  %v1693 = vpack.c.b16 %v1690, %v1689
  %v1694 = vpack.c.b16 %v1692, %v1691
  %v1698 = vsel %vm230, %v1671, 0
  %v1701 = vsel %vm230, %v1672, 0
  %v1704 = vsel %vm230, %v1673, 0
  %1706 = vmatprep.subr.bf16.mxu0 0
  %1707 = vmatpush1.bf16.msra.mxu0 0
  %1708 = vmatprep.subr.bf16.mxu0 0
  %1709 = vmatpush1.bf16.msra.mxu0 0
  %1710 = vmatprep.subr.bf16.mxu0 0
  %1711 = vmatpush1.bf16.msra.mxu0 0
  %1712 = vmatprep.subr.bf16.mxu0 0
  %1713 = vmatpush1.bf16.msra.mxu0 0
  %1714 = vmatprep.subr.bf16.mxu0 0
  %1715 = vmatpush1.bf16.msra.mxu0 0
  %1716 = vmatprep.subr.bf16.mxu0 0
  %1717 = vmatpush1.bf16.msra.mxu0 0
  %1718 = vmatprep.subr.bf16.mxu0 0
  %1719 = vmatpush1.bf16.msra.mxu0 %v1694
  %1720 = vmatprep.subr.bf16.mxu0 0
  %1721 = vmatpush1.bf16.msra.mxu0 %v1693
  %1722 = vmatprep.subr.bf16.mxu0 0
  %1723 = vmatpush2.bf16.msra.mxu0 0
  %1724 = vmatprep.subr.bf16.mxu0 0
  %1725 = vmatpush2.bf16.msra.mxu0 0
  %1726 = vmatprep.subr.bf16.mxu0 0
  %1727 = vmatpush2.bf16.msra.mxu0 0
  %1728 = vmatprep.subr.bf16.mxu0 0
  %1729 = vmatpush2.bf16.msra.mxu0 0
  %1730 = vmatprep.subr.bf16.mxu0 0
  %1731 = vmatpush2.bf16.msra.mxu0 0
  %1732 = vmatprep.subr.bf16.mxu0 0
  %1733 = vmatpush2.bf16.msra.mxu0 0
  %1734 = vmatprep.subr.bf16.mxu0 0
  %1735 = vmatpush2.bf16.msra.mxu0 0
  %1736 = vmatprep.subr.bf16.mxu0 0
  %1737 = vmatpush2.bf16.msra.mxu0 0
  %1738 = vmatprep.mubr.bf16.mxu0 0
  %1739 = vmatmul.mubr.bf16.gmra.mxu0 %v1698
  %v1740 = vpop.f32.mrf.mxu0
  %v1741 = vadd.f32 %v1683, %v1740
  %v1742 = vpop.f32.mrf.mxu0
  %v1743 = vpop.f32.mrf.mxu0
  %v1744 = vadd.f32 %v1683, %v1743
  %v1745 = vpop.f32.mrf.mxu0
  %1746 = vmatprep.mubr.bf16.mxu0 0
  %1747 = vmatmul.mubr.bf16.gmra.mxu0 %v1701
  %v1748 = vpop.f32.mrf.mxu0
  %v1749 = vadd.f32 %v1683, %v1748
  %v1750 = vpop.f32.mrf.mxu0
  %v1751 = vpop.f32.mrf.mxu0
  %v1752 = vadd.f32 %v1683, %v1751
  %v1753 = vpop.f32.mrf.mxu0
  %1754 = vmatprep.mubr.bf16.mxu0 0
  %1755 = vmatmul.mubr.bf16.gmra.mxu0 %v1704
  %v1756 = vpop.f32.mrf.mxu0
  %v1757 = vadd.f32 %v1683, %v1756
  %v1758 = vpop.f32.mrf.mxu0
  %v1759 = vpop.f32.mrf.mxu0
  %v1760 = vadd.f32 %v1683, %v1759
  %v1761 = vpop.f32.mrf.mxu0
  %1762 = vdwg.mxu0
  %v1763 = vxor.u32 %v1741, 2147483648
  %v1764 = vxor.u32 %v1744, 2147483648
  %v1765 = vxor.u32 %v1749, 2147483648
  %v1766 = vxor.u32 %v1752, 2147483648
  %v1767 = vxor.u32 %v1757, 2147483648
  %v1768 = vxor.u32 %v1760, 2147483648
  %v1769 = vmul.f32 %v1763, 1.442695
  %v1770 = vpow.pop %v1769
  %v1771 = vmul.f32 %v1764, 1.442695
  %v1772 = vpow.pop %v1771
  %v1773 = vmul.f32 %v1765, 1.442695
  %v1774 = vpow.pop %v1773
  %v1775 = vmul.f32 %v1766, 1.442695
  %v1776 = vpow.pop %v1775
  %v1777 = vmul.f32 %v1767, 1.442695
  %v1778 = vpow.pop %v1777
  %v1779 = vmul.f32 %v1768, 1.442695
  %v1780 = vpow.pop %v1779
  %v1781 = vadd.f32 %v1770, 1.0
  %v1782 = vadd.f32 %v1772, 1.0
  %v1783 = vadd.f32 %v1774, 1.0
  %v1784 = vadd.f32 %v1776, 1.0
  %v1785 = vadd.f32 %v1778, 1.0
  %v1786 = vadd.f32 %v1780, 1.0
  %v1787 = vrcp.pop %v1781
  %v1788 = vmul.f32 1.0, %v1787
  %v1789 = vrcp.pop %v1782
  %v1790 = vmul.f32 1.0, %v1789
  %v1791 = vrcp.pop %v1783
  %v1792 = vmul.f32 1.0, %v1791
  %v1793 = vrcp.pop %v1784
  %v1794 = vmul.f32 1.0, %v1793
  %v1795 = vrcp.pop %v1785
  %v1796 = vmul.f32 1.0, %v1795
  %v1797 = vrcp.pop %v1786
  %v1798 = vmul.f32 1.0, %v1797
  %v1799 = vmul.f32 %v1741, %v1788
  %v1800 = vmul.f32 %v1744, %v1790
  %v1801 = vmul.f32 %v1749, %v1792
  %v1802 = vmul.f32 %v1752, %v1794
  %v1803 = vmul.f32 %v1757, %v1796
  %v1804 = vmul.f32 %v1760, %v1798
  %1811 = vrot.lane.b32.xlu0 %v1741, 64
  %v1812 = vpop.permute.xlu0 %1811
  %1813 = vrot.lane.b32.xlu0 %v1744, 64
  %v1814 = vpop.permute.xlu0 %1813
  %1815 = vrot.lane.b32.xlu0 %v1749, 64
  %v1816 = vpop.permute.xlu0 %1815
  %1817 = vrot.lane.b32.xlu0 %v1752, 64
  %v1818 = vpop.permute.xlu0 %1817
  %1819 = vrot.lane.b32.xlu0 %v1757, 64
  %v1820 = vpop.permute.xlu0 %1819
  %1821 = vrot.lane.b32.xlu0 %v1760, 64
  %v1822 = vpop.permute.xlu0 %1821
  %v1829 = vmul.f32 %v1799, %v1812
  %v1830 = vmul.f32 %v1800, %v1814
  %v1831 = vmul.f32 %v1801, %v1816
  %v1832 = vmul.f32 %v1802, %v1818
  %v1833 = vmul.f32 %v1803, %v1820
  %v1834 = vmul.f32 %v1804, %v1822
  %v1835 = vpack.c.bf16 %v1830, %v1829
  %v1836 = vpack.c.bf16 %v1832, %v1831
  %v1837 = vpack.c.bf16 %v1834, %v1833
  %v1838 = vld [vmem:[%s14] sm:$0xf]
  %v1839 = vld [vmem:[%s14 + $0x4] sm:$0xf]
  %v1840 = vld [vmem:[%s14 + $0x8] sm:$0xf]
  %v1841 = vld [vmem:[%s14 + $0xc] sm:$0xf]
  %v1842 = vld [vmem:[%s14 + $0x10] sm:$0xf]
  %v1843 = vld [vmem:[%s14 + $0x14] sm:$0xf]
  %v1844 = vld [vmem:[%s14 + $0x18] sm:$0xf]
  %v1845 = vld [vmem:[%s14 + $0x1c] sm:$0xf]
  %v1846 = vld [vmem:[%s15] sm:$0x1]
  %v1848 = vlaneseq
  %v1849 = vshrl.u32 %v1848, 7
  %v1850 = vsub.s32 0, %v1849
  %v1851 = vrot.slane %v1846, %v1850
  %v1861 = vunpack.c.l.b16 %v1838
  %v1862 = vunpack.c.l.b16 %v1839
  %v1863 = vunpack.c.l.b16 %v1840
  %v1864 = vunpack.c.l.b16 %v1841
  %v1865 = vunpack.c.l.b16 %v1842
  %v1866 = vunpack.c.l.b16 %v1843
  %v1867 = vunpack.c.l.b16 %v1844
  %v1868 = vunpack.c.l.b16 %v1845
  %v1869 = vpack.c.b16 %v1862, %v1861
  %v1870 = vpack.c.b16 %v1864, %v1863
  %v1871 = vpack.c.b16 %v1866, %v1865
  %v1872 = vpack.c.b16 %v1868, %v1867
  %vm1877 = vcmask 523264
  %v1879 = vsel %vm1877, %v1835, 0
  %v1882 = vsel %vm1877, %v1836, 0
  %v1885 = vsel %vm1877, %v1837, 0
  %1887 = vmatprep.subr.bf16.mxu0 0
  %1888 = vmatpush1.bf16.msra.mxu0 0
  %1889 = vmatprep.subr.bf16.mxu0 0
  %1890 = vmatpush1.bf16.msra.mxu0 0
  %1891 = vmatprep.subr.bf16.mxu0 0
  %1892 = vmatpush1.bf16.msra.mxu0 0
  %1893 = vmatprep.subr.bf16.mxu0 0
  %1894 = vmatpush1.bf16.msra.mxu0 0
  %1895 = vmatprep.subr.bf16.mxu0 0
  %1896 = vmatpush1.bf16.msra.mxu0 %v1872
  %1897 = vmatprep.subr.bf16.mxu0 0
  %1898 = vmatpush1.bf16.msra.mxu0 %v1871
  %1899 = vmatprep.subr.bf16.mxu0 0
  %1900 = vmatpush1.bf16.msra.mxu0 %v1870
  %1901 = vmatprep.subr.bf16.mxu0 0
  %1902 = vmatpush1.bf16.msra.mxu0 %v1869
  %1903 = vmatprep.subr.bf16.mxu0 0
  %1904 = vmatpush2.bf16.msra.mxu0 0
  %1905 = vmatprep.subr.bf16.mxu0 0
  %1906 = vmatpush2.bf16.msra.mxu0 0
  %1907 = vmatprep.subr.bf16.mxu0 0
  %1908 = vmatpush2.bf16.msra.mxu0 0
  %1909 = vmatprep.subr.bf16.mxu0 0
  %1910 = vmatpush2.bf16.msra.mxu0 0
  %1911 = vmatprep.subr.bf16.mxu0 0
  %1912 = vmatpush2.bf16.msra.mxu0 0
  %1913 = vmatprep.subr.bf16.mxu0 0
  %1914 = vmatpush2.bf16.msra.mxu0 0
  %1915 = vmatprep.subr.bf16.mxu0 0
  %1916 = vmatpush2.bf16.msra.mxu0 0
  %1917 = vmatprep.subr.bf16.mxu0 0
  %1918 = vmatpush2.bf16.msra.mxu0 0
  %1919 = vmatprep.mubr.bf16.mxu0 0
  %1920 = vmatmul.mubr.bf16.gmra.mxu0 %v1879
  %v1921 = vpop.f32.mrf.mxu0
  %v1922 = vadd.f32 %v1851, %v1921
  %v1923 = vpop.f32.mrf.mxu0
  %v1924 = vpop.f32.mrf.mxu0
  %v1925 = vadd.f32 %v1851, %v1924
  %v1926 = vpop.f32.mrf.mxu0
  %1927 = vmatprep.mubr.bf16.mxu0 0
  %1928 = vmatmul.mubr.bf16.gmra.mxu0 %v1882
  %v1929 = vpop.f32.mrf.mxu0
  %v1930 = vadd.f32 %v1851, %v1929
  %v1931 = vpop.f32.mrf.mxu0
  %v1932 = vpop.f32.mrf.mxu0
  %v1933 = vadd.f32 %v1851, %v1932
  %v1934 = vpop.f32.mrf.mxu0
  %1935 = vmatprep.mubr.bf16.mxu0 0
  %1936 = vmatmul.mubr.bf16.gmra.mxu0 %v1885
  %v1937 = vpop.f32.mrf.mxu0
  %v1938 = vadd.f32 %v1851, %v1937
  %v1939 = vpop.f32.mrf.mxu0
  %v1940 = vpop.f32.mrf.mxu0
  %v1941 = vadd.f32 %v1851, %v1940
  %v1942 = vpop.f32.mrf.mxu0
  %1943 = vdwg.mxu0
  %v1944 = vld [vmem:[%s16] sm:$0x1]
  %v1946 = vlaneseq
  %v1947 = vshrl.u32 %v1946, 7
  %v1948 = vsub.s32 0, %v1947
  %v1949 = vrot.slane %v1944, %v1948
  %v1951 = vmul.f32 %v1949, %v1922
  %v1952 = vmul.f32 %v1949, %v1925
  %v1953 = vmul.f32 %v1949, %v1930
  %v1954 = vmul.f32 %v1949, %v1933
  %v1955 = vmul.f32 %v1949, %v1938
  %v1956 = vmul.f32 %v1949, %v1941
  %v1957 = vadd.f32 %v1561, %v1951
  %v1958 = vadd.f32 %v1562, %v1952
  %v1959 = vadd.f32 %v1563, %v1953
  %v1960 = vadd.f32 %v1564, %v1954
  %v1961 = vadd.f32 %v1565, %v1955
  %v1962 = vadd.f32 %v1566, %v1956
  %s1963 = scalar_lea.vmem %s3, 1
  %v1964 = vld [vmem:[%s1963] sm:$0x1]
  %s1965 = scalar_lea.vmem %s4, 1
  %v1966 = vld [vmem:[%s1965] sm:$0x1]
  %v1967 = vsel %vm230, %v1957, 0.0
  %1968 = vadd.xlane.f32.xlu0 %v1967
  %v1969 = vpop.xlane.xlu0 %1968
  %v1970 = vsel %vm230, %v1958, 0.0
  %1971 = vadd.xlane.f32.xlu0 %v1970
  %v1972 = vpop.xlane.xlu0 %1971
  %v1973 = vsel %vm230, %v1959, 0.0
  %1974 = vadd.xlane.f32.xlu0 %v1973
  %v1975 = vpop.xlane.xlu0 %1974
  %v1976 = vsel %vm230, %v1960, 0.0
  %1977 = vadd.xlane.f32.xlu0 %v1976
  %v1978 = vpop.xlane.xlu0 %1977
  %v1979 = vsel %vm230, %v1961, 0.0
  %1980 = vadd.xlane.f32.xlu0 %v1979
  %v1981 = vpop.xlane.xlu0 %1980
  %v1982 = vsel %vm230, %v1962, 0.0
  %1983 = vadd.xlane.f32.xlu0 %v1982
  %v1984 = vpop.xlane.xlu0 %1983
  %v1985 = vmul.f32 %v1969, %v249
  %v1986 = vmul.f32 %v1972, %v249
  %v1987 = vmul.f32 %v1975, %v249
  %v1988 = vmul.f32 %v1978, %v249
  %v1989 = vmul.f32 %v1981, %v249
  %v1990 = vmul.f32 %v1984, %v249
  %v1991 = vsub.f32 %v1957, %v1985
  %v1992 = vsub.f32 %v1958, %v1986
  %v1993 = vsub.f32 %v1959, %v1987
  %v1994 = vsub.f32 %v1960, %v1988
  %v1995 = vsub.f32 %v1961, %v1989
  %v1996 = vsub.f32 %v1962, %v1990
  %v1997 = vmul.f32 %v1991, %v1991
  %v1998 = vmul.f32 %v1992, %v1992
  %v1999 = vmul.f32 %v1993, %v1993
  %v2000 = vmul.f32 %v1994, %v1994
  %v2001 = vmul.f32 %v1995, %v1995
  %v2002 = vmul.f32 %v1996, %v1996
  %v2003 = vsel %vm230, %v1997, 0.0
  %2004 = vadd.xlane.f32.xlu0 %v2003
  %v2005 = vpop.xlane.xlu0 %2004
  %v2006 = vsel %vm230, %v1998, 0.0
  %2007 = vadd.xlane.f32.xlu0 %v2006
  %v2008 = vpop.xlane.xlu0 %2007
  %v2009 = vsel %vm230, %v1999, 0.0
  %2010 = vadd.xlane.f32.xlu0 %v2009
  %v2011 = vpop.xlane.xlu0 %2010
  %v2012 = vsel %vm230, %v2000, 0.0
  %2013 = vadd.xlane.f32.xlu0 %v2012
  %v2014 = vpop.xlane.xlu0 %2013
  %v2015 = vsel %vm230, %v2001, 0.0
  %2016 = vadd.xlane.f32.xlu0 %v2015
  %v2017 = vpop.xlane.xlu0 %2016
  %v2018 = vsel %vm230, %v2002, 0.0
  %2019 = vadd.xlane.f32.xlu0 %v2018
  %v2020 = vpop.xlane.xlu0 %2019
  %v2021 = vmul.f32 %v2005, %v249
  %v2022 = vmul.f32 %v2008, %v249
  %v2023 = vmul.f32 %v2011, %v249
  %v2024 = vmul.f32 %v2014, %v249
  %v2025 = vmul.f32 %v2017, %v249
  %v2026 = vmul.f32 %v2020, %v249
  %v2027 = vadd.f32 %v2021, 1e-06
  %v2028 = vadd.f32 %v2022, 1e-06
  %v2029 = vadd.f32 %v2023, 1e-06
  %v2030 = vadd.f32 %v2024, 1e-06
  %v2031 = vadd.f32 %v2025, 1e-06
  %v2032 = vadd.f32 %v2026, 1e-06
  %v2033 = vrsqrt.pop %v2027
  %v2034 = vrsqrt.pop %v2028
  %v2035 = vrsqrt.pop %v2029
  %v2036 = vrsqrt.pop %v2030
  %v2037 = vrsqrt.pop %v2031
  %v2038 = vrsqrt.pop %v2032
  %v2039 = vmul.f32 %v1991, %v2033
  %v2040 = vmul.f32 %v1992, %v2034
  %v2041 = vmul.f32 %v1993, %v2035
  %v2042 = vmul.f32 %v1994, %v2036
  %v2043 = vmul.f32 %v1995, %v2037
  %v2044 = vmul.f32 %v1996, %v2038
  %v2046 = vlaneseq
  %v2047 = vshrl.u32 %v2046, 7
  %v2048 = vsub.s32 0, %v2047
  %v2049 = vrot.slane %v1964, %v2048
  %v2051 = vmul.f32 %v2039, %v2049
  %v2052 = vmul.f32 %v2040, %v2049
  %v2053 = vmul.f32 %v2041, %v2049
  %v2054 = vmul.f32 %v2042, %v2049
  %v2055 = vmul.f32 %v2043, %v2049
  %v2056 = vmul.f32 %v2044, %v2049
  %v2058 = vlaneseq
  %v2059 = vshrl.u32 %v2058, 7
  %v2060 = vsub.s32 0, %v2059
  %v2061 = vrot.slane %v1966, %v2060
  %v2063 = vadd.f32 %v2051, %v2061
  %v2064 = vadd.f32 %v2052, %v2061
  %v2065 = vadd.f32 %v2053, %v2061
  %v2066 = vadd.f32 %v2054, %v2061
  %v2067 = vadd.f32 %v2055, %v2061
  %v2068 = vadd.f32 %v2056, %v2061
  %v2069 = vpack.c.bf16 %v2064, %v2063
  %v2070 = vpack.c.bf16 %v2066, %v2065
  %v2071 = vpack.c.bf16 %v2068, %v2067
  %s2072 = scalar_lea.vmem %s5, 16
  %v2073 = vld [vmem:[%s2072] sm:$0xf]
  %v2074 = vld [vmem:[%s2072 + $0x4] sm:$0xf]
  %v2075 = vld [vmem:[%s2072 + $0x8] sm:$0xf]
  %v2076 = vld [vmem:[%s2072 + $0xc] sm:$0xf]
  %s2077 = scalar_lea.vmem %s6, 1
  %v2078 = vld [vmem:[%s2077] sm:$0x1]
  %v2080 = vlaneseq
  %v2081 = vshrl.u32 %v2080, 7
  %v2082 = vsub.s32 0, %v2081
  %v2083 = vrot.slane %v2078, %v2082
  %v2089 = vunpack.c.l.b16 %v2073
  %v2090 = vunpack.c.l.b16 %v2074
  %v2091 = vunpack.c.l.b16 %v2075
  %v2092 = vunpack.c.l.b16 %v2076
  %v2093 = vpack.c.b16 %v2090, %v2089
  %v2094 = vpack.c.b16 %v2092, %v2091
  %v2098 = vsel %vm230, %v2069, 0
  %v2101 = vsel %vm230, %v2070, 0
  %v2104 = vsel %vm230, %v2071, 0
  %2106 = vmatprep.subr.bf16.mxu0 0
  %2107 = vmatpush1.bf16.msra.mxu0 0
  %2108 = vmatprep.subr.bf16.mxu0 0
  %2109 = vmatpush1.bf16.msra.mxu0 0
  %2110 = vmatprep.subr.bf16.mxu0 0
  %2111 = vmatpush1.bf16.msra.mxu0 0
  %2112 = vmatprep.subr.bf16.mxu0 0
  %2113 = vmatpush1.bf16.msra.mxu0 0
  %2114 = vmatprep.subr.bf16.mxu0 0
  %2115 = vmatpush1.bf16.msra.mxu0 0
  %2116 = vmatprep.subr.bf16.mxu0 0
  %2117 = vmatpush1.bf16.msra.mxu0 0
  %2118 = vmatprep.subr.bf16.mxu0 0
  %2119 = vmatpush1.bf16.msra.mxu0 %v2094
  %2120 = vmatprep.subr.bf16.mxu0 0
  %2121 = vmatpush1.bf16.msra.mxu0 %v2093
  %2122 = vmatprep.subr.bf16.mxu0 0
  %2123 = vmatpush2.bf16.msra.mxu0 0
  %2124 = vmatprep.subr.bf16.mxu0 0
  %2125 = vmatpush2.bf16.msra.mxu0 0
  %2126 = vmatprep.subr.bf16.mxu0 0
  %2127 = vmatpush2.bf16.msra.mxu0 0
  %2128 = vmatprep.subr.bf16.mxu0 0
  %2129 = vmatpush2.bf16.msra.mxu0 0
  %2130 = vmatprep.subr.bf16.mxu0 0
  %2131 = vmatpush2.bf16.msra.mxu0 0
  %2132 = vmatprep.subr.bf16.mxu0 0
  %2133 = vmatpush2.bf16.msra.mxu0 0
  %2134 = vmatprep.subr.bf16.mxu0 0
  %2135 = vmatpush2.bf16.msra.mxu0 0
  %2136 = vmatprep.subr.bf16.mxu0 0
  %2137 = vmatpush2.bf16.msra.mxu0 0
  %2138 = vmatprep.mubr.bf16.mxu0 0
  %2139 = vmatmul.mubr.bf16.gmra.mxu0 %v2098
  %v2140 = vpop.f32.mrf.mxu0
  %v2141 = vadd.f32 %v2083, %v2140
  %v2142 = vpop.f32.mrf.mxu0
  %v2143 = vpop.f32.mrf.mxu0
  %v2144 = vadd.f32 %v2083, %v2143
  %v2145 = vpop.f32.mrf.mxu0
  %2146 = vmatprep.mubr.bf16.mxu0 0
  %2147 = vmatmul.mubr.bf16.gmra.mxu0 %v2101
  %v2148 = vpop.f32.mrf.mxu0
  %v2149 = vadd.f32 %v2083, %v2148
  %v2150 = vpop.f32.mrf.mxu0
  %v2151 = vpop.f32.mrf.mxu0
  %v2152 = vadd.f32 %v2083, %v2151
  %v2153 = vpop.f32.mrf.mxu0
  %2154 = vmatprep.mubr.bf16.mxu0 0
  %2155 = vmatmul.mubr.bf16.gmra.mxu0 %v2104
  %v2156 = vpop.f32.mrf.mxu0
  %v2157 = vadd.f32 %v2083, %v2156
  %v2158 = vpop.f32.mrf.mxu0
  %v2159 = vpop.f32.mrf.mxu0
  %v2160 = vadd.f32 %v2083, %v2159
  %v2161 = vpop.f32.mrf.mxu0
  %2162 = vdwg.mxu0
  %v2163 = vpack.c.bf16 %v2144, %v2141
  %v2164 = vpack.c.bf16 %v2152, %v2149
  %v2165 = vpack.c.bf16 %v2160, %v2157
  %2169 = vrot.lane.b32.xlu0 %v2163, 96
  %v2170 = vpop.permute.xlu0 %2169
  %2171 = vrot.lane.b32.xlu0 %v2164, 96
  %v2172 = vpop.permute.xlu0 %2171
  %2173 = vrot.lane.b32.xlu0 %v2165, 96
  %v2174 = vpop.permute.xlu0 %2173
  %v2176 = vsel %vm438, %v2163, 0
  %v2179 = vsel %vm438, %v2164, 0
  %v2182 = vsel %vm438, %v2165, 0
  %v2185 = vsel %vm438, %v2170, 0
  %v2188 = vsel %vm438, %v2172, 0
  %v2191 = vsel %vm438, %v2174, 0
  %2193 = vmatprep.subr.bf16.mxu0 0
  %2194 = vmatpush1.bf16.xpose.msra.mxu0 0
  %2195 = vmatprep.subr.bf16.mxu0 0
  %2196 = vmatpush1.bf16.xpose.msra.mxu0 0
  %2197 = vmatprep.subr.bf16.mxu0 0
  %2198 = vmatpush1.bf16.xpose.msra.mxu0 0
  %2199 = vmatprep.subr.bf16.mxu0 0
  %2200 = vmatpush1.bf16.xpose.msra.mxu0 0
  %2201 = vmatprep.subr.bf16.mxu0 0
  %2202 = vmatpush1.bf16.xpose.msra.mxu0 0
  %2203 = vmatprep.subr.bf16.mxu0 0
  %2204 = vmatpush1.bf16.xpose.msra.mxu0 %v2191
  %2205 = vmatprep.subr.bf16.mxu0 0
  %2206 = vmatpush1.bf16.xpose.msra.mxu0 %v2188
  %2207 = vmatprep.subr.bf16.mxu0 0
  %2208 = vmatpush1.bf16.xpose.msra.mxu0 %v2185
  %2209 = vmatprep.subr.bf16.mxu0 0
  %2210 = vmatpush2.bf16.xpose.msra.mxu0 0
  %2211 = vmatprep.subr.bf16.mxu0 0
  %2212 = vmatpush2.bf16.xpose.msra.mxu0 0
  %2213 = vmatprep.subr.bf16.mxu0 0
  %2214 = vmatpush2.bf16.xpose.msra.mxu0 0
  %2215 = vmatprep.subr.bf16.mxu0 0
  %2216 = vmatpush2.bf16.xpose.msra.mxu0 0
  %2217 = vmatprep.subr.bf16.mxu0 0
  %2218 = vmatpush2.bf16.xpose.msra.mxu0 0
  %2219 = vmatprep.subr.bf16.mxu0 0
  %2220 = vmatpush2.bf16.xpose.msra.mxu0 0
  %2221 = vmatprep.subr.bf16.mxu0 0
  %2222 = vmatpush2.bf16.xpose.msra.mxu0 0
  %2223 = vmatprep.subr.bf16.mxu0 0
  %2224 = vmatpush2.bf16.xpose.msra.mxu0 0
  %2225 = vmatprep.mubr.bf16.mxu0 0
  %2226 = vmatmul.mubr.bf16.gmra.mxu0 %v2176
  %v2227 = vpop.f32.mrf.mxu0
  %v2228 = vadd.f32 %v222, %v2227
  %v2229 = vpop.f32.mrf.mxu0
  %v2230 = vpop.f32.mrf.mxu0
  %v2231 = vadd.f32 %v223, %v2230
  %v2232 = vpop.f32.mrf.mxu0
  %2233 = vmatprep.mubr.bf16.mxu0 0
  %2234 = vmatmul.mubr.bf16.gmra.mxu0 %v2179
  %v2235 = vpop.f32.mrf.mxu0
  %v2236 = vadd.f32 %v224, %v2235
  %v2237 = vpop.f32.mrf.mxu0
  %v2238 = vpop.f32.mrf.mxu0
  %v2239 = vadd.f32 %v225, %v2238
  %v2240 = vpop.f32.mrf.mxu0
  %2241 = vmatprep.mubr.bf16.mxu0 0
  %2242 = vmatmul.mubr.bf16.gmra.mxu0 %v2182
  %v2243 = vpop.f32.mrf.mxu0
  %v2244 = vadd.f32 %v226, %v2243
  %v2245 = vpop.f32.mrf.mxu0
  %v2246 = vpop.f32.mrf.mxu0
  %v2247 = vadd.f32 %v227, %v2246
  %v2248 = vpop.f32.mrf.mxu0
  %2249 = vdwg.mxu0
  %v2250 = vsel %vm102, %v2228, -inf
  %2251 = vmax.xlane.f32.xlu0 %v2250
  %v2252 = vpop.xlane.xlu0 %2251
  %v2253 = vsel %vm102, %v2231, -inf
  %2254 = vmax.xlane.f32.xlu0 %v2253
  %v2255 = vpop.xlane.xlu0 %2254
  %v2256 = vsel %vm102, %v2236, -inf
  %2257 = vmax.xlane.f32.xlu0 %v2256
  %v2258 = vpop.xlane.xlu0 %2257
  %v2259 = vsel %vm102, %v2239, -inf
  %2260 = vmax.xlane.f32.xlu0 %v2259
  %v2261 = vpop.xlane.xlu0 %2260
  %v2262 = vsel %vm102, %v2244, -inf
  %2263 = vmax.xlane.f32.xlu0 %v2262
  %v2264 = vpop.xlane.xlu0 %2263
  %v2265 = vsel %vm102, %v2247, -inf
  %2266 = vmax.xlane.f32.xlu0 %v2265
  %v2267 = vpop.xlane.xlu0 %2266
  %v2268 = vsub.f32 %v2228, %v2252
  %v2269 = vsub.f32 %v2231, %v2255
  %v2270 = vsub.f32 %v2236, %v2258
  %v2271 = vsub.f32 %v2239, %v2261
  %v2272 = vsub.f32 %v2244, %v2264
  %v2273 = vsub.f32 %v2247, %v2267
  %v2274 = vmul.f32 %v2268, 1.442695
  %v2275 = vpow.pop %v2274
  %v2276 = vmul.f32 %v2269, 1.442695
  %v2277 = vpow.pop %v2276
  %v2278 = vmul.f32 %v2270, 1.442695
  %v2279 = vpow.pop %v2278
  %v2280 = vmul.f32 %v2271, 1.442695
  %v2281 = vpow.pop %v2280
  %v2282 = vmul.f32 %v2272, 1.442695
  %v2283 = vpow.pop %v2282
  %v2284 = vmul.f32 %v2273, 1.442695
  %v2285 = vpow.pop %v2284
  %v2286 = vsel %vm102, %v2275, 0.0
  %2287 = vadd.xlane.f32.xlu0 %v2286
  %v2288 = vpop.xlane.xlu0 %2287
  %v2289 = vsel %vm102, %v2277, 0.0
  %2290 = vadd.xlane.f32.xlu0 %v2289
  %v2291 = vpop.xlane.xlu0 %2290
  %v2292 = vsel %vm102, %v2279, 0.0
  %2293 = vadd.xlane.f32.xlu0 %v2292
  %v2294 = vpop.xlane.xlu0 %2293
  %v2295 = vsel %vm102, %v2281, 0.0
  %2296 = vadd.xlane.f32.xlu0 %v2295
  %v2297 = vpop.xlane.xlu0 %2296
  %v2298 = vsel %vm102, %v2283, 0.0
  %2299 = vadd.xlane.f32.xlu0 %v2298
  %v2300 = vpop.xlane.xlu0 %2299
  %v2301 = vsel %vm102, %v2285, 0.0
  %2302 = vadd.xlane.f32.xlu0 %v2301
  %v2303 = vpop.xlane.xlu0 %2302
  %v2304 = vrcp.pop %v2288
  %v2305 = vrcp.pop %v2291
  %v2306 = vrcp.pop %v2294
  %v2307 = vrcp.pop %v2297
  %v2308 = vrcp.pop %v2300
  %v2309 = vrcp.pop %v2303
  %v2310 = vmul.f32 %v2275, %v2304
  %v2311 = vmul.f32 %v2277, %v2305
  %v2312 = vmul.f32 %v2279, %v2306
  %v2313 = vmul.f32 %v2281, %v2307
  %v2314 = vmul.f32 %v2283, %v2308
  %v2315 = vmul.f32 %v2285, %v2309
  %v2316 = vpack.c.bf16 %v2311, %v2310
  %v2317 = vpack.c.bf16 %v2313, %v2312
  %v2318 = vpack.c.bf16 %v2315, %v2314
  %2319 = vrot.lane.b32.xlu0 %v2163, 64
  %v2320 = vpop.permute.xlu0 %2319
  %2321 = vrot.lane.b32.xlu0 %v2164, 64
  %v2322 = vpop.permute.xlu0 %2321
  %2323 = vrot.lane.b32.xlu0 %v2165, 64
  %v2324 = vpop.permute.xlu0 %2323
  %v2329 = vsel %vm102, %v2316, 0
  %v2332 = vsel %vm102, %v2317, 0
  %v2335 = vsel %vm102, %v2318, 0
  %2337 = vmatprep.subr.bf16.mxu0 0
  %2338 = vmatpush1.bf16.msra.mxu0 0
  %2339 = vmatprep.subr.bf16.mxu0 0
  %2340 = vmatpush1.bf16.msra.mxu0 0
  %2341 = vmatprep.subr.bf16.mxu0 0
  %2342 = vmatpush1.bf16.msra.mxu0 0
  %2343 = vmatprep.subr.bf16.mxu0 0
  %2344 = vmatpush1.bf16.msra.mxu0 0
  %2345 = vmatprep.subr.bf16.mxu0 0
  %2346 = vmatpush1.bf16.msra.mxu0 0
  %2347 = vmatprep.subr.bf16.mxu0 0
  %2348 = vmatpush1.bf16.msra.mxu0 %v2324
  %2349 = vmatprep.subr.bf16.mxu0 0
  %2350 = vmatpush1.bf16.msra.mxu0 %v2322
  %2351 = vmatprep.subr.bf16.mxu0 0
  %2352 = vmatpush1.bf16.msra.mxu0 %v2320
  %2353 = vmatprep.subr.bf16.mxu0 0
  %2354 = vmatpush2.bf16.msra.mxu0 0
  %2355 = vmatprep.subr.bf16.mxu0 0
  %2356 = vmatpush2.bf16.msra.mxu0 0
  %2357 = vmatprep.subr.bf16.mxu0 0
  %2358 = vmatpush2.bf16.msra.mxu0 0
  %2359 = vmatprep.subr.bf16.mxu0 0
  %2360 = vmatpush2.bf16.msra.mxu0 0
  %2361 = vmatprep.subr.bf16.mxu0 0
  %2362 = vmatpush2.bf16.msra.mxu0 0
  %2363 = vmatprep.subr.bf16.mxu0 0
  %2364 = vmatpush2.bf16.msra.mxu0 0
  %2365 = vmatprep.subr.bf16.mxu0 0
  %2366 = vmatpush2.bf16.msra.mxu0 0
  %2367 = vmatprep.subr.bf16.mxu0 0
  %2368 = vmatpush2.bf16.msra.mxu0 0
  %2369 = vmatprep.mubr.bf16.mxu0 0
  %2370 = vmatmul.mubr.bf16.gmra.mxu0 %v2329
  %v2371 = vpop.f32.mrf.mxu0
  %v2372 = vadd.f32 0.0, %v2371
  %v2373 = vpop.f32.mrf.mxu0
  %v2374 = vpop.f32.mrf.mxu0
  %v2375 = vadd.f32 0.0, %v2374
  %v2376 = vpop.f32.mrf.mxu0
  %2377 = vmatprep.mubr.bf16.mxu0 0
  %2378 = vmatmul.mubr.bf16.gmra.mxu0 %v2332
  %v2379 = vpop.f32.mrf.mxu0
  %v2380 = vadd.f32 0.0, %v2379
  %v2381 = vpop.f32.mrf.mxu0
  %v2382 = vpop.f32.mrf.mxu0
  %v2383 = vadd.f32 0.0, %v2382
  %v2384 = vpop.f32.mrf.mxu0
  %2385 = vmatprep.mubr.bf16.mxu0 0
  %2386 = vmatmul.mubr.bf16.gmra.mxu0 %v2335
  %v2387 = vpop.f32.mrf.mxu0
  %v2388 = vadd.f32 0.0, %v2387
  %v2389 = vpop.f32.mrf.mxu0
  %v2390 = vpop.f32.mrf.mxu0
  %v2391 = vadd.f32 0.0, %v2390
  %v2392 = vpop.f32.mrf.mxu0
  %2393 = vdwg.mxu0
  %2394 = vst.msk [vmem:[#allocation2] sm:$0xff] %vm438, %v2372
  %2395 = vst.msk [vmem:[#allocation2 + $0x8] sm:$0xff] %vm438, %v2375
  %2396 = vst.msk [vmem:[#allocation2 + $0x10] sm:$0xff] %vm438, %v2380
  %2397 = vst.msk [vmem:[#allocation2 + $0x18] sm:$0xff] %vm438, %v2383
  %2398 = vst.msk [vmem:[#allocation2 + $0x20] sm:$0xff] %vm438, %v2388
  %2399 = vst.msk [vmem:[#allocation2 + $0x28] sm:$0xff] %vm438, %v2391
  %2400 = vrot.lane.b32.xlu0 %v2163, 120
  %v2401 = vpop.permute.xlu0 %2400
  %2402 = vrot.lane.b32.xlu0 %v2164, 120
  %v2403 = vpop.permute.xlu0 %2402
  %2404 = vrot.lane.b32.xlu0 %v2165, 120
  %v2405 = vpop.permute.xlu0 %2404
  %2406 = vrot.lane.b32.xlu0 %v2163, 88
  %v2407 = vpop.permute.xlu0 %2406
  %2408 = vrot.lane.b32.xlu0 %v2164, 88
  %v2409 = vpop.permute.xlu0 %2408
  %2410 = vrot.lane.b32.xlu0 %v2165, 88
  %v2411 = vpop.permute.xlu0 %2410
  %v2413 = vsel %vm438, %v2401, 0
  %v2416 = vsel %vm438, %v2403, 0
  %v2419 = vsel %vm438, %v2405, 0
  %v2422 = vsel %vm438, %v2407, 0
  %v2425 = vsel %vm438, %v2409, 0
  %v2428 = vsel %vm438, %v2411, 0
  %2430 = vmatprep.subr.bf16.mxu0 0
  %2431 = vmatpush1.bf16.xpose.msra.mxu0 0
  %2432 = vmatprep.subr.bf16.mxu0 0
  %2433 = vmatpush1.bf16.xpose.msra.mxu0 0
  %2434 = vmatprep.subr.bf16.mxu0 0
  %2435 = vmatpush1.bf16.xpose.msra.mxu0 0
  %2436 = vmatprep.subr.bf16.mxu0 0
  %2437 = vmatpush1.bf16.xpose.msra.mxu0 0
  %2438 = vmatprep.subr.bf16.mxu0 0
  %2439 = vmatpush1.bf16.xpose.msra.mxu0 0
  %2440 = vmatprep.subr.bf16.mxu0 0
  %2441 = vmatpush1.bf16.xpose.msra.mxu0 %v2428
  %2442 = vmatprep.subr.bf16.mxu0 0
  %2443 = vmatpush1.bf16.xpose.msra.mxu0 %v2425
  %2444 = vmatprep.subr.bf16.mxu0 0
  %2445 = vmatpush1.bf16.xpose.msra.mxu0 %v2422
  %2446 = vmatprep.subr.bf16.mxu0 0
  %2447 = vmatpush2.bf16.xpose.msra.mxu0 0
  %2448 = vmatprep.subr.bf16.mxu0 0
  %2449 = vmatpush2.bf16.xpose.msra.mxu0 0
  %2450 = vmatprep.subr.bf16.mxu0 0
  %2451 = vmatpush2.bf16.xpose.msra.mxu0 0
  %2452 = vmatprep.subr.bf16.mxu0 0
  %2453 = vmatpush2.bf16.xpose.msra.mxu0 0
  %2454 = vmatprep.subr.bf16.mxu0 0
  %2455 = vmatpush2.bf16.xpose.msra.mxu0 0
  %2456 = vmatprep.subr.bf16.mxu0 0
  %2457 = vmatpush2.bf16.xpose.msra.mxu0 0
  %2458 = vmatprep.subr.bf16.mxu0 0
  %2459 = vmatpush2.bf16.xpose.msra.mxu0 0
  %2460 = vmatprep.subr.bf16.mxu0 0
  %2461 = vmatpush2.bf16.xpose.msra.mxu0 0
  %2462 = vmatprep.mubr.bf16.mxu0 0
  %2463 = vmatmul.mubr.bf16.gmra.mxu0 %v2413
  %v2464 = vpop.f32.mrf.mxu0
  %v2465 = vadd.f32 %v222, %v2464
  %v2466 = vpop.f32.mrf.mxu0
  %v2467 = vpop.f32.mrf.mxu0
  %v2468 = vadd.f32 %v223, %v2467
  %v2469 = vpop.f32.mrf.mxu0
  %2470 = vmatprep.mubr.bf16.mxu0 0
  %2471 = vmatmul.mubr.bf16.gmra.mxu0 %v2416
  %v2472 = vpop.f32.mrf.mxu0
  %v2473 = vadd.f32 %v224, %v2472
  %v2474 = vpop.f32.mrf.mxu0
  %v2475 = vpop.f32.mrf.mxu0
  %v2476 = vadd.f32 %v225, %v2475
  %v2477 = vpop.f32.mrf.mxu0
  %2478 = vmatprep.mubr.bf16.mxu0 0
  %2479 = vmatmul.mubr.bf16.gmra.mxu0 %v2419
  %v2480 = vpop.f32.mrf.mxu0
  %v2481 = vadd.f32 %v226, %v2480
  %v2482 = vpop.f32.mrf.mxu0
  %v2483 = vpop.f32.mrf.mxu0
  %v2484 = vadd.f32 %v227, %v2483
  %v2485 = vpop.f32.mrf.mxu0
  %2486 = vdwg.mxu0
  %v2487 = vsel %vm102, %v2465, -inf
  %2488 = vmax.xlane.f32.xlu0 %v2487
  %v2489 = vpop.xlane.xlu0 %2488
  %v2490 = vsel %vm102, %v2468, -inf
  %2491 = vmax.xlane.f32.xlu0 %v2490
  %v2492 = vpop.xlane.xlu0 %2491
  %v2493 = vsel %vm102, %v2473, -inf
  %2494 = vmax.xlane.f32.xlu0 %v2493
  %v2495 = vpop.xlane.xlu0 %2494
  %v2496 = vsel %vm102, %v2476, -inf
  %2497 = vmax.xlane.f32.xlu0 %v2496
  %v2498 = vpop.xlane.xlu0 %2497
  %v2499 = vsel %vm102, %v2481, -inf
  %2500 = vmax.xlane.f32.xlu0 %v2499
  %v2501 = vpop.xlane.xlu0 %2500
  %v2502 = vsel %vm102, %v2484, -inf
  %2503 = vmax.xlane.f32.xlu0 %v2502
  %v2504 = vpop.xlane.xlu0 %2503
  %v2505 = vsub.f32 %v2465, %v2489
  %v2506 = vsub.f32 %v2468, %v2492
  %v2507 = vsub.f32 %v2473, %v2495
  %v2508 = vsub.f32 %v2476, %v2498
  %v2509 = vsub.f32 %v2481, %v2501
  %v2510 = vsub.f32 %v2484, %v2504
  %v2511 = vmul.f32 %v2505, 1.442695
  %v2512 = vpow.pop %v2511
  %v2513 = vmul.f32 %v2506, 1.442695
  %v2514 = vpow.pop %v2513
  %v2515 = vmul.f32 %v2507, 1.442695
  %v2516 = vpow.pop %v2515
  %v2517 = vmul.f32 %v2508, 1.442695
  %v2518 = vpow.pop %v2517
  %v2519 = vmul.f32 %v2509, 1.442695
  %v2520 = vpow.pop %v2519
  %v2521 = vmul.f32 %v2510, 1.442695
  %v2522 = vpow.pop %v2521
  %v2523 = vsel %vm102, %v2512, 0.0
  %2524 = vadd.xlane.f32.xlu0 %v2523
  %v2525 = vpop.xlane.xlu0 %2524
  %v2526 = vsel %vm102, %v2514, 0.0
  %2527 = vadd.xlane.f32.xlu0 %v2526
  %v2528 = vpop.xlane.xlu0 %2527
  %v2529 = vsel %vm102, %v2516, 0.0
  %2530 = vadd.xlane.f32.xlu0 %v2529
  %v2531 = vpop.xlane.xlu0 %2530
  %v2532 = vsel %vm102, %v2518, 0.0
  %2533 = vadd.xlane.f32.xlu0 %v2532
  %v2534 = vpop.xlane.xlu0 %2533
  %v2535 = vsel %vm102, %v2520, 0.0
  %2536 = vadd.xlane.f32.xlu0 %v2535
  %v2537 = vpop.xlane.xlu0 %2536
  %v2538 = vsel %vm102, %v2522, 0.0
  %2539 = vadd.xlane.f32.xlu0 %v2538
  %v2540 = vpop.xlane.xlu0 %2539
  %v2541 = vrcp.pop %v2525
  %v2542 = vrcp.pop %v2528
  %v2543 = vrcp.pop %v2531
  %v2544 = vrcp.pop %v2534
  %v2545 = vrcp.pop %v2537
  %v2546 = vrcp.pop %v2540
  %v2547 = vmul.f32 %v2512, %v2541
  %v2548 = vmul.f32 %v2514, %v2542
  %v2549 = vmul.f32 %v2516, %v2543
  %v2550 = vmul.f32 %v2518, %v2544
  %v2551 = vmul.f32 %v2520, %v2545
  %v2552 = vmul.f32 %v2522, %v2546
  %v2553 = vpack.c.bf16 %v2548, %v2547
  %v2554 = vpack.c.bf16 %v2550, %v2549
  %v2555 = vpack.c.bf16 %v2552, %v2551
  %2556 = vrot.lane.b32.xlu0 %v2163, 56
  %v2557 = vpop.permute.xlu0 %2556
  %2558 = vrot.lane.b32.xlu0 %v2164, 56
  %v2559 = vpop.permute.xlu0 %2558
  %2560 = vrot.lane.b32.xlu0 %v2165, 56
  %v2561 = vpop.permute.xlu0 %2560
  %v2566 = vsel %vm102, %v2553, 0
  %v2569 = vsel %vm102, %v2554, 0
  %v2572 = vsel %vm102, %v2555, 0
  %2574 = vmatprep.subr.bf16.mxu0 0
  %2575 = vmatpush1.bf16.msra.mxu0 0
  %2576 = vmatprep.subr.bf16.mxu0 0
  %2577 = vmatpush1.bf16.msra.mxu0 0
  %2578 = vmatprep.subr.bf16.mxu0 0
  %2579 = vmatpush1.bf16.msra.mxu0 0
  %2580 = vmatprep.subr.bf16.mxu0 0
  %2581 = vmatpush1.bf16.msra.mxu0 0
  %2582 = vmatprep.subr.bf16.mxu0 0
  %2583 = vmatpush1.bf16.msra.mxu0 0
  %2584 = vmatprep.subr.bf16.mxu0 0
  %2585 = vmatpush1.bf16.msra.mxu0 %v2561
  %2586 = vmatprep.subr.bf16.mxu0 0
  %2587 = vmatpush1.bf16.msra.mxu0 %v2559
  %2588 = vmatprep.subr.bf16.mxu0 0
  %2589 = vmatpush1.bf16.msra.mxu0 %v2557
  %2590 = vmatprep.subr.bf16.mxu0 0
  %2591 = vmatpush2.bf16.msra.mxu0 0
  %2592 = vmatprep.subr.bf16.mxu0 0
  %2593 = vmatpush2.bf16.msra.mxu0 0
  %2594 = vmatprep.subr.bf16.mxu0 0
  %2595 = vmatpush2.bf16.msra.mxu0 0
  %2596 = vmatprep.subr.bf16.mxu0 0
  %2597 = vmatpush2.bf16.msra.mxu0 0
  %2598 = vmatprep.subr.bf16.mxu0 0
  %2599 = vmatpush2.bf16.msra.mxu0 0
  %2600 = vmatprep.subr.bf16.mxu0 0
  %2601 = vmatpush2.bf16.msra.mxu0 0
  %2602 = vmatprep.subr.bf16.mxu0 0
  %2603 = vmatpush2.bf16.msra.mxu0 0
  %2604 = vmatprep.subr.bf16.mxu0 0
  %2605 = vmatpush2.bf16.msra.mxu0 0
  %2606 = vmatprep.mubr.bf16.mxu0 0
  %2607 = vmatmul.mubr.bf16.gmra.mxu0 %v2566
  %v2608 = vpop.f32.mrf.mxu0
  %v2609 = vadd.f32 0.0, %v2608
  %v2610 = vpop.f32.mrf.mxu0
  %v2611 = vpop.f32.mrf.mxu0
  %v2612 = vadd.f32 0.0, %v2611
  %v2613 = vpop.f32.mrf.mxu0
  %2614 = vmatprep.mubr.bf16.mxu0 0
  %2615 = vmatmul.mubr.bf16.gmra.mxu0 %v2569
  %v2616 = vpop.f32.mrf.mxu0
  %v2617 = vadd.f32 0.0, %v2616
  %v2618 = vpop.f32.mrf.mxu0
  %v2619 = vpop.f32.mrf.mxu0
  %v2620 = vadd.f32 0.0, %v2619
  %v2621 = vpop.f32.mrf.mxu0
  %2622 = vmatprep.mubr.bf16.mxu0 0
  %2623 = vmatmul.mubr.bf16.gmra.mxu0 %v2572
  %v2624 = vpop.f32.mrf.mxu0
  %v2625 = vadd.f32 0.0, %v2624
  %v2626 = vpop.f32.mrf.mxu0
  %v2627 = vpop.f32.mrf.mxu0
  %v2628 = vadd.f32 0.0, %v2627
  %v2629 = vpop.f32.mrf.mxu0
  %2630 = vdwg.mxu0
  %2637 = vrot.lane.b32.xlu0 %v2609, 8
  %v2638 = vpop.permute.xlu0 %2637
  %2639 = vrot.lane.b32.xlu0 %v2612, 8
  %v2640 = vpop.permute.xlu0 %2639
  %2641 = vrot.lane.b32.xlu0 %v2617, 8
  %v2642 = vpop.permute.xlu0 %2641
  %2643 = vrot.lane.b32.xlu0 %v2620, 8
  %v2644 = vpop.permute.xlu0 %2643
  %2645 = vrot.lane.b32.xlu0 %v2625, 8
  %v2646 = vpop.permute.xlu0 %2645
  %2647 = vrot.lane.b32.xlu0 %v2628, 8
  %v2648 = vpop.permute.xlu0 %2647
  %2655 = vst.msk [vmem:[#allocation2] sm:$0xff] %vm919, %v2638
  %2656 = vst.msk [vmem:[#allocation2 + $0x8] sm:$0xff] %vm919, %v2640
  %2657 = vst.msk [vmem:[#allocation2 + $0x10] sm:$0xff] %vm919, %v2642
  %2658 = vst.msk [vmem:[#allocation2 + $0x18] sm:$0xff] %vm919, %v2644
  %2659 = vst.msk [vmem:[#allocation2 + $0x20] sm:$0xff] %vm919, %v2646
  %2660 = vst.msk [vmem:[#allocation2 + $0x28] sm:$0xff] %vm919, %v2648
  %2661 = vrot.lane.b32.xlu0 %v2163, 112
  %v2662 = vpop.permute.xlu0 %2661
  %2663 = vrot.lane.b32.xlu0 %v2164, 112
  %v2664 = vpop.permute.xlu0 %2663
  %2665 = vrot.lane.b32.xlu0 %v2165, 112
  %v2666 = vpop.permute.xlu0 %2665
  %2667 = vrot.lane.b32.xlu0 %v2163, 80
  %v2668 = vpop.permute.xlu0 %2667
  %2669 = vrot.lane.b32.xlu0 %v2164, 80
  %v2670 = vpop.permute.xlu0 %2669
  %2671 = vrot.lane.b32.xlu0 %v2165, 80
  %v2672 = vpop.permute.xlu0 %2671
  %v2674 = vsel %vm438, %v2662, 0
  %v2677 = vsel %vm438, %v2664, 0
  %v2680 = vsel %vm438, %v2666, 0
  %v2683 = vsel %vm438, %v2668, 0
  %v2686 = vsel %vm438, %v2670, 0
  %v2689 = vsel %vm438, %v2672, 0
  %2691 = vmatprep.subr.bf16.mxu0 0
  %2692 = vmatpush1.bf16.xpose.msra.mxu0 0
  %2693 = vmatprep.subr.bf16.mxu0 0
  %2694 = vmatpush1.bf16.xpose.msra.mxu0 0
  %2695 = vmatprep.subr.bf16.mxu0 0
  %2696 = vmatpush1.bf16.xpose.msra.mxu0 0
  %2697 = vmatprep.subr.bf16.mxu0 0
  %2698 = vmatpush1.bf16.xpose.msra.mxu0 0
  %2699 = vmatprep.subr.bf16.mxu0 0
  %2700 = vmatpush1.bf16.xpose.msra.mxu0 0
  %2701 = vmatprep.subr.bf16.mxu0 0
  %2702 = vmatpush1.bf16.xpose.msra.mxu0 %v2689
  %2703 = vmatprep.subr.bf16.mxu0 0
  %2704 = vmatpush1.bf16.xpose.msra.mxu0 %v2686
  %2705 = vmatprep.subr.bf16.mxu0 0
  %2706 = vmatpush1.bf16.xpose.msra.mxu0 %v2683
  %2707 = vmatprep.subr.bf16.mxu0 0
  %2708 = vmatpush2.bf16.xpose.msra.mxu0 0
  %2709 = vmatprep.subr.bf16.mxu0 0
  %2710 = vmatpush2.bf16.xpose.msra.mxu0 0
  %2711 = vmatprep.subr.bf16.mxu0 0
  %2712 = vmatpush2.bf16.xpose.msra.mxu0 0
  %2713 = vmatprep.subr.bf16.mxu0 0
  %2714 = vmatpush2.bf16.xpose.msra.mxu0 0
  %2715 = vmatprep.subr.bf16.mxu0 0
  %2716 = vmatpush2.bf16.xpose.msra.mxu0 0
  %2717 = vmatprep.subr.bf16.mxu0 0
  %2718 = vmatpush2.bf16.xpose.msra.mxu0 0
  %2719 = vmatprep.subr.bf16.mxu0 0
  %2720 = vmatpush2.bf16.xpose.msra.mxu0 0
  %2721 = vmatprep.subr.bf16.mxu0 0
  %2722 = vmatpush2.bf16.xpose.msra.mxu0 0
  %2723 = vmatprep.mubr.bf16.mxu0 0
  %2724 = vmatmul.mubr.bf16.gmra.mxu0 %v2674
  %v2725 = vpop.f32.mrf.mxu0
  %v2726 = vadd.f32 %v222, %v2725
  %v2727 = vpop.f32.mrf.mxu0
  %v2728 = vpop.f32.mrf.mxu0
  %v2729 = vadd.f32 %v223, %v2728
  %v2730 = vpop.f32.mrf.mxu0
  %2731 = vmatprep.mubr.bf16.mxu0 0
  %2732 = vmatmul.mubr.bf16.gmra.mxu0 %v2677
  %v2733 = vpop.f32.mrf.mxu0
  %v2734 = vadd.f32 %v224, %v2733
  %v2735 = vpop.f32.mrf.mxu0
  %v2736 = vpop.f32.mrf.mxu0
  %v2737 = vadd.f32 %v225, %v2736
  %v2738 = vpop.f32.mrf.mxu0
  %2739 = vmatprep.mubr.bf16.mxu0 0
  %2740 = vmatmul.mubr.bf16.gmra.mxu0 %v2680
  %v2741 = vpop.f32.mrf.mxu0
  %v2742 = vadd.f32 %v226, %v2741
  %v2743 = vpop.f32.mrf.mxu0
  %v2744 = vpop.f32.mrf.mxu0
  %v2745 = vadd.f32 %v227, %v2744
  %v2746 = vpop.f32.mrf.mxu0
  %2747 = vdwg.mxu0
  %v2748 = vsel %vm102, %v2726, -inf
  %2749 = vmax.xlane.f32.xlu0 %v2748
  %v2750 = vpop.xlane.xlu0 %2749
  %v2751 = vsel %vm102, %v2729, -inf
  %2752 = vmax.xlane.f32.xlu0 %v2751
  %v2753 = vpop.xlane.xlu0 %2752
  %v2754 = vsel %vm102, %v2734, -inf
  %2755 = vmax.xlane.f32.xlu0 %v2754
  %v2756 = vpop.xlane.xlu0 %2755
  %v2757 = vsel %vm102, %v2737, -inf
  %2758 = vmax.xlane.f32.xlu0 %v2757
  %v2759 = vpop.xlane.xlu0 %2758
  %v2760 = vsel %vm102, %v2742, -inf
  %2761 = vmax.xlane.f32.xlu0 %v2760
  %v2762 = vpop.xlane.xlu0 %2761
  %v2763 = vsel %vm102, %v2745, -inf
  %2764 = vmax.xlane.f32.xlu0 %v2763
  %v2765 = vpop.xlane.xlu0 %2764
  %v2766 = vsub.f32 %v2726, %v2750
  %v2767 = vsub.f32 %v2729, %v2753
  %v2768 = vsub.f32 %v2734, %v2756
  %v2769 = vsub.f32 %v2737, %v2759
  %v2770 = vsub.f32 %v2742, %v2762
  %v2771 = vsub.f32 %v2745, %v2765
  %v2772 = vmul.f32 %v2766, 1.442695
  %v2773 = vpow.pop %v2772
  %v2774 = vmul.f32 %v2767, 1.442695
  %v2775 = vpow.pop %v2774
  %v2776 = vmul.f32 %v2768, 1.442695
  %v2777 = vpow.pop %v2776
  %v2778 = vmul.f32 %v2769, 1.442695
  %v2779 = vpow.pop %v2778
  %v2780 = vmul.f32 %v2770, 1.442695
  %v2781 = vpow.pop %v2780
  %v2782 = vmul.f32 %v2771, 1.442695
  %v2783 = vpow.pop %v2782
  %v2784 = vsel %vm102, %v2773, 0.0
  %2785 = vadd.xlane.f32.xlu0 %v2784
  %v2786 = vpop.xlane.xlu0 %2785
  %v2787 = vsel %vm102, %v2775, 0.0
  %2788 = vadd.xlane.f32.xlu0 %v2787
  %v2789 = vpop.xlane.xlu0 %2788
  %v2790 = vsel %vm102, %v2777, 0.0
  %2791 = vadd.xlane.f32.xlu0 %v2790
  %v2792 = vpop.xlane.xlu0 %2791
  %v2793 = vsel %vm102, %v2779, 0.0
  %2794 = vadd.xlane.f32.xlu0 %v2793
  %v2795 = vpop.xlane.xlu0 %2794
  %v2796 = vsel %vm102, %v2781, 0.0
  %2797 = vadd.xlane.f32.xlu0 %v2796
  %v2798 = vpop.xlane.xlu0 %2797
  %v2799 = vsel %vm102, %v2783, 0.0
  %2800 = vadd.xlane.f32.xlu0 %v2799
  %v2801 = vpop.xlane.xlu0 %2800
  %v2802 = vrcp.pop %v2786
  %v2803 = vrcp.pop %v2789
  %v2804 = vrcp.pop %v2792
  %v2805 = vrcp.pop %v2795
  %v2806 = vrcp.pop %v2798
  %v2807 = vrcp.pop %v2801
  %v2808 = vmul.f32 %v2773, %v2802
  %v2809 = vmul.f32 %v2775, %v2803
  %v2810 = vmul.f32 %v2777, %v2804
  %v2811 = vmul.f32 %v2779, %v2805
  %v2812 = vmul.f32 %v2781, %v2806
  %v2813 = vmul.f32 %v2783, %v2807
  %v2814 = vpack.c.bf16 %v2809, %v2808
  %v2815 = vpack.c.bf16 %v2811, %v2810
  %v2816 = vpack.c.bf16 %v2813, %v2812
  %2817 = vrot.lane.b32.xlu0 %v2163, 48
  %v2818 = vpop.permute.xlu0 %2817
  %2819 = vrot.lane.b32.xlu0 %v2164, 48
  %v2820 = vpop.permute.xlu0 %2819
  %2821 = vrot.lane.b32.xlu0 %v2165, 48
  %v2822 = vpop.permute.xlu0 %2821
  %v2827 = vsel %vm102, %v2814, 0
  %v2830 = vsel %vm102, %v2815, 0
  %v2833 = vsel %vm102, %v2816, 0
  %2835 = vmatprep.subr.bf16.mxu0 0
  %2836 = vmatpush1.bf16.msra.mxu0 0
  %2837 = vmatprep.subr.bf16.mxu0 0
  %2838 = vmatpush1.bf16.msra.mxu0 0
  %2839 = vmatprep.subr.bf16.mxu0 0
  %2840 = vmatpush1.bf16.msra.mxu0 0
  %2841 = vmatprep.subr.bf16.mxu0 0
  %2842 = vmatpush1.bf16.msra.mxu0 0
  %2843 = vmatprep.subr.bf16.mxu0 0
  %2844 = vmatpush1.bf16.msra.mxu0 0
  %2845 = vmatprep.subr.bf16.mxu0 0
  %2846 = vmatpush1.bf16.msra.mxu0 %v2822
  %2847 = vmatprep.subr.bf16.mxu0 0
  %2848 = vmatpush1.bf16.msra.mxu0 %v2820
  %2849 = vmatprep.subr.bf16.mxu0 0
  %2850 = vmatpush1.bf16.msra.mxu0 %v2818
  %2851 = vmatprep.subr.bf16.mxu0 0
  %2852 = vmatpush2.bf16.msra.mxu0 0
  %2853 = vmatprep.subr.bf16.mxu0 0
  %2854 = vmatpush2.bf16.msra.mxu0 0
  %2855 = vmatprep.subr.bf16.mxu0 0
  %2856 = vmatpush2.bf16.msra.mxu0 0
  %2857 = vmatprep.subr.bf16.mxu0 0
  %2858 = vmatpush2.bf16.msra.mxu0 0
  %2859 = vmatprep.subr.bf16.mxu0 0
  %2860 = vmatpush2.bf16.msra.mxu0 0
  %2861 = vmatprep.subr.bf16.mxu0 0
  %2862 = vmatpush2.bf16.msra.mxu0 0
  %2863 = vmatprep.subr.bf16.mxu0 0
  %2864 = vmatpush2.bf16.msra.mxu0 0
  %2865 = vmatprep.subr.bf16.mxu0 0
  %2866 = vmatpush2.bf16.msra.mxu0 0
  %2867 = vmatprep.mubr.bf16.mxu0 0
  %2868 = vmatmul.mubr.bf16.gmra.mxu0 %v2827
  %v2869 = vpop.f32.mrf.mxu0
  %v2870 = vadd.f32 0.0, %v2869
  %v2871 = vpop.f32.mrf.mxu0
  %v2872 = vpop.f32.mrf.mxu0
  %v2873 = vadd.f32 0.0, %v2872
  %v2874 = vpop.f32.mrf.mxu0
  %2875 = vmatprep.mubr.bf16.mxu0 0
  %2876 = vmatmul.mubr.bf16.gmra.mxu0 %v2830
  %v2877 = vpop.f32.mrf.mxu0
  %v2878 = vadd.f32 0.0, %v2877
  %v2879 = vpop.f32.mrf.mxu0
  %v2880 = vpop.f32.mrf.mxu0
  %v2881 = vadd.f32 0.0, %v2880
  %v2882 = vpop.f32.mrf.mxu0
  %2883 = vmatprep.mubr.bf16.mxu0 0
  %2884 = vmatmul.mubr.bf16.gmra.mxu0 %v2833
  %v2885 = vpop.f32.mrf.mxu0
  %v2886 = vadd.f32 0.0, %v2885
  %v2887 = vpop.f32.mrf.mxu0
  %v2888 = vpop.f32.mrf.mxu0
  %v2889 = vadd.f32 0.0, %v2888
  %v2890 = vpop.f32.mrf.mxu0
  %2891 = vdwg.mxu0
  %2898 = vrot.lane.b32.xlu0 %v2870, 16
  %v2899 = vpop.permute.xlu0 %2898
  %2900 = vrot.lane.b32.xlu0 %v2873, 16
  %v2901 = vpop.permute.xlu0 %2900
  %2902 = vrot.lane.b32.xlu0 %v2878, 16
  %v2903 = vpop.permute.xlu0 %2902
  %2904 = vrot.lane.b32.xlu0 %v2881, 16
  %v2905 = vpop.permute.xlu0 %2904
  %2906 = vrot.lane.b32.xlu0 %v2886, 16
  %v2907 = vpop.permute.xlu0 %2906
  %2908 = vrot.lane.b32.xlu0 %v2889, 16
  %v2909 = vpop.permute.xlu0 %2908
  %2916 = vst.msk [vmem:[#allocation2] sm:$0xff] %vm1181, %v2899
  %2917 = vst.msk [vmem:[#allocation2 + $0x8] sm:$0xff] %vm1181, %v2901
  %2918 = vst.msk [vmem:[#allocation2 + $0x10] sm:$0xff] %vm1181, %v2903
  %2919 = vst.msk [vmem:[#allocation2 + $0x18] sm:$0xff] %vm1181, %v2905
  %2920 = vst.msk [vmem:[#allocation2 + $0x20] sm:$0xff] %vm1181, %v2907
  %2921 = vst.msk [vmem:[#allocation2 + $0x28] sm:$0xff] %vm1181, %v2909
  %2922 = vrot.lane.b32.xlu0 %v2163, 104
  %v2923 = vpop.permute.xlu0 %2922
  %2924 = vrot.lane.b32.xlu0 %v2164, 104
  %v2925 = vpop.permute.xlu0 %2924
  %2926 = vrot.lane.b32.xlu0 %v2165, 104
  %v2927 = vpop.permute.xlu0 %2926
  %2928 = vrot.lane.b32.xlu0 %v2163, 72
  %v2929 = vpop.permute.xlu0 %2928
  %2930 = vrot.lane.b32.xlu0 %v2164, 72
  %v2931 = vpop.permute.xlu0 %2930
  %2932 = vrot.lane.b32.xlu0 %v2165, 72
  %v2933 = vpop.permute.xlu0 %2932
  %v2935 = vsel %vm438, %v2923, 0
  %v2938 = vsel %vm438, %v2925, 0
  %v2941 = vsel %vm438, %v2927, 0
  %v2944 = vsel %vm438, %v2929, 0
  %v2947 = vsel %vm438, %v2931, 0
  %v2950 = vsel %vm438, %v2933, 0
  %2952 = vmatprep.subr.bf16.mxu0 0
  %2953 = vmatpush1.bf16.xpose.msra.mxu0 0
  %2954 = vmatprep.subr.bf16.mxu0 0
  %2955 = vmatpush1.bf16.xpose.msra.mxu0 0
  %2956 = vmatprep.subr.bf16.mxu0 0
  %2957 = vmatpush1.bf16.xpose.msra.mxu0 0
  %2958 = vmatprep.subr.bf16.mxu0 0
  %2959 = vmatpush1.bf16.xpose.msra.mxu0 0
  %2960 = vmatprep.subr.bf16.mxu0 0
  %2961 = vmatpush1.bf16.xpose.msra.mxu0 0
  %2962 = vmatprep.subr.bf16.mxu0 0
  %2963 = vmatpush1.bf16.xpose.msra.mxu0 %v2950
  %2964 = vmatprep.subr.bf16.mxu0 0
  %2965 = vmatpush1.bf16.xpose.msra.mxu0 %v2947
  %2966 = vmatprep.subr.bf16.mxu0 0
  %2967 = vmatpush1.bf16.xpose.msra.mxu0 %v2944
  %2968 = vmatprep.subr.bf16.mxu0 0
  %2969 = vmatpush2.bf16.xpose.msra.mxu0 0
  %2970 = vmatprep.subr.bf16.mxu0 0
  %2971 = vmatpush2.bf16.xpose.msra.mxu0 0
  %2972 = vmatprep.subr.bf16.mxu0 0
  %2973 = vmatpush2.bf16.xpose.msra.mxu0 0
  %2974 = vmatprep.subr.bf16.mxu0 0
  %2975 = vmatpush2.bf16.xpose.msra.mxu0 0
  %2976 = vmatprep.subr.bf16.mxu0 0
  %2977 = vmatpush2.bf16.xpose.msra.mxu0 0
  %2978 = vmatprep.subr.bf16.mxu0 0
  %2979 = vmatpush2.bf16.xpose.msra.mxu0 0
  %2980 = vmatprep.subr.bf16.mxu0 0
  %2981 = vmatpush2.bf16.xpose.msra.mxu0 0
  %2982 = vmatprep.subr.bf16.mxu0 0
  %2983 = vmatpush2.bf16.xpose.msra.mxu0 0
  %2984 = vmatprep.mubr.bf16.mxu0 0
  %2985 = vmatmul.mubr.bf16.gmra.mxu0 %v2935
  %v2986 = vpop.f32.mrf.mxu0
  %v2987 = vadd.f32 %v222, %v2986
  %v2988 = vpop.f32.mrf.mxu0
  %v2989 = vpop.f32.mrf.mxu0
  %v2990 = vadd.f32 %v223, %v2989
  %v2991 = vpop.f32.mrf.mxu0
  %2992 = vmatprep.mubr.bf16.mxu0 0
  %2993 = vmatmul.mubr.bf16.gmra.mxu0 %v2938
  %v2994 = vpop.f32.mrf.mxu0
  %v2995 = vadd.f32 %v224, %v2994
  %v2996 = vpop.f32.mrf.mxu0
  %v2997 = vpop.f32.mrf.mxu0
  %v2998 = vadd.f32 %v225, %v2997
  %v2999 = vpop.f32.mrf.mxu0
  %3000 = vmatprep.mubr.bf16.mxu0 0
  %3001 = vmatmul.mubr.bf16.gmra.mxu0 %v2941
  %v3002 = vpop.f32.mrf.mxu0
  %v3003 = vadd.f32 %v226, %v3002
  %v3004 = vpop.f32.mrf.mxu0
  %v3005 = vpop.f32.mrf.mxu0
  %v3006 = vadd.f32 %v227, %v3005
  %v3007 = vpop.f32.mrf.mxu0
  %3008 = vdwg.mxu0
  %v3009 = vsel %vm102, %v2987, -inf
  %3010 = vmax.xlane.f32.xlu0 %v3009
  %v3011 = vpop.xlane.xlu0 %3010
  %v3012 = vsel %vm102, %v2990, -inf
  %3013 = vmax.xlane.f32.xlu0 %v3012
  %v3014 = vpop.xlane.xlu0 %3013
  %v3015 = vsel %vm102, %v2995, -inf
  %3016 = vmax.xlane.f32.xlu0 %v3015
  %v3017 = vpop.xlane.xlu0 %3016
  %v3018 = vsel %vm102, %v2998, -inf
  %3019 = vmax.xlane.f32.xlu0 %v3018
  %v3020 = vpop.xlane.xlu0 %3019
  %v3021 = vsel %vm102, %v3003, -inf
  %3022 = vmax.xlane.f32.xlu0 %v3021
  %v3023 = vpop.xlane.xlu0 %3022
  %v3024 = vsel %vm102, %v3006, -inf
  %3025 = vmax.xlane.f32.xlu0 %v3024
  %v3026 = vpop.xlane.xlu0 %3025
  %v3027 = vsub.f32 %v2987, %v3011
  %v3028 = vsub.f32 %v2990, %v3014
  %v3029 = vsub.f32 %v2995, %v3017
  %v3030 = vsub.f32 %v2998, %v3020
  %v3031 = vsub.f32 %v3003, %v3023
  %v3032 = vsub.f32 %v3006, %v3026
  %v3033 = vmul.f32 %v3027, 1.442695
  %v3034 = vpow.pop %v3033
  %v3035 = vmul.f32 %v3028, 1.442695
  %v3036 = vpow.pop %v3035
  %v3037 = vmul.f32 %v3029, 1.442695
  %v3038 = vpow.pop %v3037
  %v3039 = vmul.f32 %v3030, 1.442695
  %v3040 = vpow.pop %v3039
  %v3041 = vmul.f32 %v3031, 1.442695
  %v3042 = vpow.pop %v3041
  %v3043 = vmul.f32 %v3032, 1.442695
  %v3044 = vpow.pop %v3043
  %v3045 = vsel %vm102, %v3034, 0.0
  %3046 = vadd.xlane.f32.xlu0 %v3045
  %v3047 = vpop.xlane.xlu0 %3046
  %v3048 = vsel %vm102, %v3036, 0.0
  %3049 = vadd.xlane.f32.xlu0 %v3048
  %v3050 = vpop.xlane.xlu0 %3049
  %v3051 = vsel %vm102, %v3038, 0.0
  %3052 = vadd.xlane.f32.xlu0 %v3051
  %v3053 = vpop.xlane.xlu0 %3052
  %v3054 = vsel %vm102, %v3040, 0.0
  %3055 = vadd.xlane.f32.xlu0 %v3054
  %v3056 = vpop.xlane.xlu0 %3055
  %v3057 = vsel %vm102, %v3042, 0.0
  %3058 = vadd.xlane.f32.xlu0 %v3057
  %v3059 = vpop.xlane.xlu0 %3058
  %v3060 = vsel %vm102, %v3044, 0.0
  %3061 = vadd.xlane.f32.xlu0 %v3060
  %v3062 = vpop.xlane.xlu0 %3061
  %v3063 = vrcp.pop %v3047
  %v3064 = vrcp.pop %v3050
  %v3065 = vrcp.pop %v3053
  %v3066 = vrcp.pop %v3056
  %v3067 = vrcp.pop %v3059
  %v3068 = vrcp.pop %v3062
  %v3069 = vmul.f32 %v3034, %v3063
  %v3070 = vmul.f32 %v3036, %v3064
  %v3071 = vmul.f32 %v3038, %v3065
  %v3072 = vmul.f32 %v3040, %v3066
  %v3073 = vmul.f32 %v3042, %v3067
  %v3074 = vmul.f32 %v3044, %v3068
  %v3075 = vpack.c.bf16 %v3070, %v3069
  %v3076 = vpack.c.bf16 %v3072, %v3071
  %v3077 = vpack.c.bf16 %v3074, %v3073
  %3078 = vrot.lane.b32.xlu0 %v2163, 40
  %v3079 = vpop.permute.xlu0 %3078
  %3080 = vrot.lane.b32.xlu0 %v2164, 40
  %v3081 = vpop.permute.xlu0 %3080
  %3082 = vrot.lane.b32.xlu0 %v2165, 40
  %v3083 = vpop.permute.xlu0 %3082
  %v3088 = vsel %vm102, %v3075, 0
  %v3091 = vsel %vm102, %v3076, 0
  %v3094 = vsel %vm102, %v3077, 0
  %3096 = vmatprep.subr.bf16.mxu0 0
  %3097 = vmatpush1.bf16.msra.mxu0 0
  %3098 = vmatprep.subr.bf16.mxu0 0
  %3099 = vmatpush1.bf16.msra.mxu0 0
  %3100 = vmatprep.subr.bf16.mxu0 0
  %3101 = vmatpush1.bf16.msra.mxu0 0
  %3102 = vmatprep.subr.bf16.mxu0 0
  %3103 = vmatpush1.bf16.msra.mxu0 0
  %3104 = vmatprep.subr.bf16.mxu0 0
  %3105 = vmatpush1.bf16.msra.mxu0 0
  %3106 = vmatprep.subr.bf16.mxu0 0
  %3107 = vmatpush1.bf16.msra.mxu0 %v3083
  %3108 = vmatprep.subr.bf16.mxu0 0
  %3109 = vmatpush1.bf16.msra.mxu0 %v3081
  %3110 = vmatprep.subr.bf16.mxu0 0
  %3111 = vmatpush1.bf16.msra.mxu0 %v3079
  %3112 = vmatprep.subr.bf16.mxu0 0
  %3113 = vmatpush2.bf16.msra.mxu0 0
  %3114 = vmatprep.subr.bf16.mxu0 0
  %3115 = vmatpush2.bf16.msra.mxu0 0
  %3116 = vmatprep.subr.bf16.mxu0 0
  %3117 = vmatpush2.bf16.msra.mxu0 0
  %3118 = vmatprep.subr.bf16.mxu0 0
  %3119 = vmatpush2.bf16.msra.mxu0 0
  %3120 = vmatprep.subr.bf16.mxu0 0
  %3121 = vmatpush2.bf16.msra.mxu0 0
  %3122 = vmatprep.subr.bf16.mxu0 0
  %3123 = vmatpush2.bf16.msra.mxu0 0
  %3124 = vmatprep.subr.bf16.mxu0 0
  %3125 = vmatpush2.bf16.msra.mxu0 0
  %3126 = vmatprep.subr.bf16.mxu0 0
  %3127 = vmatpush2.bf16.msra.mxu0 0
  %3128 = vmatprep.mubr.bf16.mxu0 0
  %3129 = vmatmul.mubr.bf16.gmra.mxu0 %v3088
  %v3130 = vpop.f32.mrf.mxu0
  %v3131 = vadd.f32 0.0, %v3130
  %v3132 = vpop.f32.mrf.mxu0
  %v3133 = vpop.f32.mrf.mxu0
  %v3134 = vadd.f32 0.0, %v3133
  %v3135 = vpop.f32.mrf.mxu0
  %3136 = vmatprep.mubr.bf16.mxu0 0
  %3137 = vmatmul.mubr.bf16.gmra.mxu0 %v3091
  %v3138 = vpop.f32.mrf.mxu0
  %v3139 = vadd.f32 0.0, %v3138
  %v3140 = vpop.f32.mrf.mxu0
  %v3141 = vpop.f32.mrf.mxu0
  %v3142 = vadd.f32 0.0, %v3141
  %v3143 = vpop.f32.mrf.mxu0
  %3144 = vmatprep.mubr.bf16.mxu0 0
  %3145 = vmatmul.mubr.bf16.gmra.mxu0 %v3094
  %v3146 = vpop.f32.mrf.mxu0
  %v3147 = vadd.f32 0.0, %v3146
  %v3148 = vpop.f32.mrf.mxu0
  %v3149 = vpop.f32.mrf.mxu0
  %v3150 = vadd.f32 0.0, %v3149
  %v3151 = vpop.f32.mrf.mxu0
  %3152 = vdwg.mxu0
  %3159 = vrot.lane.b32.xlu0 %v3131, 24
  %v3160 = vpop.permute.xlu0 %3159
  %3161 = vrot.lane.b32.xlu0 %v3134, 24
  %v3162 = vpop.permute.xlu0 %3161
  %3163 = vrot.lane.b32.xlu0 %v3139, 24
  %v3164 = vpop.permute.xlu0 %3163
  %3165 = vrot.lane.b32.xlu0 %v3142, 24
  %v3166 = vpop.permute.xlu0 %3165
  %3167 = vrot.lane.b32.xlu0 %v3147, 24
  %v3168 = vpop.permute.xlu0 %3167
  %3169 = vrot.lane.b32.xlu0 %v3150, 24
  %v3170 = vpop.permute.xlu0 %3169
  %3177 = vst.msk [vmem:[#allocation2] sm:$0xff] %vm1443, %v3160
  %3178 = vst.msk [vmem:[#allocation2 + $0x8] sm:$0xff] %vm1443, %v3162
  %3179 = vst.msk [vmem:[#allocation2 + $0x10] sm:$0xff] %vm1443, %v3164
  %3180 = vst.msk [vmem:[#allocation2 + $0x18] sm:$0xff] %vm1443, %v3166
  %3181 = vst.msk [vmem:[#allocation2 + $0x20] sm:$0xff] %vm1443, %v3168
  %3182 = vst.msk [vmem:[#allocation2 + $0x28] sm:$0xff] %vm1443, %v3170
  %v3183 = vld [vmem:[#allocation2] sm:$0xff]
  %v3184 = vld [vmem:[#allocation2 + $0x8] sm:$0xff]
  %v3185 = vld [vmem:[#allocation2 + $0x10] sm:$0xff]
  %v3186 = vld [vmem:[#allocation2 + $0x18] sm:$0xff]
  %v3187 = vld [vmem:[#allocation2 + $0x20] sm:$0xff]
  %v3188 = vld [vmem:[#allocation2 + $0x28] sm:$0xff]
  %v3189 = vpack.c.bf16 %v3184, %v3183
  %v3190 = vpack.c.bf16 %v3186, %v3185
  %v3191 = vpack.c.bf16 %v3188, %v3187
  %s3192 = scalar_lea.vmem %s7, 16
  %v3193 = vld [vmem:[%s3192] sm:$0xf]
  %v3194 = vld [vmem:[%s3192 + $0x4] sm:$0xf]
  %v3195 = vld [vmem:[%s3192 + $0x8] sm:$0xf]
  %v3196 = vld [vmem:[%s3192 + $0xc] sm:$0xf]
  %s3197 = scalar_lea.vmem %s8, 1
  %v3198 = vld [vmem:[%s3197] sm:$0x1]
  %v3200 = vlaneseq
  %v3201 = vshrl.u32 %v3200, 7
  %v3202 = vsub.s32 0, %v3201
  %v3203 = vrot.slane %v3198, %v3202
  %v3209 = vunpack.c.l.b16 %v3193
  %v3210 = vunpack.c.l.b16 %v3194
  %v3211 = vunpack.c.l.b16 %v3195
  %v3212 = vunpack.c.l.b16 %v3196
  %v3213 = vpack.c.b16 %v3210, %v3209
  %v3214 = vpack.c.b16 %v3212, %v3211
  %v3218 = vsel %vm230, %v3189, 0
  %v3221 = vsel %vm230, %v3190, 0
  %v3224 = vsel %vm230, %v3191, 0
  %3226 = vmatprep.subr.bf16.mxu0 0
  %3227 = vmatpush1.bf16.msra.mxu0 0
  %3228 = vmatprep.subr.bf16.mxu0 0
  %3229 = vmatpush1.bf16.msra.mxu0 0
  %3230 = vmatprep.subr.bf16.mxu0 0
  %3231 = vmatpush1.bf16.msra.mxu0 0
  %3232 = vmatprep.subr.bf16.mxu0 0
  %3233 = vmatpush1.bf16.msra.mxu0 0
  %3234 = vmatprep.subr.bf16.mxu0 0
  %3235 = vmatpush1.bf16.msra.mxu0 0
  %3236 = vmatprep.subr.bf16.mxu0 0
  %3237 = vmatpush1.bf16.msra.mxu0 0
  %3238 = vmatprep.subr.bf16.mxu0 0
  %3239 = vmatpush1.bf16.msra.mxu0 %v3214
  %3240 = vmatprep.subr.bf16.mxu0 0
  %3241 = vmatpush1.bf16.msra.mxu0 %v3213
  %3242 = vmatprep.subr.bf16.mxu0 0
  %3243 = vmatpush2.bf16.msra.mxu0 0
  %3244 = vmatprep.subr.bf16.mxu0 0
  %3245 = vmatpush2.bf16.msra.mxu0 0
  %3246 = vmatprep.subr.bf16.mxu0 0
  %3247 = vmatpush2.bf16.msra.mxu0 0
  %3248 = vmatprep.subr.bf16.mxu0 0
  %3249 = vmatpush2.bf16.msra.mxu0 0
  %3250 = vmatprep.subr.bf16.mxu0 0
  %3251 = vmatpush2.bf16.msra.mxu0 0
  %3252 = vmatprep.subr.bf16.mxu0 0
  %3253 = vmatpush2.bf16.msra.mxu0 0
  %3254 = vmatprep.subr.bf16.mxu0 0
  %3255 = vmatpush2.bf16.msra.mxu0 0
  %3256 = vmatprep.subr.bf16.mxu0 0
  %3257 = vmatpush2.bf16.msra.mxu0 0
  %3258 = vmatprep.mubr.bf16.mxu0 0
  %3259 = vmatmul.mubr.bf16.gmra.mxu0 %v3218
  %v3260 = vpop.f32.mrf.mxu0
  %v3261 = vadd.f32 %v3203, %v3260
  %v3262 = vpop.f32.mrf.mxu0
  %v3263 = vpop.f32.mrf.mxu0
  %v3264 = vadd.f32 %v3203, %v3263
  %v3265 = vpop.f32.mrf.mxu0
  %3266 = vmatprep.mubr.bf16.mxu0 0
  %3267 = vmatmul.mubr.bf16.gmra.mxu0 %v3221
  %v3268 = vpop.f32.mrf.mxu0
  %v3269 = vadd.f32 %v3203, %v3268
  %v3270 = vpop.f32.mrf.mxu0
  %v3271 = vpop.f32.mrf.mxu0
  %v3272 = vadd.f32 %v3203, %v3271
  %v3273 = vpop.f32.mrf.mxu0
  %3274 = vmatprep.mubr.bf16.mxu0 0
  %3275 = vmatmul.mubr.bf16.gmra.mxu0 %v3224
  %v3276 = vpop.f32.mrf.mxu0
  %v3277 = vadd.f32 %v3203, %v3276
  %v3278 = vpop.f32.mrf.mxu0
  %v3279 = vpop.f32.mrf.mxu0
  %v3280 = vadd.f32 %v3203, %v3279
  %v3281 = vpop.f32.mrf.mxu0
  %3282 = vdwg.mxu0
  %s3283 = scalar_lea.vmem %s9, 1
  %v3284 = vld [vmem:[%s3283] sm:$0x1]
  %v3286 = vlaneseq
  %v3287 = vshrl.u32 %v3286, 7
  %v3288 = vsub.s32 0, %v3287
  %v3289 = vrot.slane %v3284, %v3288
  %v3291 = vmul.f32 %v3289, %v3261
  %v3292 = vmul.f32 %v3289, %v3264
  %v3293 = vmul.f32 %v3289, %v3269
  %v3294 = vmul.f32 %v3289, %v3272
  %v3295 = vmul.f32 %v3289, %v3277
  %v3296 = vmul.f32 %v3289, %v3280
  %v3297 = vadd.f32 %v1957, %v3291
  %v3298 = vadd.f32 %v1958, %v3292
  %v3299 = vadd.f32 %v1959, %v3293
  %v3300 = vadd.f32 %v1960, %v3294
  %v3301 = vadd.f32 %v1961, %v3295
  %v3302 = vadd.f32 %v1962, %v3296
  %s3303 = scalar_lea.vmem %s10, 1
  %v3304 = vld [vmem:[%s3303] sm:$0x1]
  %s3305 = scalar_lea.vmem %s11, 1
  %v3306 = vld [vmem:[%s3305] sm:$0x1]
  %v3307 = vsel %vm230, %v3297, 0.0
  %3308 = vadd.xlane.f32.xlu0 %v3307
  %v3309 = vpop.xlane.xlu0 %3308
  %v3310 = vsel %vm230, %v3298, 0.0
  %3311 = vadd.xlane.f32.xlu0 %v3310
  %v3312 = vpop.xlane.xlu0 %3311
  %v3313 = vsel %vm230, %v3299, 0.0
  %3314 = vadd.xlane.f32.xlu0 %v3313
  %v3315 = vpop.xlane.xlu0 %3314
  %v3316 = vsel %vm230, %v3300, 0.0
  %3317 = vadd.xlane.f32.xlu0 %v3316
  %v3318 = vpop.xlane.xlu0 %3317
  %v3319 = vsel %vm230, %v3301, 0.0
  %3320 = vadd.xlane.f32.xlu0 %v3319
  %v3321 = vpop.xlane.xlu0 %3320
  %v3322 = vsel %vm230, %v3302, 0.0
  %3323 = vadd.xlane.f32.xlu0 %v3322
  %v3324 = vpop.xlane.xlu0 %3323
  %v3325 = vmul.f32 %v3309, %v249
  %v3326 = vmul.f32 %v3312, %v249
  %v3327 = vmul.f32 %v3315, %v249
  %v3328 = vmul.f32 %v3318, %v249
  %v3329 = vmul.f32 %v3321, %v249
  %v3330 = vmul.f32 %v3324, %v249
  %v3331 = vsub.f32 %v3297, %v3325
  %v3332 = vsub.f32 %v3298, %v3326
  %v3333 = vsub.f32 %v3299, %v3327
  %v3334 = vsub.f32 %v3300, %v3328
  %v3335 = vsub.f32 %v3301, %v3329
  %v3336 = vsub.f32 %v3302, %v3330
  %v3337 = vmul.f32 %v3331, %v3331
  %v3338 = vmul.f32 %v3332, %v3332
  %v3339 = vmul.f32 %v3333, %v3333
  %v3340 = vmul.f32 %v3334, %v3334
  %v3341 = vmul.f32 %v3335, %v3335
  %v3342 = vmul.f32 %v3336, %v3336
  %v3343 = vsel %vm230, %v3337, 0.0
  %3344 = vadd.xlane.f32.xlu0 %v3343
  %v3345 = vpop.xlane.xlu0 %3344
  %v3346 = vsel %vm230, %v3338, 0.0
  %3347 = vadd.xlane.f32.xlu0 %v3346
  %v3348 = vpop.xlane.xlu0 %3347
  %v3349 = vsel %vm230, %v3339, 0.0
  %3350 = vadd.xlane.f32.xlu0 %v3349
  %v3351 = vpop.xlane.xlu0 %3350
  %v3352 = vsel %vm230, %v3340, 0.0
  %3353 = vadd.xlane.f32.xlu0 %v3352
  %v3354 = vpop.xlane.xlu0 %3353
  %v3355 = vsel %vm230, %v3341, 0.0
  %3356 = vadd.xlane.f32.xlu0 %v3355
  %v3357 = vpop.xlane.xlu0 %3356
  %v3358 = vsel %vm230, %v3342, 0.0
  %3359 = vadd.xlane.f32.xlu0 %v3358
  %v3360 = vpop.xlane.xlu0 %3359
  %v3361 = vmul.f32 %v3345, %v249
  %v3362 = vmul.f32 %v3348, %v249
  %v3363 = vmul.f32 %v3351, %v249
  %v3364 = vmul.f32 %v3354, %v249
  %v3365 = vmul.f32 %v3357, %v249
  %v3366 = vmul.f32 %v3360, %v249
  %v3367 = vadd.f32 %v3361, 1e-06
  %v3368 = vadd.f32 %v3362, 1e-06
  %v3369 = vadd.f32 %v3363, 1e-06
  %v3370 = vadd.f32 %v3364, 1e-06
  %v3371 = vadd.f32 %v3365, 1e-06
  %v3372 = vadd.f32 %v3366, 1e-06
  %v3373 = vrsqrt.pop %v3367
  %v3374 = vrsqrt.pop %v3368
  %v3375 = vrsqrt.pop %v3369
  %v3376 = vrsqrt.pop %v3370
  %v3377 = vrsqrt.pop %v3371
  %v3378 = vrsqrt.pop %v3372
  %v3379 = vmul.f32 %v3331, %v3373
  %v3380 = vmul.f32 %v3332, %v3374
  %v3381 = vmul.f32 %v3333, %v3375
  %v3382 = vmul.f32 %v3334, %v3376
  %v3383 = vmul.f32 %v3335, %v3377
  %v3384 = vmul.f32 %v3336, %v3378
  %v3386 = vlaneseq
  %v3387 = vshrl.u32 %v3386, 7
  %v3388 = vsub.s32 0, %v3387
  %v3389 = vrot.slane %v3304, %v3388
  %v3391 = vmul.f32 %v3379, %v3389
  %v3392 = vmul.f32 %v3380, %v3389
  %v3393 = vmul.f32 %v3381, %v3389
  %v3394 = vmul.f32 %v3382, %v3389
  %v3395 = vmul.f32 %v3383, %v3389
  %v3396 = vmul.f32 %v3384, %v3389
  %v3398 = vlaneseq
  %v3399 = vshrl.u32 %v3398, 7
  %v3400 = vsub.s32 0, %v3399
  %v3401 = vrot.slane %v3306, %v3400
  %v3403 = vadd.f32 %v3391, %v3401
  %v3404 = vadd.f32 %v3392, %v3401
  %v3405 = vadd.f32 %v3393, %v3401
  %v3406 = vadd.f32 %v3394, %v3401
  %v3407 = vadd.f32 %v3395, %v3401
  %v3408 = vadd.f32 %v3396, %v3401
  %v3409 = vpack.c.bf16 %v3404, %v3403
  %v3410 = vpack.c.bf16 %v3406, %v3405
  %v3411 = vpack.c.bf16 %v3408, %v3407
  %s3412 = scalar_lea.vmem %s12, 16
  %v3413 = vld [vmem:[%s3412] sm:$0xf]
  %v3414 = vld [vmem:[%s3412 + $0x4] sm:$0xf]
  %v3415 = vld [vmem:[%s3412 + $0x8] sm:$0xf]
  %v3416 = vld [vmem:[%s3412 + $0xc] sm:$0xf]
  %s3417 = scalar_lea.vmem %s13, 1
  %v3418 = vld [vmem:[%s3417] sm:$0x1]
  %v3420 = vlaneseq
  %v3421 = vshrl.u32 %v3420, 7
  %v3422 = vsub.s32 0, %v3421
  %v3423 = vrot.slane %v3418, %v3422
  %v3429 = vunpack.c.l.b16 %v3413
  %v3430 = vunpack.c.l.b16 %v3414
  %v3431 = vunpack.c.l.b16 %v3415
  %v3432 = vunpack.c.l.b16 %v3416
  %v3433 = vpack.c.b16 %v3430, %v3429
  %v3434 = vpack.c.b16 %v3432, %v3431
  %v3438 = vsel %vm230, %v3409, 0
  %v3441 = vsel %vm230, %v3410, 0
  %v3444 = vsel %vm230, %v3411, 0
  %3446 = vmatprep.subr.bf16.mxu0 0
  %3447 = vmatpush1.bf16.msra.mxu0 0
  %3448 = vmatprep.subr.bf16.mxu0 0
  %3449 = vmatpush1.bf16.msra.mxu0 0
  %3450 = vmatprep.subr.bf16.mxu0 0
  %3451 = vmatpush1.bf16.msra.mxu0 0
  %3452 = vmatprep.subr.bf16.mxu0 0
  %3453 = vmatpush1.bf16.msra.mxu0 0
  %3454 = vmatprep.subr.bf16.mxu0 0
  %3455 = vmatpush1.bf16.msra.mxu0 0
  %3456 = vmatprep.subr.bf16.mxu0 0
  %3457 = vmatpush1.bf16.msra.mxu0 0
  %3458 = vmatprep.subr.bf16.mxu0 0
  %3459 = vmatpush1.bf16.msra.mxu0 %v3434
  %3460 = vmatprep.subr.bf16.mxu0 0
  %3461 = vmatpush1.bf16.msra.mxu0 %v3433
  %3462 = vmatprep.subr.bf16.mxu0 0
  %3463 = vmatpush2.bf16.msra.mxu0 0
  %3464 = vmatprep.subr.bf16.mxu0 0
  %3465 = vmatpush2.bf16.msra.mxu0 0
  %3466 = vmatprep.subr.bf16.mxu0 0
  %3467 = vmatpush2.bf16.msra.mxu0 0
  %3468 = vmatprep.subr.bf16.mxu0 0
  %3469 = vmatpush2.bf16.msra.mxu0 0
  %3470 = vmatprep.subr.bf16.mxu0 0
  %3471 = vmatpush2.bf16.msra.mxu0 0
  %3472 = vmatprep.subr.bf16.mxu0 0
  %3473 = vmatpush2.bf16.msra.mxu0 0
  %3474 = vmatprep.subr.bf16.mxu0 0
  %3475 = vmatpush2.bf16.msra.mxu0 0
  %3476 = vmatprep.subr.bf16.mxu0 0
  %3477 = vmatpush2.bf16.msra.mxu0 0
  %3478 = vmatprep.mubr.bf16.mxu0 0
  %3479 = vmatmul.mubr.bf16.gmra.mxu0 %v3438
  %v3480 = vpop.f32.mrf.mxu0
  %v3481 = vadd.f32 %v3423, %v3480
  %v3482 = vpop.f32.mrf.mxu0
  %v3483 = vpop.f32.mrf.mxu0
  %v3484 = vadd.f32 %v3423, %v3483
  %v3485 = vpop.f32.mrf.mxu0
  %3486 = vmatprep.mubr.bf16.mxu0 0
  %3487 = vmatmul.mubr.bf16.gmra.mxu0 %v3441
  %v3488 = vpop.f32.mrf.mxu0
  %v3489 = vadd.f32 %v3423, %v3488
  %v3490 = vpop.f32.mrf.mxu0
  %v3491 = vpop.f32.mrf.mxu0
  %v3492 = vadd.f32 %v3423, %v3491
  %v3493 = vpop.f32.mrf.mxu0
  %3494 = vmatprep.mubr.bf16.mxu0 0
  %3495 = vmatmul.mubr.bf16.gmra.mxu0 %v3444
  %v3496 = vpop.f32.mrf.mxu0
  %v3497 = vadd.f32 %v3423, %v3496
  %v3498 = vpop.f32.mrf.mxu0
  %v3499 = vpop.f32.mrf.mxu0
  %v3500 = vadd.f32 %v3423, %v3499
  %v3501 = vpop.f32.mrf.mxu0
  %3502 = vdwg.mxu0
  %v3503 = vxor.u32 %v3481, 2147483648
  %v3504 = vxor.u32 %v3484, 2147483648
  %v3505 = vxor.u32 %v3489, 2147483648
  %v3506 = vxor.u32 %v3492, 2147483648
  %v3507 = vxor.u32 %v3497, 2147483648
  %v3508 = vxor.u32 %v3500, 2147483648
  %v3509 = vmul.f32 %v3503, 1.442695
  %v3510 = vpow.pop %v3509
  %v3511 = vmul.f32 %v3504, 1.442695
  %v3512 = vpow.pop %v3511
  %v3513 = vmul.f32 %v3505, 1.442695
  %v3514 = vpow.pop %v3513
  %v3515 = vmul.f32 %v3506, 1.442695
  %v3516 = vpow.pop %v3515
  %v3517 = vmul.f32 %v3507, 1.442695
  %v3518 = vpow.pop %v3517
  %v3519 = vmul.f32 %v3508, 1.442695
  %v3520 = vpow.pop %v3519
  %v3521 = vadd.f32 %v3510, 1.0
  %v3522 = vadd.f32 %v3512, 1.0
  %v3523 = vadd.f32 %v3514, 1.0
  %v3524 = vadd.f32 %v3516, 1.0
  %v3525 = vadd.f32 %v3518, 1.0
  %v3526 = vadd.f32 %v3520, 1.0
  %v3527 = vrcp.pop %v3521
  %v3528 = vmul.f32 1.0, %v3527
  %v3529 = vrcp.pop %v3522
  %v3530 = vmul.f32 1.0, %v3529
  %v3531 = vrcp.pop %v3523
  %v3532 = vmul.f32 1.0, %v3531
  %v3533 = vrcp.pop %v3524
  %v3534 = vmul.f32 1.0, %v3533
  %v3535 = vrcp.pop %v3525
  %v3536 = vmul.f32 1.0, %v3535
  %v3537 = vrcp.pop %v3526
  %v3538 = vmul.f32 1.0, %v3537
  %v3539 = vmul.f32 %v3481, %v3528
  %v3540 = vmul.f32 %v3484, %v3530
  %v3541 = vmul.f32 %v3489, %v3532
  %v3542 = vmul.f32 %v3492, %v3534
  %v3543 = vmul.f32 %v3497, %v3536
  %v3544 = vmul.f32 %v3500, %v3538
  %3551 = vrot.lane.b32.xlu0 %v3481, 64
  %v3552 = vpop.permute.xlu0 %3551
  %3553 = vrot.lane.b32.xlu0 %v3484, 64
  %v3554 = vpop.permute.xlu0 %3553
  %3555 = vrot.lane.b32.xlu0 %v3489, 64
  %v3556 = vpop.permute.xlu0 %3555
  %3557 = vrot.lane.b32.xlu0 %v3492, 64
  %v3558 = vpop.permute.xlu0 %3557
  %3559 = vrot.lane.b32.xlu0 %v3497, 64
  %v3560 = vpop.permute.xlu0 %3559
  %3561 = vrot.lane.b32.xlu0 %v3500, 64
  %v3562 = vpop.permute.xlu0 %3561
  %v3569 = vmul.f32 %v3539, %v3552
  %v3570 = vmul.f32 %v3540, %v3554
  %v3571 = vmul.f32 %v3541, %v3556
  %v3572 = vmul.f32 %v3542, %v3558
  %v3573 = vmul.f32 %v3543, %v3560
  %v3574 = vmul.f32 %v3544, %v3562
  %v3575 = vpack.c.bf16 %v3570, %v3569
  %v3576 = vpack.c.bf16 %v3572, %v3571
  %v3577 = vpack.c.bf16 %v3574, %v3573
  %s3578 = scalar_lea.vmem %s14, 32
  %v3579 = vld [vmem:[%s3578] sm:$0xf]
  %v3580 = vld [vmem:[%s3578 + $0x4] sm:$0xf]
  %v3581 = vld [vmem:[%s3578 + $0x8] sm:$0xf]
  %v3582 = vld [vmem:[%s3578 + $0xc] sm:$0xf]
  %v3583 = vld [vmem:[%s3578 + $0x10] sm:$0xf]
  %v3584 = vld [vmem:[%s3578 + $0x14] sm:$0xf]
  %v3585 = vld [vmem:[%s3578 + $0x18] sm:$0xf]
  %v3586 = vld [vmem:[%s3578 + $0x1c] sm:$0xf]
  %s3587 = scalar_lea.vmem %s15, 1
  %v3588 = vld [vmem:[%s3587] sm:$0x1]
  %v3590 = vlaneseq
  %v3591 = vshrl.u32 %v3590, 7
  %v3592 = vsub.s32 0, %v3591
  %v3593 = vrot.slane %v3588, %v3592
  %v3603 = vunpack.c.l.b16 %v3579
  %v3604 = vunpack.c.l.b16 %v3580
  %v3605 = vunpack.c.l.b16 %v3581
  %v3606 = vunpack.c.l.b16 %v3582
  %v3607 = vunpack.c.l.b16 %v3583
  %v3608 = vunpack.c.l.b16 %v3584
  %v3609 = vunpack.c.l.b16 %v3585
  %v3610 = vunpack.c.l.b16 %v3586
  %v3611 = vpack.c.b16 %v3604, %v3603
  %v3612 = vpack.c.b16 %v3606, %v3605
  %v3613 = vpack.c.b16 %v3608, %v3607
  %v3614 = vpack.c.b16 %v3610, %v3609
  %v3620 = vsel %vm1877, %v3575, 0
  %v3623 = vsel %vm1877, %v3576, 0
  %v3626 = vsel %vm1877, %v3577, 0
  %3628 = vmatprep.subr.bf16.mxu0 0
  %3629 = vmatpush1.bf16.msra.mxu0 0
  %3630 = vmatprep.subr.bf16.mxu0 0
  %3631 = vmatpush1.bf16.msra.mxu0 0
  %3632 = vmatprep.subr.bf16.mxu0 0
  %3633 = vmatpush1.bf16.msra.mxu0 0
  %3634 = vmatprep.subr.bf16.mxu0 0
  %3635 = vmatpush1.bf16.msra.mxu0 0
  %3636 = vmatprep.subr.bf16.mxu0 0
  %3637 = vmatpush1.bf16.msra.mxu0 %v3614
  %3638 = vmatprep.subr.bf16.mxu0 0
  %3639 = vmatpush1.bf16.msra.mxu0 %v3613
  %3640 = vmatprep.subr.bf16.mxu0 0
  %3641 = vmatpush1.bf16.msra.mxu0 %v3612
  %3642 = vmatprep.subr.bf16.mxu0 0
  %3643 = vmatpush1.bf16.msra.mxu0 %v3611
  %3644 = vmatprep.subr.bf16.mxu0 0
  %3645 = vmatpush2.bf16.msra.mxu0 0
  %3646 = vmatprep.subr.bf16.mxu0 0
  %3647 = vmatpush2.bf16.msra.mxu0 0
  %3648 = vmatprep.subr.bf16.mxu0 0
  %3649 = vmatpush2.bf16.msra.mxu0 0
  %3650 = vmatprep.subr.bf16.mxu0 0
  %3651 = vmatpush2.bf16.msra.mxu0 0
  %3652 = vmatprep.subr.bf16.mxu0 0
  %3653 = vmatpush2.bf16.msra.mxu0 0
  %3654 = vmatprep.subr.bf16.mxu0 0
  %3655 = vmatpush2.bf16.msra.mxu0 0
  %3656 = vmatprep.subr.bf16.mxu0 0
  %3657 = vmatpush2.bf16.msra.mxu0 0
  %3658 = vmatprep.subr.bf16.mxu0 0
  %3659 = vmatpush2.bf16.msra.mxu0 0
  %3660 = vmatprep.mubr.bf16.mxu0 0
  %3661 = vmatmul.mubr.bf16.gmra.mxu0 %v3620
  %v3662 = vpop.f32.mrf.mxu0
  %v3663 = vadd.f32 %v3593, %v3662
  %v3664 = vpop.f32.mrf.mxu0
  %v3665 = vpop.f32.mrf.mxu0
  %v3666 = vadd.f32 %v3593, %v3665
  %v3667 = vpop.f32.mrf.mxu0
  %3668 = vmatprep.mubr.bf16.mxu0 0
  %3669 = vmatmul.mubr.bf16.gmra.mxu0 %v3623
  %v3670 = vpop.f32.mrf.mxu0
  %v3671 = vadd.f32 %v3593, %v3670
  %v3672 = vpop.f32.mrf.mxu0
  %v3673 = vpop.f32.mrf.mxu0
  %v3674 = vadd.f32 %v3593, %v3673
  %v3675 = vpop.f32.mrf.mxu0
  %3676 = vmatprep.mubr.bf16.mxu0 0
  %3677 = vmatmul.mubr.bf16.gmra.mxu0 %v3626
  %v3678 = vpop.f32.mrf.mxu0
  %v3679 = vadd.f32 %v3593, %v3678
  %v3680 = vpop.f32.mrf.mxu0
  %v3681 = vpop.f32.mrf.mxu0
  %v3682 = vadd.f32 %v3593, %v3681
  %v3683 = vpop.f32.mrf.mxu0
  %3684 = vdwg.mxu0
  %s3685 = scalar_lea.vmem %s16, 1
  %v3686 = vld [vmem:[%s3685] sm:$0x1]
  %v3688 = vlaneseq
  %v3689 = vshrl.u32 %v3688, 7
  %v3690 = vsub.s32 0, %v3689
  %v3691 = vrot.slane %v3686, %v3690
  %v3693 = vmul.f32 %v3691, %v3663
  %v3694 = vmul.f32 %v3691, %v3666
  %v3695 = vmul.f32 %v3691, %v3671
  %v3696 = vmul.f32 %v3691, %v3674
  %v3697 = vmul.f32 %v3691, %v3679
  %v3698 = vmul.f32 %v3691, %v3682
  %v3699 = vadd.f32 %v3297, %v3693
  %v3700 = vadd.f32 %v3298, %v3694
  %v3701 = vadd.f32 %v3299, %v3695
  %v3702 = vadd.f32 %v3300, %v3696
  %v3703 = vadd.f32 %v3301, %v3697
  %v3704 = vadd.f32 %v3302, %v3698
  %v3705 = vld [vmem:[%s17] sm:$0x1]
  %v3706 = vld [vmem:[%s18] sm:$0x1]
  %v3707 = vsel %vm230, %v3699, 0.0
  %3708 = vadd.xlane.f32.xlu0 %v3707
  %v3709 = vpop.xlane.xlu0 %3708
  %v3710 = vsel %vm230, %v3700, 0.0
  %3711 = vadd.xlane.f32.xlu0 %v3710
  %v3712 = vpop.xlane.xlu0 %3711
  %v3713 = vsel %vm230, %v3701, 0.0
  %3714 = vadd.xlane.f32.xlu0 %v3713
  %v3715 = vpop.xlane.xlu0 %3714
  %v3716 = vsel %vm230, %v3702, 0.0
  %3717 = vadd.xlane.f32.xlu0 %v3716
  %v3718 = vpop.xlane.xlu0 %3717
  %v3719 = vsel %vm230, %v3703, 0.0
  %3720 = vadd.xlane.f32.xlu0 %v3719
  %v3721 = vpop.xlane.xlu0 %3720
  %v3722 = vsel %vm230, %v3704, 0.0
  %3723 = vadd.xlane.f32.xlu0 %v3722
  %v3724 = vpop.xlane.xlu0 %3723
  %v3725 = vmul.f32 %v3709, %v249
  %v3726 = vmul.f32 %v3712, %v249
  %v3727 = vmul.f32 %v3715, %v249
  %v3728 = vmul.f32 %v3718, %v249
  %v3729 = vmul.f32 %v3721, %v249
  %v3730 = vmul.f32 %v3724, %v249
  %v3731 = vsub.f32 %v3699, %v3725
  %v3732 = vsub.f32 %v3700, %v3726
  %v3733 = vsub.f32 %v3701, %v3727
  %v3734 = vsub.f32 %v3702, %v3728
  %v3735 = vsub.f32 %v3703, %v3729
  %v3736 = vsub.f32 %v3704, %v3730
  %v3737 = vmul.f32 %v3731, %v3731
  %v3738 = vmul.f32 %v3732, %v3732
  %v3739 = vmul.f32 %v3733, %v3733
  %v3740 = vmul.f32 %v3734, %v3734
  %v3741 = vmul.f32 %v3735, %v3735
  %v3742 = vmul.f32 %v3736, %v3736
  %v3743 = vsel %vm230, %v3737, 0.0
  %3744 = vadd.xlane.f32.xlu0 %v3743
  %v3745 = vpop.xlane.xlu0 %3744
  %v3746 = vsel %vm230, %v3738, 0.0
  %3747 = vadd.xlane.f32.xlu0 %v3746
  %v3748 = vpop.xlane.xlu0 %3747
  %v3749 = vsel %vm230, %v3739, 0.0
  %3750 = vadd.xlane.f32.xlu0 %v3749
  %v3751 = vpop.xlane.xlu0 %3750
  %v3752 = vsel %vm230, %v3740, 0.0
  %3753 = vadd.xlane.f32.xlu0 %v3752
  %v3754 = vpop.xlane.xlu0 %3753
  %v3755 = vsel %vm230, %v3741, 0.0
  %3756 = vadd.xlane.f32.xlu0 %v3755
  %v3757 = vpop.xlane.xlu0 %3756
  %v3758 = vsel %vm230, %v3742, 0.0
  %3759 = vadd.xlane.f32.xlu0 %v3758
  %v3760 = vpop.xlane.xlu0 %3759
  %v3761 = vmul.f32 %v3745, %v249
  %v3762 = vmul.f32 %v3748, %v249
  %v3763 = vmul.f32 %v3751, %v249
  %v3764 = vmul.f32 %v3754, %v249
  %v3765 = vmul.f32 %v3757, %v249
  %v3766 = vmul.f32 %v3760, %v249
  %v3767 = vadd.f32 %v3761, 1e-06
  %v3768 = vadd.f32 %v3762, 1e-06
  %v3769 = vadd.f32 %v3763, 1e-06
  %v3770 = vadd.f32 %v3764, 1e-06
  %v3771 = vadd.f32 %v3765, 1e-06
  %v3772 = vadd.f32 %v3766, 1e-06
  %v3773 = vrsqrt.pop %v3767
  %v3774 = vrsqrt.pop %v3768
  %v3775 = vrsqrt.pop %v3769
  %v3776 = vrsqrt.pop %v3770
  %v3777 = vrsqrt.pop %v3771
  %v3778 = vrsqrt.pop %v3772
  %v3779 = vmul.f32 %v3731, %v3773
  %v3780 = vmul.f32 %v3732, %v3774
  %v3781 = vmul.f32 %v3733, %v3775
  %v3782 = vmul.f32 %v3734, %v3776
  %v3783 = vmul.f32 %v3735, %v3777
  %v3784 = vmul.f32 %v3736, %v3778
  %v3786 = vlaneseq
  %v3787 = vshrl.u32 %v3786, 7
  %v3788 = vsub.s32 0, %v3787
  %v3789 = vrot.slane %v3705, %v3788
  %v3791 = vmul.f32 %v3779, %v3789
  %v3792 = vmul.f32 %v3780, %v3789
  %v3793 = vmul.f32 %v3781, %v3789
  %v3794 = vmul.f32 %v3782, %v3789
  %v3795 = vmul.f32 %v3783, %v3789
  %v3796 = vmul.f32 %v3784, %v3789
  %v3798 = vlaneseq
  %v3799 = vshrl.u32 %v3798, 7
  %v3800 = vsub.s32 0, %v3799
  %v3801 = vrot.slane %v3706, %v3800
  %v3803 = vadd.f32 %v3791, %v3801
  %v3804 = vadd.f32 %v3792, %v3801
  %v3805 = vadd.f32 %v3793, %v3801
  %v3806 = vadd.f32 %v3794, %v3801
  %v3807 = vadd.f32 %v3795, %v3801
  %v3808 = vadd.f32 %v3796, %v3801
  %3809 = vst.msk [vmem:[%s19] sm:$0xff] %vm230, %v3803
  %3810 = vst.msk [vmem:[%s19 + $0x8] sm:$0xff] %vm230, %v3804
  %3811 = vst.msk [vmem:[%s19 + $0x10] sm:$0xff] %vm230, %v3805
  %3812 = vst.msk [vmem:[%s19 + $0x18] sm:$0xff] %vm230, %v3806
  %3813 = vst.msk [vmem:[%s19 + $0x20] sm:$0xff] %vm230, %v3807
  %3814 = vst.msk [vmem:[%s19 + $0x28] sm:$0xff] %vm230, %v3808
  // Predicated region
  $region78: #{forward.1} parent=0 // pred_check
    _
  $region79: #{forward.1} parent=0 // pred_check_branch
    %3816 = sbr.rel (0) target = $region81
  $region80: #{forward.1} parent=0 // pred_region
    _
  $region81: #{forward.1} parent=0 // pred_fallthru
    _
  // Predicated region
  $region82: #{forward.1} parent=0 // pred_check
    _
  $region83: #{forward.1} parent=0 // pred_check_branch
    %3818 = sbr.rel (0) target = $region85
  $region84: #{forward.1} parent=0 // pred_region
    _
  $region85: #{forward.1} parent=0 // pred_fallthru
    _

</llo_original>
